<compile_context>
chip_gen: v7x
topology: tpu7x:2x2x1
jax: 0.10.0
libtpu: 0.0.40
codegen_flags: <defaults>
</compile_context>

<pallas_src>
import jax
import jax.numpy as jnp
from jax import lax
from jax.experimental import pallas as pl
from jax.experimental.pallas import tpu as pltpu

# ---------------- model hyper-parameters (small, synthetic) -----------------
VOCAB_SIZE = 32
EMBED_SIZE = 16
HIDDEN_SIZE = 32
NUM_LAYERS = 2
BATCH = 2
SEQ_LEN = 8

# kernel-internal padded layout (lane-dense, sublane-aligned)
LANE = 128            # one full vreg lane width
B_PAD = 8             # batch padded to a full sublane group
H_PAD = LANE          # hidden slab width; lanes [0:HIDDEN_SIZE] are valid
V_PAD = LANE          # lane-dense logits
DEC_VOCAB_OFF = 64    # decoder tokens map to rows 64..95 of the combined table

assert 3 * HIDDEN_SIZE <= LANE                       # compact r|z|n fits one block
assert VOCAB_SIZE <= DEC_VOCAB_OFF
assert DEC_VOCAB_OFF + VOCAB_SIZE <= LANE

_VMEM = pl.BlockSpec(memory_space=pltpu.MemorySpace.VMEM)


# ------------------------------ fused kernel --------------------------------
def _build_kernel(num_layers, t_enc, t_dec, b_pad):
    """Fused encoder-decoder kernel. All shape/offset math is static."""
    H = HIDDEN_SIZE
    n_enc = t_enc * b_pad
    n_dec = t_dec * b_pad

    def kernel(ids_ref, w_ref, b_ref, logits_ref, state_ref):
        f32, bf16 = jnp.float32, jnp.bfloat16

        # ---- static slicing over the coalesced weight / bias slabs ----------
        wofs = [0]

        def wblk():
            o = wofs[0]
            wofs[0] += 1
            return w_ref[o * LANE:(o + 1) * LANE, :]        # (128,128) bf16

        b_all = b_ref[...]                                   # (rows,128) f32
        bofs = [0]

        def brow():
            o = bofs[0]
            bofs[0] += 1
            return b_all[o:o + 1, :]                         # (1,128) f32

        def run_layer(gi, t, h0, whh, bhh):
            """GRU layer, gates packed compactly at lanes [0:H | H:2H | 2H:3H].

            Per step: one 128x128 MXU pass (h @ W_hh), one sigmoid covering
            r and z, one tanh; pltpu.roll aligns gate lanes (XLU, free slot).
            Lanes >= H of h carry bounded garbage that never reaches the real
            lanes because padded weight ROWS are exactly zero.
            """
            h = h0
            outs = []
            for i in range(t):                               # static unroll
                gh = jnp.dot(h.astype(bf16), whh,
                             preferred_element_type=f32) + bhh
                gi_i = gi[i * b_pad:(i + 1) * b_pad]
                s = jax.nn.sigmoid(gi_i + gh)                # r|z in lanes 0:2H
                r_n = pltpu.roll(s, 2 * H, 1)                # r -> n-gate lanes
                n_t = jnp.tanh(gi_i + r_n * gh)              # n in lanes 2H:3H
                n_al = pltpu.roll(n_t, LANE - 2 * H, 1)      # n -> lanes 0:H
                z_al = pltpu.roll(s, LANE - H, 1)            # z -> lanes 0:H
                h = (1.0 - z_al) * n_al + z_al * h
                outs.append(h)
            return h, jnp.concatenate(outs, axis=0)          # (t*b_pad, 128)

        # ---- combined enc+dec layer-0 input projection -----------------------
        # Embedding tables were folded into W_ih at pack time, so one onehot
        # matmul (128 rows -> full MXU occupancy) yields gate pre-activations
        # for BOTH branches (enc bias already folded into its table rows).
        ids = ids_ref[...]                                   # (n_enc+n_dec,1) i32
        onehot = (lax.broadcasted_iota(jnp.int32, (n_enc + n_dec, LANE), 1)
                  == ids).astype(bf16)
        gi_all = jnp.dot(onehot, wblk(), preferred_element_type=f32)
        gi_enc = gi_all[:n_enc]
        gi_dec = gi_all[n_enc:]

        zeros_h = jnp.zeros((b_pad, LANE), f32)

        # ------------------------------ encoder -------------------------------
        hT, x2d = run_layer(gi_enc, t_enc, zeros_h, wblk(), brow())
        enc_finals = [hT]
        for _ in range(1, num_layers):
            wih, whh, bih, bhh = wblk(), wblk(), brow(), brow()
            gi = jnp.dot(x2d.astype(bf16), wih, preferred_element_type=f32) + bih
            hT, x2d = run_layer(gi, t_enc, zeros_h, whh, bhh)
            enc_finals.append(hT)
        context = enc_finals[-1]                             # (B,128)

        # ------------------------------ decoder -------------------------------
        # layer 0: gi = emb@W_emb + (ctx@W_ctx + b_ih); ctx projection done once.
        wctx, whh0, bih0, bhh0 = wblk(), wblk(), brow(), brow()
        ctx_proj = jnp.dot(context.astype(bf16), wctx,
                           preferred_element_type=f32) + bih0
        gi = (gi_dec.reshape(t_dec, b_pad, LANE)
              + ctx_proj[None, :, :]).reshape(n_dec, LANE)
        hT, x2d = run_layer(gi, t_dec, enc_finals[0], whh0, bhh0)
        state_ref[0] = hT
        for l in range(1, num_layers):
            wih, whh, bih, bhh = wblk(), wblk(), brow(), brow()
            gi = jnp.dot(x2d.astype(bf16), wih, preferred_element_type=f32) + bih
            hT, x2d = run_layer(gi, t_dec, enc_finals[l], whh, bhh)
            state_ref[l] = hT

        # --------------------------- output dense -----------------------------
        logits = jnp.dot(x2d.astype(bf16), wblk(),
                         preferred_element_type=f32) + brow()
        logits_ref[...] = logits.reshape(t_dec, b_pad, LANE)

    return kernel


# --------------------- parameter creation & packing --------------------------
def _init_gru_params(key, num_layers, input_size, hidden_size):
    params = []
    for l in range(num_layers):
        in_l = input_size if l == 0 else hidden_size
        key, k1, k2, k3, k4 = jax.random.split(key, 5)
        params.append({
            "wih": 0.1 * jax.random.normal(k1, (3 * hidden_size, in_l), jnp.float32),
            "whh": 0.1 * jax.random.normal(k2, (3 * hidden_size, hidden_size), jnp.float32),
            "bih": 0.1 * jax.random.normal(k3, (3 * hidden_size,), jnp.float32),
            "bhh": 0.1 * jax.random.normal(k4, (3 * hidden_size,), jnp.float32),
        })
    return params, key


def init_params(seed=0):
    key = jax.random.PRNGKey(seed)
    key, k_emb_e, k_emb_d, k_wout, k_bout = jax.random.split(key, 5)
    enc_gru, key = _init_gru_params(key, NUM_LAYERS, EMBED_SIZE, HIDDEN_SIZE)
    dec_gru, key = _init_gru_params(key, NUM_LAYERS, EMBED_SIZE + HIDDEN_SIZE,
                                    HIDDEN_SIZE)
    return {
        "enc": {
            "embedding": 0.1 * jax.random.normal(
                k_emb_e, (VOCAB_SIZE, EMBED_SIZE), jnp.float32),
            "gru": enc_gru,
        },
        "dec": {
            "embedding": 0.1 * jax.random.normal(
                k_emb_d, (VOCAB_SIZE, EMBED_SIZE), jnp.float32),
            "gru": dec_gru,
            "w_out": 0.1 * jax.random.normal(
                k_wout, (VOCAB_SIZE, HIDDEN_SIZE), jnp.float32),
            "b_out": 0.1 * jax.random.normal(k_bout, (VOCAB_SIZE,), jnp.float32),
        },
    }


def _pack_gate_w(w, rows):
    """PyTorch (3H, IN) -> transposed (rows, 128); gates at lane offsets 0/H/2H."""
    three_h, in_dim = w.shape
    h = three_h // 3
    out = jnp.zeros((rows, LANE), jnp.float32)
    for g in range(3):
        out = out.at[:in_dim, g * h:(g + 1) * h].set(w[g * h:(g + 1) * h, :].T)
    return out


def _pack_gate_b(b):
    h = b.shape[0] // 3
    out = jnp.zeros((1, LANE), jnp.float32)
    for g in range(3):
        out = out.at[0, g * h:(g + 1) * h].set(b[g * h:(g + 1) * h])
    return out


def pack_params(params):
    """One-time layout work: fold embeddings into layer-0 weights, pack every
    weight into a single bf16 slab and every bias into a single f32 slab."""
    enc, dec = params["enc"], params["dec"]
    E, V = EMBED_SIZE, VOCAB_SIZE
    enc0, dec0 = enc["gru"][0], dec["gru"][0]

    # combined layer-0 table: onehot(token) @ table == gate pre-activation
    fused_enc = (jnp.dot(enc["embedding"], _pack_gate_w(enc0["wih"], E))
                 + _pack_gate_b(enc0["bih"]))               # enc b_ih folded in
    fused_dec = jnp.dot(dec["embedding"], _pack_gate_w(dec0["wih"][:, :E], E))
    table = jnp.zeros((LANE, LANE), jnp.float32)
    table = table.at[:V, :].set(fused_enc)
    table = table.at[DEC_VOCAB_OFF:DEC_VOCAB_OFF + V, :].set(fused_dec)

    wblocks = [table, _pack_gate_w(enc0["whh"], LANE)]
    for p in enc["gru"][1:]:
        wblocks += [_pack_gate_w(p["wih"], LANE), _pack_gate_w(p["whh"], LANE)]
    wblocks += [_pack_gate_w(dec0["wih"][:, E:], LANE),      # context part of W_ih
                _pack_gate_w(dec0["whh"], LANE)]
    for p in dec["gru"][1:]:
        wblocks += [_pack_gate_w(p["wih"], LANE), _pack_gate_w(p["whh"], LANE)]
    w_out = jnp.zeros((LANE, LANE), jnp.float32).at[
        :HIDDEN_SIZE, :V].set(dec["w_out"].T)
    wblocks.append(w_out)
    weights = jnp.concatenate(wblocks, axis=0).astype(jnp.bfloat16)

    brows = [_pack_gate_b(enc0["bhh"])]
    for p in enc["gru"][1:]:
        brows += [_pack_gate_b(p["bih"]), _pack_gate_b(p["bhh"])]
    brows += [_pack_gate_b(dec0["bih"]), _pack_gate_b(dec0["bhh"])]
    for p in dec["gru"][1:]:
        brows += [_pack_gate_b(p["bih"]), _pack_gate_b(p["bhh"])]
    brows.append(jnp.zeros((1, LANE), jnp.float32).at[0, :V].set(dec["b_out"]))
    biases = jnp.concatenate(brows, axis=0)
    pad = (-biases.shape[0]) % 8
    if pad:
        biases = jnp.pad(biases, ((0, pad), (0, 0)))

    # invariant: padded bias lanes must be exactly zero (padded weight rows are
    # zero by construction), otherwise garbage could leak into real lanes.
    assert float(jnp.max(jnp.abs(biases[:, 3 * HIDDEN_SIZE:]))) == 0.0
    return weights, biases


# ------------------------- EncoderDecoder forward ----------------------------
def _prep_ids(ids, batch):
    """(B, T) int ids -> time-major, batch-padded (T*B_PAD, 1) int32."""
    t = ids.shape[1]
    tm = jnp.transpose(ids, (1, 0))
    tm = jnp.pad(tm, ((0, 0), (0, B_PAD - batch)))
    return tm.reshape(t * B_PAD, 1).astype(jnp.int32)


def encoder_decoder_forward(weights, biases, enc_X, dec_X):
    """enc_X, dec_X: int32 (B, T) token ids.
    Returns (logits (B, T, VOCAB), state (NUM_LAYERS, B, HIDDEN))."""
    B, T_enc = enc_X.shape
    _, T_dec = dec_X.shape

    # one combined id stream; decoder ids offset into the combined table rows
    ids = jnp.concatenate(
        [_prep_ids(enc_X, B), _prep_ids(dec_X, B) + DEC_VOCAB_OFF], axis=0)

    logits_pad, state_pad = pl.pallas_call(
        _build_kernel(NUM_LAYERS, T_enc, T_dec, B_PAD),
        out_shape=(
            jax.ShapeDtypeStruct((T_dec, B_PAD, V_PAD), jnp.float32),
            jax.ShapeDtypeStruct((NUM_LAYERS, B_PAD, H_PAD), jnp.float32),
        ),
        in_specs=[_VMEM, _VMEM, _VMEM],
        out_specs=(_VMEM, _VMEM),
    )(ids, weights, biases)

    logits = jnp.transpose(logits_pad[:, :B, :VOCAB_SIZE], (1, 0, 2))
    state = state_pad[:, :B, :HIDDEN_SIZE]
    return logits, state


# ------------------------- pure-JAX reference (check) ------------------------
def _gru_ref(x_btf, h0_lbh, layer_params):
    x_t = jnp.transpose(x_btf, (1, 0, 2))
    finals = []
    for l, p in enumerate(layer_params):
        H = p["whh"].shape[1]

        def step(h, xt, p=p, H=H):
            gi = jnp.dot(xt, p["wih"].T, precision=lax.Precision.HIGHEST) + p["bih"]
            gh = jnp.dot(h, p["whh"].T, precision=lax.Precision.HIGHEST) + p["bhh"]
            r = jax.nn.sigmoid(gi[:, :H] + gh[:, :H])
            z = jax.nn.sigmoid(gi[:, H:2 * H] + gh[:, H:2 * H])
            n = jnp.tanh(gi[:, 2 * H:] + r * gh[:, 2 * H:])
            h_new = (1.0 - z) * n + z * h
            return h_new, h_new

        hT, out = lax.scan(step, h0_lbh[l], x_t)
        finals.append(hT)
        x_t = out
    return jnp.transpose(x_t, (1, 0, 2)), jnp.stack(finals, 0)


def reference_forward(params, enc_X, dec_X):
    B, T_dec = dec_X.shape
    enc_emb = jnp.take(params["enc"]["embedding"], enc_X, axis=0)
    h0 = jnp.zeros((NUM_LAYERS, B, HIDDEN_SIZE), jnp.float32)
    _, enc_state = _gru_ref(enc_emb, h0, params["enc"]["gru"])
    dec_emb = jnp.take(params["dec"]["embedding"], dec_X, axis=0)
    ctx = jnp.broadcast_to(enc_state[-1][:, None, :], (B, T_dec, HIDDEN_SIZE))
    x = jnp.concatenate([dec_emb, ctx], axis=-1)
    dec_out, dec_state = _gru_ref(x, enc_state, params["dec"]["gru"])
    logits = jnp.dot(dec_out, params["dec"]["w_out"].T,
                     precision=lax.Precision.HIGHEST) + params["dec"]["b_out"]
    return logits, dec_state


# ------------------------------------ main -----------------------------------
if __name__ == "__main__":
    params = init_params(seed=0)
    weights, biases = pack_params(params)   # one-time layout work (not per-forward)

    key = jax.random.PRNGKey(0)
    k_enc, k_dec = jax.random.split(key)
    enc_X = jax.random.randint(k_enc, (BATCH, SEQ_LEN), 0, VOCAB_SIZE, jnp.int32)
    dec_X = jax.random.randint(k_dec, (BATCH, SEQ_LEN), 0, VOCAB_SIZE, jnp.int32)

    logits, state = jax.jit(encoder_decoder_forward)(weights, biases, enc_X, dec_X)
    jax.block_until_ready((logits, state))

    assert logits.shape == (BATCH, SEQ_LEN, VOCAB_SIZE), logits.shape
    assert state.shape == (NUM_LAYERS, BATCH, HIDDEN_SIZE), state.shape

    # numerical check against a pure-JAX reference of the same module math
    # (kernel weights are bf16; 5e-2 tolerance absorbs the cast)
    ref_logits, ref_state = jax.jit(reference_forward)(params, enc_X, dec_X)
    err_l = float(jnp.max(jnp.abs(logits - ref_logits)))
    err_s = float(jnp.max(jnp.abs(state - ref_state)))
    assert err_l < 5e-2 and err_s < 5e-2, (err_l, err_s)

    print("KERNEL_OK")
</pallas_src>

<mosaic_0001>
module attributes {stable_mosaic.version = 11 : i64} {
  func.func @kernel(%arg0: memref<128x1xi32, #tpu.memory_space<vmem>>, %arg1: memref<1152x128xbf16, #tpu.memory_space<vmem>>, %arg2: memref<8x128xf32, #tpu.memory_space<vmem>>, %arg3: memref<8x8x128xf32, #tpu.memory_space<vmem>>, %arg4: memref<2x8x128xf32, #tpu.memory_space<vmem>>) attributes {dimension_semantics = [], scalar_prefetch = 0 : i64, scratch_operands = 0 : i64, tpu.core_type = #tpu.core_type<tc>} {
    %c0 = arith.constant 0 : index
    %c0_0 = arith.constant 0 : index
    %0 = vector.load %arg2[%c0, %c0_0] : memref<8x128xf32, #tpu.memory_space<vmem>>, vector<8x128xf32>
    %c0_1 = arith.constant 0 : index
    %c0_2 = arith.constant 0 : index
    %1 = vector.load %arg0[%c0_1, %c0_2] : memref<128x1xi32, #tpu.memory_space<vmem>>, vector<128x1xi32>
    %2 = tpu.iota {dimensions = array<i32: 1>} : vector<128x128xi32>
    %3 = vector.broadcast %1 : vector<128x1xi32> to vector<128x128xi32>
    %4 = arith.cmpi eq, %2, %3 : vector<128x128xi32>
    %5 = arith.extui %4 : vector<128x128xi1> to vector<128x128xi32>
    %6 = arith.sitofp %5 : vector<128x128xi32> to vector<128x128xf32>
    %7 = arith.truncf %6 : vector<128x128xf32> to vector<128x128xbf16>
    %c0_3 = arith.constant 0 : index
    %c0_4 = arith.constant 0 : index
    %8 = vector.load %arg1[%c0_3, %c0_4] : memref<1152x128xbf16, #tpu.memory_space<vmem>>, vector<128x128xbf16>
    %cst = arith.constant dense<0.000000e+00> : vector<128x128xf32>
    %9 = tpu.matmul %7, %8, %cst {dimension_numbers = #tpu.dot_dimension_numbers<[1], [0], [0], [1], [0, 0, 1, 1], [], []>} : vector<128x128xbf16>, vector<128x128xbf16>, vector<128x128xf32> -> vector<128x128xf32>
    %10 = vector.extract_strided_slice %9 {offsets = [0, 0], sizes = [64, 128], strides = [1, 1]} : vector<128x128xf32> to vector<64x128xf32>
    %11 = vector.extract_strided_slice %9 {offsets = [64, 0], sizes = [64, 128], strides = [1, 1]} : vector<128x128xf32> to vector<64x128xf32>
    %cst_5 = arith.constant 0.000000e+00 : f32
    %12 = vector.broadcast %cst_5 : f32 to vector<8x128xf32>
    %c128 = arith.constant 128 : index
    %c0_6 = arith.constant 0 : index
    %13 = vector.load %arg1[%c128, %c0_6] : memref<1152x128xbf16, #tpu.memory_space<vmem>>, vector<128x128xbf16>
    %14 = vector.extract_strided_slice %0 {offsets = [0, 0], sizes = [1, 128], strides = [1, 1]} : vector<8x128xf32> to vector<1x128xf32>
    %15 = arith.truncf %12 : vector<8x128xf32> to vector<8x128xbf16>
    %cst_7 = arith.constant dense<0.000000e+00> : vector<8x128xf32>
    %16 = tpu.matmul %15, %13, %cst_7 {dimension_numbers = #tpu.dot_dimension_numbers<[1], [0], [0], [1], [0, 0, 1, 1], [], []>} : vector<8x128xbf16>, vector<128x128xbf16>, vector<8x128xf32> -> vector<8x128xf32>
    %17 = vector.broadcast %14 : vector<1x128xf32> to vector<8x128xf32>
    %18 = arith.addf %16, %17 : vector<8x128xf32>
    %19 = vector.extract_strided_slice %10 {offsets = [0, 0], sizes = [8, 128], strides = [1, 1]} : vector<64x128xf32> to vector<8x128xf32>
    %20 = arith.addf %19, %18 : vector<8x128xf32>
    %21 = arith.negf %20 : vector<8x128xf32>
    %22 = math.exp %21 : vector<8x128xf32>
    %cst_8 = arith.constant 1.000000e+00 : f32
    %23 = vector.broadcast %cst_8 : f32 to vector<8x128xf32>
    %24 = arith.addf %23, %22 : vector<8x128xf32>
    %25 = arith.divf %23, %24 : vector<8x128xf32>
    %c64_i32 = arith.constant 64 : i32
    %26 = tpu.dynamic_rotate %25 by %c64_i32 dim 1 : vector<8x128xf32>, i32 -> vector<8x128xf32>
    %27 = arith.mulf %26, %18 : vector<8x128xf32>
    %28 = arith.addf %19, %27 : vector<8x128xf32>
    %29 = math.tanh %28 : vector<8x128xf32>
    %c64_i32_9 = arith.constant 64 : i32
    %30 = tpu.dynamic_rotate %29 by %c64_i32_9 dim 1 : vector<8x128xf32>, i32 -> vector<8x128xf32>
    %c96_i32 = arith.constant 96 : i32
    %31 = tpu.dynamic_rotate %25 by %c96_i32 dim 1 : vector<8x128xf32>, i32 -> vector<8x128xf32>
    %cst_10 = arith.constant 1.000000e+00 : f32
    %32 = vector.broadcast %cst_10 : f32 to vector<8x128xf32>
    %33 = arith.subf %32, %31 : vector<8x128xf32>
    %34 = arith.mulf %33, %30 : vector<8x128xf32>
    %35 = arith.mulf %31, %12 : vector<8x128xf32>
    %36 = arith.addf %34, %35 : vector<8x128xf32>
    %37 = arith.truncf %36 : vector<8x128xf32> to vector<8x128xbf16>
    %cst_11 = arith.constant dense<0.000000e+00> : vector<8x128xf32>
    %38 = tpu.matmul %37, %13, %cst_11 {dimension_numbers = #tpu.dot_dimension_numbers<[1], [0], [0], [1], [0, 0, 1, 1], [], []>} : vector<8x128xbf16>, vector<128x128xbf16>, vector<8x128xf32> -> vector<8x128xf32>
    %39 = vector.broadcast %14 : vector<1x128xf32> to vector<8x128xf32>
    %40 = arith.addf %38, %39 : vector<8x128xf32>
    %41 = vector.extract_strided_slice %10 {offsets = [8, 0], sizes = [8, 128], strides = [1, 1]} : vector<64x128xf32> to vector<8x128xf32>
    %42 = arith.addf %41, %40 : vector<8x128xf32>
    %43 = arith.negf %42 : vector<8x128xf32>
    %44 = math.exp %43 : vector<8x128xf32>
    %cst_12 = arith.constant 1.000000e+00 : f32
    %45 = vector.broadcast %cst_12 : f32 to vector<8x128xf32>
    %46 = arith.addf %45, %44 : vector<8x128xf32>
    %47 = arith.divf %45, %46 : vector<8x128xf32>
    %c64_i32_13 = arith.constant 64 : i32
    %48 = tpu.dynamic_rotate %47 by %c64_i32_13 dim 1 : vector<8x128xf32>, i32 -> vector<8x128xf32>
    %49 = arith.mulf %48, %40 : vector<8x128xf32>
    %50 = arith.addf %41, %49 : vector<8x128xf32>
    %51 = math.tanh %50 : vector<8x128xf32>
    %c64_i32_14 = arith.constant 64 : i32
    %52 = tpu.dynamic_rotate %51 by %c64_i32_14 dim 1 : vector<8x128xf32>, i32 -> vector<8x128xf32>
    %c96_i32_15 = arith.constant 96 : i32
    %53 = tpu.dynamic_rotate %47 by %c96_i32_15 dim 1 : vector<8x128xf32>, i32 -> vector<8x128xf32>
    %cst_16 = arith.constant 1.000000e+00 : f32
    %54 = vector.broadcast %cst_16 : f32 to vector<8x128xf32>
    %55 = arith.subf %54, %53 : vector<8x128xf32>
    %56 = arith.mulf %55, %52 : vector<8x128xf32>
    %57 = arith.mulf %53, %36 : vector<8x128xf32>
    %58 = arith.addf %56, %57 : vector<8x128xf32>
    %59 = arith.truncf %58 : vector<8x128xf32> to vector<8x128xbf16>
    %cst_17 = arith.constant dense<0.000000e+00> : vector<8x128xf32>
    %60 = tpu.matmul %59, %13, %cst_17 {dimension_numbers = #tpu.dot_dimension_numbers<[1], [0], [0], [1], [0, 0, 1, 1], [], []>} : vector<8x128xbf16>, vector<128x128xbf16>, vector<8x128xf32> -> vector<8x128xf32>
    %61 = vector.broadcast %14 : vector<1x128xf32> to vector<8x128xf32>
    %62 = arith.addf %60, %61 : vector<8x128xf32>
    %63 = vector.extract_strided_slice %10 {offsets = [16, 0], sizes = [8, 128], strides = [1, 1]} : vector<64x128xf32> to vector<8x128xf32>
    %64 = arith.addf %63, %62 : vector<8x128xf32>
    %65 = arith.negf %64 : vector<8x128xf32>
    %66 = math.exp %65 : vector<8x128xf32>
    %cst_18 = arith.constant 1.000000e+00 : f32
    %67 = vector.broadcast %cst_18 : f32 to vector<8x128xf32>
    %68 = arith.addf %67, %66 : vector<8x128xf32>
    %69 = arith.divf %67, %68 : vector<8x128xf32>
    %c64_i32_19 = arith.constant 64 : i32
    %70 = tpu.dynamic_rotate %69 by %c64_i32_19 dim 1 : vector<8x128xf32>, i32 -> vector<8x128xf32>
    %71 = arith.mulf %70, %62 : vector<8x128xf32>
    %72 = arith.addf %63, %71 : vector<8x128xf32>
    %73 = math.tanh %72 : vector<8x128xf32>
    %c64_i32_20 = arith.constant 64 : i32
    %74 = tpu.dynamic_rotate %73 by %c64_i32_20 dim 1 : vector<8x128xf32>, i32 -> vector<8x128xf32>
    %c96_i32_21 = arith.constant 96 : i32
    %75 = tpu.dynamic_rotate %69 by %c96_i32_21 dim 1 : vector<8x128xf32>, i32 -> vector<8x128xf32>
    %cst_22 = arith.constant 1.000000e+00 : f32
    %76 = vector.broadcast %cst_22 : f32 to vector<8x128xf32>
    %77 = arith.subf %76, %75 : vector<8x128xf32>
    %78 = arith.mulf %77, %74 : vector<8x128xf32>
    %79 = arith.mulf %75, %58 : vector<8x128xf32>
    %80 = arith.addf %78, %79 : vector<8x128xf32>
    %81 = arith.truncf %80 : vector<8x128xf32> to vector<8x128xbf16>
    %cst_23 = arith.constant dense<0.000000e+00> : vector<8x128xf32>
    %82 = tpu.matmul %81, %13, %cst_23 {dimension_numbers = #tpu.dot_dimension_numbers<[1], [0], [0], [1], [0, 0, 1, 1], [], []>} : vector<8x128xbf16>, vector<128x128xbf16>, vector<8x128xf32> -> vector<8x128xf32>
    %83 = vector.broadcast %14 : vector<1x128xf32> to vector<8x128xf32>
    %84 = arith.addf %82, %83 : vector<8x128xf32>
    %85 = vector.extract_strided_slice %10 {offsets = [24, 0], sizes = [8, 128], strides = [1, 1]} : vector<64x128xf32> to vector<8x128xf32>
    %86 = arith.addf %85, %84 : vector<8x128xf32>
    %87 = arith.negf %86 : vector<8x128xf32>
    %88 = math.exp %87 : vector<8x128xf32>
    %cst_24 = arith.constant 1.000000e+00 : f32
    %89 = vector.broadcast %cst_24 : f32 to vector<8x128xf32>
    %90 = arith.addf %89, %88 : vector<8x128xf32>
    %91 = arith.divf %89, %90 : vector<8x128xf32>
    %c64_i32_25 = arith.constant 64 : i32
    %92 = tpu.dynamic_rotate %91 by %c64_i32_25 dim 1 : vector<8x128xf32>, i32 -> vector<8x128xf32>
    %93 = arith.mulf %92, %84 : vector<8x128xf32>
    %94 = arith.addf %85, %93 : vector<8x128xf32>
    %95 = math.tanh %94 : vector<8x128xf32>
    %c64_i32_26 = arith.constant 64 : i32
    %96 = tpu.dynamic_rotate %95 by %c64_i32_26 dim 1 : vector<8x128xf32>, i32 -> vector<8x128xf32>
    %c96_i32_27 = arith.constant 96 : i32
    %97 = tpu.dynamic_rotate %91 by %c96_i32_27 dim 1 : vector<8x128xf32>, i32 -> vector<8x128xf32>
    %cst_28 = arith.constant 1.000000e+00 : f32
    %98 = vector.broadcast %cst_28 : f32 to vector<8x128xf32>
    %99 = arith.subf %98, %97 : vector<8x128xf32>
    %100 = arith.mulf %99, %96 : vector<8x128xf32>
    %101 = arith.mulf %97, %80 : vector<8x128xf32>
    %102 = arith.addf %100, %101 : vector<8x128xf32>
    %103 = arith.truncf %102 : vector<8x128xf32> to vector<8x128xbf16>
    %cst_29 = arith.constant dense<0.000000e+00> : vector<8x128xf32>
    %104 = tpu.matmul %103, %13, %cst_29 {dimension_numbers = #tpu.dot_dimension_numbers<[1], [0], [0], [1], [0, 0, 1, 1], [], []>} : vector<8x128xbf16>, vector<128x128xbf16>, vector<8x128xf32> -> vector<8x128xf32>
    %105 = vector.broadcast %14 : vector<1x128xf32> to vector<8x128xf32>
    %106 = arith.addf %104, %105 : vector<8x128xf32>
    %107 = vector.extract_strided_slice %10 {offsets = [32, 0], sizes = [8, 128], strides = [1, 1]} : vector<64x128xf32> to vector<8x128xf32>
    %108 = arith.addf %107, %106 : vector<8x128xf32>
    %109 = arith.negf %108 : vector<8x128xf32>
    %110 = math.exp %109 : vector<8x128xf32>
    %cst_30 = arith.constant 1.000000e+00 : f32
    %111 = vector.broadcast %cst_30 : f32 to vector<8x128xf32>
    %112 = arith.addf %111, %110 : vector<8x128xf32>
    %113 = arith.divf %111, %112 : vector<8x128xf32>
    %c64_i32_31 = arith.constant 64 : i32
    %114 = tpu.dynamic_rotate %113 by %c64_i32_31 dim 1 : vector<8x128xf32>, i32 -> vector<8x128xf32>
    %115 = arith.mulf %114, %106 : vector<8x128xf32>
    %116 = arith.addf %107, %115 : vector<8x128xf32>
    %117 = math.tanh %116 : vector<8x128xf32>
    %c64_i32_32 = arith.constant 64 : i32
    %118 = tpu.dynamic_rotate %117 by %c64_i32_32 dim 1 : vector<8x128xf32>, i32 -> vector<8x128xf32>
    %c96_i32_33 = arith.constant 96 : i32
    %119 = tpu.dynamic_rotate %113 by %c96_i32_33 dim 1 : vector<8x128xf32>, i32 -> vector<8x128xf32>
    %cst_34 = arith.constant 1.000000e+00 : f32
    %120 = vector.broadcast %cst_34 : f32 to vector<8x128xf32>
    %121 = arith.subf %120, %119 : vector<8x128xf32>
    %122 = arith.mulf %121, %118 : vector<8x128xf32>
    %123 = arith.mulf %119, %102 : vector<8x128xf32>
    %124 = arith.addf %122, %123 : vector<8x128xf32>
    %125 = arith.truncf %124 : vector<8x128xf32> to vector<8x128xbf16>
    %cst_35 = arith.constant dense<0.000000e+00> : vector<8x128xf32>
    %126 = tpu.matmul %125, %13, %cst_35 {dimension_numbers = #tpu.dot_dimension_numbers<[1], [0], [0], [1], [0, 0, 1, 1], [], []>} : vector<8x128xbf16>, vector<128x128xbf16>, vector<8x128xf32> -> vector<8x128xf32>
    %127 = vector.broadcast %14 : vector<1x128xf32> to vector<8x128xf32>
    %128 = arith.addf %126, %127 : vector<8x128xf32>
    %129 = vector.extract_strided_slice %10 {offsets = [40, 0], sizes = [8, 128], strides = [1, 1]} : vector<64x128xf32> to vector<8x128xf32>
    %130 = arith.addf %129, %128 : vector<8x128xf32>
    %131 = arith.negf %130 : vector<8x128xf32>
    %132 = math.exp %131 : vector<8x128xf32>
    %cst_36 = arith.constant 1.000000e+00 : f32
    %133 = vector.broadcast %cst_36 : f32 to vector<8x128xf32>
    %134 = arith.addf %133, %132 : vector<8x128xf32>
    %135 = arith.divf %133, %134 : vector<8x128xf32>
    %c64_i32_37 = arith.constant 64 : i32
    %136 = tpu.dynamic_rotate %135 by %c64_i32_37 dim 1 : vector<8x128xf32>, i32 -> vector<8x128xf32>
    %137 = arith.mulf %136, %128 : vector<8x128xf32>
    %138 = arith.addf %129, %137 : vector<8x128xf32>
    %139 = math.tanh %138 : vector<8x128xf32>
    %c64_i32_38 = arith.constant 64 : i32
    %140 = tpu.dynamic_rotate %139 by %c64_i32_38 dim 1 : vector<8x128xf32>, i32 -> vector<8x128xf32>
    %c96_i32_39 = arith.constant 96 : i32
    %141 = tpu.dynamic_rotate %135 by %c96_i32_39 dim 1 : vector<8x128xf32>, i32 -> vector<8x128xf32>
    %cst_40 = arith.constant 1.000000e+00 : f32
    %142 = vector.broadcast %cst_40 : f32 to vector<8x128xf32>
    %143 = arith.subf %142, %141 : vector<8x128xf32>
    %144 = arith.mulf %143, %140 : vector<8x128xf32>
    %145 = arith.mulf %141, %124 : vector<8x128xf32>
    %146 = arith.addf %144, %145 : vector<8x128xf32>
    %147 = arith.truncf %146 : vector<8x128xf32> to vector<8x128xbf16>
    %cst_41 = arith.constant dense<0.000000e+00> : vector<8x128xf32>
    %148 = tpu.matmul %147, %13, %cst_41 {dimension_numbers = #tpu.dot_dimension_numbers<[1], [0], [0], [1], [0, 0, 1, 1], [], []>} : vector<8x128xbf16>, vector<128x128xbf16>, vector<8x128xf32> -> vector<8x128xf32>
    %149 = vector.broadcast %14 : vector<1x128xf32> to vector<8x128xf32>
    %150 = arith.addf %148, %149 : vector<8x128xf32>
    %151 = vector.extract_strided_slice %10 {offsets = [48, 0], sizes = [8, 128], strides = [1, 1]} : vector<64x128xf32> to vector<8x128xf32>
    %152 = arith.addf %151, %150 : vector<8x128xf32>
    %153 = arith.negf %152 : vector<8x128xf32>
    %154 = math.exp %153 : vector<8x128xf32>
    %cst_42 = arith.constant 1.000000e+00 : f32
    %155 = vector.broadcast %cst_42 : f32 to vector<8x128xf32>
    %156 = arith.addf %155, %154 : vector<8x128xf32>
    %157 = arith.divf %155, %156 : vector<8x128xf32>
    %c64_i32_43 = arith.constant 64 : i32
    %158 = tpu.dynamic_rotate %157 by %c64_i32_43 dim 1 : vector<8x128xf32>, i32 -> vector<8x128xf32>
    %159 = arith.mulf %158, %150 : vector<8x128xf32>
    %160 = arith.addf %151, %159 : vector<8x128xf32>
    %161 = math.tanh %160 : vector<8x128xf32>
    %c64_i32_44 = arith.constant 64 : i32
    %162 = tpu.dynamic_rotate %161 by %c64_i32_44 dim 1 : vector<8x128xf32>, i32 -> vector<8x128xf32>
    %c96_i32_45 = arith.constant 96 : i32
    %163 = tpu.dynamic_rotate %157 by %c96_i32_45 dim 1 : vector<8x128xf32>, i32 -> vector<8x128xf32>
    %cst_46 = arith.constant 1.000000e+00 : f32
    %164 = vector.broadcast %cst_46 : f32 to vector<8x128xf32>
    %165 = arith.subf %164, %163 : vector<8x128xf32>
    %166 = arith.mulf %165, %162 : vector<8x128xf32>
    %167 = arith.mulf %163, %146 : vector<8x128xf32>
    %168 = arith.addf %166, %167 : vector<8x128xf32>
    %169 = arith.truncf %168 : vector<8x128xf32> to vector<8x128xbf16>
    %cst_47 = arith.constant dense<0.000000e+00> : vector<8x128xf32>
    %170 = tpu.matmul %169, %13, %cst_47 {dimension_numbers = #tpu.dot_dimension_numbers<[1], [0], [0], [1], [0, 0, 1, 1], [], []>} : vector<8x128xbf16>, vector<128x128xbf16>, vector<8x128xf32> -> vector<8x128xf32>
    %171 = vector.broadcast %14 : vector<1x128xf32> to vector<8x128xf32>
    %172 = arith.addf %170, %171 : vector<8x128xf32>
    %173 = vector.extract_strided_slice %10 {offsets = [56, 0], sizes = [8, 128], strides = [1, 1]} : vector<64x128xf32> to vector<8x128xf32>
    %174 = arith.addf %173, %172 : vector<8x128xf32>
    %175 = arith.negf %174 : vector<8x128xf32>
    %176 = math.exp %175 : vector<8x128xf32>
    %cst_48 = arith.constant 1.000000e+00 : f32
    %177 = vector.broadcast %cst_48 : f32 to vector<8x128xf32>
    %178 = arith.addf %177, %176 : vector<8x128xf32>
    %179 = arith.divf %177, %178 : vector<8x128xf32>
    %c64_i32_49 = arith.constant 64 : i32
    %180 = tpu.dynamic_rotate %179 by %c64_i32_49 dim 1 : vector<8x128xf32>, i32 -> vector<8x128xf32>
    %181 = arith.mulf %180, %172 : vector<8x128xf32>
    %182 = arith.addf %173, %181 : vector<8x128xf32>
    %183 = math.tanh %182 : vector<8x128xf32>
    %c64_i32_50 = arith.constant 64 : i32
    %184 = tpu.dynamic_rotate %183 by %c64_i32_50 dim 1 : vector<8x128xf32>, i32 -> vector<8x128xf32>
    %c96_i32_51 = arith.constant 96 : i32
    %185 = tpu.dynamic_rotate %179 by %c96_i32_51 dim 1 : vector<8x128xf32>, i32 -> vector<8x128xf32>
    %cst_52 = arith.constant 1.000000e+00 : f32
    %186 = vector.broadcast %cst_52 : f32 to vector<8x128xf32>
    %187 = arith.subf %186, %185 : vector<8x128xf32>
    %188 = arith.mulf %187, %184 : vector<8x128xf32>
    %189 = arith.mulf %185, %168 : vector<8x128xf32>
    %190 = arith.addf %188, %189 : vector<8x128xf32>
    %191 = tpu.concatenate %36, %58, %80, %102, %124, %146, %168, %190 in 0 : vector<8x128xf32>, vector<8x128xf32>, vector<8x128xf32>, vector<8x128xf32>, vector<8x128xf32>, vector<8x128xf32>, vector<8x128xf32>, vector<8x128xf32> -> vector<64x128xf32>
    %c256 = arith.constant 256 : index
    %c0_53 = arith.constant 0 : index
    %192 = vector.load %arg1[%c256, %c0_53] : memref<1152x128xbf16, #tpu.memory_space<vmem>>, vector<128x128xbf16>
    %c384 = arith.constant 384 : index
    %c0_54 = arith.constant 0 : index
    %193 = vector.load %arg1[%c384, %c0_54] : memref<1152x128xbf16, #tpu.memory_space<vmem>>, vector<128x128xbf16>
    %194 = vector.extract_strided_slice %0 {offsets = [1, 0], sizes = [1, 128], strides = [1, 1]} : vector<8x128xf32> to vector<1x128xf32>
    %195 = vector.extract_strided_slice %0 {offsets = [2, 0], sizes = [1, 128], strides = [1, 1]} : vector<8x128xf32> to vector<1x128xf32>
    %196 = arith.truncf %191 : vector<64x128xf32> to vector<64x128xbf16>
    %cst_55 = arith.constant dense<0.000000e+00> : vector<64x128xf32>
    %197 = tpu.matmul %196, %192, %cst_55 {dimension_numbers = #tpu.dot_dimension_numbers<[1], [0], [0], [1], [0, 0, 1, 1], [], []>} : vector<64x128xbf16>, vector<128x128xbf16>, vector<64x128xf32> -> vector<64x128xf32>
    %198 = vector.broadcast %194 : vector<1x128xf32> to vector<64x128xf32>
    %199 = arith.addf %197, %198 : vector<64x128xf32>
    %200 = arith.truncf %12 : vector<8x128xf32> to vector<8x128xbf16>
    %cst_56 = arith.constant dense<0.000000e+00> : vector<8x128xf32>
    %201 = tpu.matmul %200, %193, %cst_56 {dimension_numbers = #tpu.dot_dimension_numbers<[1], [0], [0], [1], [0, 0, 1, 1], [], []>} : vector<8x128xbf16>, vector<128x128xbf16>, vector<8x128xf32> -> vector<8x128xf32>
    %202 = vector.broadcast %195 : vector<1x128xf32> to vector<8x128xf32>
    %203 = arith.addf %201, %202 : vector<8x128xf32>
    %204 = vector.extract_strided_slice %199 {offsets = [0, 0], sizes = [8, 128], strides = [1, 1]} : vector<64x128xf32> to vector<8x128xf32>
    %205 = arith.addf %204, %203 : vector<8x128xf32>
    %206 = arith.negf %205 : vector<8x128xf32>
    %207 = math.exp %206 : vector<8x128xf32>
    %cst_57 = arith.constant 1.000000e+00 : f32
    %208 = vector.broadcast %cst_57 : f32 to vector<8x128xf32>
    %209 = arith.addf %208, %207 : vector<8x128xf32>
    %210 = arith.divf %208, %209 : vector<8x128xf32>
    %c64_i32_58 = arith.constant 64 : i32
    %211 = tpu.dynamic_rotate %210 by %c64_i32_58 dim 1 : vector<8x128xf32>, i32 -> vector<8x128xf32>
    %212 = arith.mulf %211, %203 : vector<8x128xf32>
    %213 = arith.addf %204, %212 : vector<8x128xf32>
    %214 = math.tanh %213 : vector<8x128xf32>
    %c64_i32_59 = arith.constant 64 : i32
    %215 = tpu.dynamic_rotate %214 by %c64_i32_59 dim 1 : vector<8x128xf32>, i32 -> vector<8x128xf32>
    %c96_i32_60 = arith.constant 96 : i32
    %216 = tpu.dynamic_rotate %210 by %c96_i32_60 dim 1 : vector<8x128xf32>, i32 -> vector<8x128xf32>
    %cst_61 = arith.constant 1.000000e+00 : f32
    %217 = vector.broadcast %cst_61 : f32 to vector<8x128xf32>
    %218 = arith.subf %217, %216 : vector<8x128xf32>
    %219 = arith.mulf %218, %215 : vector<8x128xf32>
    %220 = arith.mulf %216, %12 : vector<8x128xf32>
    %221 = arith.addf %219, %220 : vector<8x128xf32>
    %222 = arith.truncf %221 : vector<8x128xf32> to vector<8x128xbf16>
    %cst_62 = arith.constant dense<0.000000e+00> : vector<8x128xf32>
    %223 = tpu.matmul %222, %193, %cst_62 {dimension_numbers = #tpu.dot_dimension_numbers<[1], [0], [0], [1], [0, 0, 1, 1], [], []>} : vector<8x128xbf16>, vector<128x128xbf16>, vector<8x128xf32> -> vector<8x128xf32>
    %224 = vector.broadcast %195 : vector<1x128xf32> to vector<8x128xf32>
    %225 = arith.addf %223, %224 : vector<8x128xf32>
    %226 = vector.extract_strided_slice %199 {offsets = [8, 0], sizes = [8, 128], strides = [1, 1]} : vector<64x128xf32> to vector<8x128xf32>
    %227 = arith.addf %226, %225 : vector<8x128xf32>
    %228 = arith.negf %227 : vector<8x128xf32>
    %229 = math.exp %228 : vector<8x128xf32>
    %cst_63 = arith.constant 1.000000e+00 : f32
    %230 = vector.broadcast %cst_63 : f32 to vector<8x128xf32>
    %231 = arith.addf %230, %229 : vector<8x128xf32>
    %232 = arith.divf %230, %231 : vector<8x128xf32>
    %c64_i32_64 = arith.constant 64 : i32
    %233 = tpu.dynamic_rotate %232 by %c64_i32_64 dim 1 : vector<8x128xf32>, i32 -> vector<8x128xf32>
    %234 = arith.mulf %233, %225 : vector<8x128xf32>
    %235 = arith.addf %226, %234 : vector<8x128xf32>
    %236 = math.tanh %235 : vector<8x128xf32>
    %c64_i32_65 = arith.constant 64 : i32
    %237 = tpu.dynamic_rotate %236 by %c64_i32_65 dim 1 : vector<8x128xf32>, i32 -> vector<8x128xf32>
    %c96_i32_66 = arith.constant 96 : i32
    %238 = tpu.dynamic_rotate %232 by %c96_i32_66 dim 1 : vector<8x128xf32>, i32 -> vector<8x128xf32>
    %cst_67 = arith.constant 1.000000e+00 : f32
    %239 = vector.broadcast %cst_67 : f32 to vector<8x128xf32>
    %240 = arith.subf %239, %238 : vector<8x128xf32>
    %241 = arith.mulf %240, %237 : vector<8x128xf32>
    %242 = arith.mulf %238, %221 : vector<8x128xf32>
    %243 = arith.addf %241, %242 : vector<8x128xf32>
    %244 = arith.truncf %243 : vector<8x128xf32> to vector<8x128xbf16>
    %cst_68 = arith.constant dense<0.000000e+00> : vector<8x128xf32>
    %245 = tpu.matmul %244, %193, %cst_68 {dimension_numbers = #tpu.dot_dimension_numbers<[1], [0], [0], [1], [0, 0, 1, 1], [], []>} : vector<8x128xbf16>, vector<128x128xbf16>, vector<8x128xf32> -> vector<8x128xf32>
    %246 = vector.broadcast %195 : vector<1x128xf32> to vector<8x128xf32>
    %247 = arith.addf %245, %246 : vector<8x128xf32>
    %248 = vector.extract_strided_slice %199 {offsets = [16, 0], sizes = [8, 128], strides = [1, 1]} : vector<64x128xf32> to vector<8x128xf32>
    %249 = arith.addf %248, %247 : vector<8x128xf32>
    %250 = arith.negf %249 : vector<8x128xf32>
    %251 = math.exp %250 : vector<8x128xf32>
    %cst_69 = arith.constant 1.000000e+00 : f32
    %252 = vector.broadcast %cst_69 : f32 to vector<8x128xf32>
    %253 = arith.addf %252, %251 : vector<8x128xf32>
    %254 = arith.divf %252, %253 : vector<8x128xf32>
    %c64_i32_70 = arith.constant 64 : i32
    %255 = tpu.dynamic_rotate %254 by %c64_i32_70 dim 1 : vector<8x128xf32>, i32 -> vector<8x128xf32>
    %256 = arith.mulf %255, %247 : vector<8x128xf32>
    %257 = arith.addf %248, %256 : vector<8x128xf32>
    %258 = math.tanh %257 : vector<8x128xf32>
    %c64_i32_71 = arith.constant 64 : i32
    %259 = tpu.dynamic_rotate %258 by %c64_i32_71 dim 1 : vector<8x128xf32>, i32 -> vector<8x128xf32>
    %c96_i32_72 = arith.constant 96 : i32
    %260 = tpu.dynamic_rotate %254 by %c96_i32_72 dim 1 : vector<8x128xf32>, i32 -> vector<8x128xf32>
    %cst_73 = arith.constant 1.000000e+00 : f32
    %261 = vector.broadcast %cst_73 : f32 to vector<8x128xf32>
    %262 = arith.subf %261, %260 : vector<8x128xf32>
    %263 = arith.mulf %262, %259 : vector<8x128xf32>
    %264 = arith.mulf %260, %243 : vector<8x128xf32>
    %265 = arith.addf %263, %264 : vector<8x128xf32>
    %266 = arith.truncf %265 : vector<8x128xf32> to vector<8x128xbf16>
    %cst_74 = arith.constant dense<0.000000e+00> : vector<8x128xf32>
    %267 = tpu.matmul %266, %193, %cst_74 {dimension_numbers = #tpu.dot_dimension_numbers<[1], [0], [0], [1], [0, 0, 1, 1], [], []>} : vector<8x128xbf16>, vector<128x128xbf16>, vector<8x128xf32> -> vector<8x128xf32>
    %268 = vector.broadcast %195 : vector<1x128xf32> to vector<8x128xf32>
    %269 = arith.addf %267, %268 : vector<8x128xf32>
    %270 = vector.extract_strided_slice %199 {offsets = [24, 0], sizes = [8, 128], strides = [1, 1]} : vector<64x128xf32> to vector<8x128xf32>
    %271 = arith.addf %270, %269 : vector<8x128xf32>
    %272 = arith.negf %271 : vector<8x128xf32>
    %273 = math.exp %272 : vector<8x128xf32>
    %cst_75 = arith.constant 1.000000e+00 : f32
    %274 = vector.broadcast %cst_75 : f32 to vector<8x128xf32>
    %275 = arith.addf %274, %273 : vector<8x128xf32>
    %276 = arith.divf %274, %275 : vector<8x128xf32>
    %c64_i32_76 = arith.constant 64 : i32
    %277 = tpu.dynamic_rotate %276 by %c64_i32_76 dim 1 : vector<8x128xf32>, i32 -> vector<8x128xf32>
    %278 = arith.mulf %277, %269 : vector<8x128xf32>
    %279 = arith.addf %270, %278 : vector<8x128xf32>
    %280 = math.tanh %279 : vector<8x128xf32>
    %c64_i32_77 = arith.constant 64 : i32
    %281 = tpu.dynamic_rotate %280 by %c64_i32_77 dim 1 : vector<8x128xf32>, i32 -> vector<8x128xf32>
    %c96_i32_78 = arith.constant 96 : i32
    %282 = tpu.dynamic_rotate %276 by %c96_i32_78 dim 1 : vector<8x128xf32>, i32 -> vector<8x128xf32>
    %cst_79 = arith.constant 1.000000e+00 : f32
    %283 = vector.broadcast %cst_79 : f32 to vector<8x128xf32>
    %284 = arith.subf %283, %282 : vector<8x128xf32>
    %285 = arith.mulf %284, %281 : vector<8x128xf32>
    %286 = arith.mulf %282, %265 : vector<8x128xf32>
    %287 = arith.addf %285, %286 : vector<8x128xf32>
    %288 = arith.truncf %287 : vector<8x128xf32> to vector<8x128xbf16>
    %cst_80 = arith.constant dense<0.000000e+00> : vector<8x128xf32>
    %289 = tpu.matmul %288, %193, %cst_80 {dimension_numbers = #tpu.dot_dimension_numbers<[1], [0], [0], [1], [0, 0, 1, 1], [], []>} : vector<8x128xbf16>, vector<128x128xbf16>, vector<8x128xf32> -> vector<8x128xf32>
    %290 = vector.broadcast %195 : vector<1x128xf32> to vector<8x128xf32>
    %291 = arith.addf %289, %290 : vector<8x128xf32>
    %292 = vector.extract_strided_slice %199 {offsets = [32, 0], sizes = [8, 128], strides = [1, 1]} : vector<64x128xf32> to vector<8x128xf32>
    %293 = arith.addf %292, %291 : vector<8x128xf32>
    %294 = arith.negf %293 : vector<8x128xf32>
    %295 = math.exp %294 : vector<8x128xf32>
    %cst_81 = arith.constant 1.000000e+00 : f32
    %296 = vector.broadcast %cst_81 : f32 to vector<8x128xf32>
    %297 = arith.addf %296, %295 : vector<8x128xf32>
    %298 = arith.divf %296, %297 : vector<8x128xf32>
    %c64_i32_82 = arith.constant 64 : i32
    %299 = tpu.dynamic_rotate %298 by %c64_i32_82 dim 1 : vector<8x128xf32>, i32 -> vector<8x128xf32>
    %300 = arith.mulf %299, %291 : vector<8x128xf32>
    %301 = arith.addf %292, %300 : vector<8x128xf32>
    %302 = math.tanh %301 : vector<8x128xf32>
    %c64_i32_83 = arith.constant 64 : i32
    %303 = tpu.dynamic_rotate %302 by %c64_i32_83 dim 1 : vector<8x128xf32>, i32 -> vector<8x128xf32>
    %c96_i32_84 = arith.constant 96 : i32
    %304 = tpu.dynamic_rotate %298 by %c96_i32_84 dim 1 : vector<8x128xf32>, i32 -> vector<8x128xf32>
    %cst_85 = arith.constant 1.000000e+00 : f32
    %305 = vector.broadcast %cst_85 : f32 to vector<8x128xf32>
    %306 = arith.subf %305, %304 : vector<8x128xf32>
    %307 = arith.mulf %306, %303 : vector<8x128xf32>
    %308 = arith.mulf %304, %287 : vector<8x128xf32>
    %309 = arith.addf %307, %308 : vector<8x128xf32>
    %310 = arith.truncf %309 : vector<8x128xf32> to vector<8x128xbf16>
    %cst_86 = arith.constant dense<0.000000e+00> : vector<8x128xf32>
    %311 = tpu.matmul %310, %193, %cst_86 {dimension_numbers = #tpu.dot_dimension_numbers<[1], [0], [0], [1], [0, 0, 1, 1], [], []>} : vector<8x128xbf16>, vector<128x128xbf16>, vector<8x128xf32> -> vector<8x128xf32>
    %312 = vector.broadcast %195 : vector<1x128xf32> to vector<8x128xf32>
    %313 = arith.addf %311, %312 : vector<8x128xf32>
    %314 = vector.extract_strided_slice %199 {offsets = [40, 0], sizes = [8, 128], strides = [1, 1]} : vector<64x128xf32> to vector<8x128xf32>
    %315 = arith.addf %314, %313 : vector<8x128xf32>
    %316 = arith.negf %315 : vector<8x128xf32>
    %317 = math.exp %316 : vector<8x128xf32>
    %cst_87 = arith.constant 1.000000e+00 : f32
    %318 = vector.broadcast %cst_87 : f32 to vector<8x128xf32>
    %319 = arith.addf %318, %317 : vector<8x128xf32>
    %320 = arith.divf %318, %319 : vector<8x128xf32>
    %c64_i32_88 = arith.constant 64 : i32
    %321 = tpu.dynamic_rotate %320 by %c64_i32_88 dim 1 : vector<8x128xf32>, i32 -> vector<8x128xf32>
    %322 = arith.mulf %321, %313 : vector<8x128xf32>
    %323 = arith.addf %314, %322 : vector<8x128xf32>
    %324 = math.tanh %323 : vector<8x128xf32>
    %c64_i32_89 = arith.constant 64 : i32
    %325 = tpu.dynamic_rotate %324 by %c64_i32_89 dim 1 : vector<8x128xf32>, i32 -> vector<8x128xf32>
    %c96_i32_90 = arith.constant 96 : i32
    %326 = tpu.dynamic_rotate %320 by %c96_i32_90 dim 1 : vector<8x128xf32>, i32 -> vector<8x128xf32>
    %cst_91 = arith.constant 1.000000e+00 : f32
    %327 = vector.broadcast %cst_91 : f32 to vector<8x128xf32>
    %328 = arith.subf %327, %326 : vector<8x128xf32>
    %329 = arith.mulf %328, %325 : vector<8x128xf32>
    %330 = arith.mulf %326, %309 : vector<8x128xf32>
    %331 = arith.addf %329, %330 : vector<8x128xf32>
    %332 = arith.truncf %331 : vector<8x128xf32> to vector<8x128xbf16>
    %cst_92 = arith.constant dense<0.000000e+00> : vector<8x128xf32>
    %333 = tpu.matmul %332, %193, %cst_92 {dimension_numbers = #tpu.dot_dimension_numbers<[1], [0], [0], [1], [0, 0, 1, 1], [], []>} : vector<8x128xbf16>, vector<128x128xbf16>, vector<8x128xf32> -> vector<8x128xf32>
    %334 = vector.broadcast %195 : vector<1x128xf32> to vector<8x128xf32>
    %335 = arith.addf %333, %334 : vector<8x128xf32>
    %336 = vector.extract_strided_slice %199 {offsets = [48, 0], sizes = [8, 128], strides = [1, 1]} : vector<64x128xf32> to vector<8x128xf32>
    %337 = arith.addf %336, %335 : vector<8x128xf32>
    %338 = arith.negf %337 : vector<8x128xf32>
    %339 = math.exp %338 : vector<8x128xf32>
    %cst_93 = arith.constant 1.000000e+00 : f32
    %340 = vector.broadcast %cst_93 : f32 to vector<8x128xf32>
    %341 = arith.addf %340, %339 : vector<8x128xf32>
    %342 = arith.divf %340, %341 : vector<8x128xf32>
    %c64_i32_94 = arith.constant 64 : i32
    %343 = tpu.dynamic_rotate %342 by %c64_i32_94 dim 1 : vector<8x128xf32>, i32 -> vector<8x128xf32>
    %344 = arith.mulf %343, %335 : vector<8x128xf32>
    %345 = arith.addf %336, %344 : vector<8x128xf32>
    %346 = math.tanh %345 : vector<8x128xf32>
    %c64_i32_95 = arith.constant 64 : i32
    %347 = tpu.dynamic_rotate %346 by %c64_i32_95 dim 1 : vector<8x128xf32>, i32 -> vector<8x128xf32>
    %c96_i32_96 = arith.constant 96 : i32
    %348 = tpu.dynamic_rotate %342 by %c96_i32_96 dim 1 : vector<8x128xf32>, i32 -> vector<8x128xf32>
    %cst_97 = arith.constant 1.000000e+00 : f32
    %349 = vector.broadcast %cst_97 : f32 to vector<8x128xf32>
    %350 = arith.subf %349, %348 : vector<8x128xf32>
    %351 = arith.mulf %350, %347 : vector<8x128xf32>
    %352 = arith.mulf %348, %331 : vector<8x128xf32>
    %353 = arith.addf %351, %352 : vector<8x128xf32>
    %354 = arith.truncf %353 : vector<8x128xf32> to vector<8x128xbf16>
    %cst_98 = arith.constant dense<0.000000e+00> : vector<8x128xf32>
    %355 = tpu.matmul %354, %193, %cst_98 {dimension_numbers = #tpu.dot_dimension_numbers<[1], [0], [0], [1], [0, 0, 1, 1], [], []>} : vector<8x128xbf16>, vector<128x128xbf16>, vector<8x128xf32> -> vector<8x128xf32>
    %356 = vector.broadcast %195 : vector<1x128xf32> to vector<8x128xf32>
    %357 = arith.addf %355, %356 : vector<8x128xf32>
    %358 = vector.extract_strided_slice %199 {offsets = [56, 0], sizes = [8, 128], strides = [1, 1]} : vector<64x128xf32> to vector<8x128xf32>
    %359 = arith.addf %358, %357 : vector<8x128xf32>
    %360 = arith.negf %359 : vector<8x128xf32>
    %361 = math.exp %360 : vector<8x128xf32>
    %cst_99 = arith.constant 1.000000e+00 : f32
    %362 = vector.broadcast %cst_99 : f32 to vector<8x128xf32>
    %363 = arith.addf %362, %361 : vector<8x128xf32>
    %364 = arith.divf %362, %363 : vector<8x128xf32>
    %c64_i32_100 = arith.constant 64 : i32
    %365 = tpu.dynamic_rotate %364 by %c64_i32_100 dim 1 : vector<8x128xf32>, i32 -> vector<8x128xf32>
    %366 = arith.mulf %365, %357 : vector<8x128xf32>
    %367 = arith.addf %358, %366 : vector<8x128xf32>
    %368 = math.tanh %367 : vector<8x128xf32>
    %c64_i32_101 = arith.constant 64 : i32
    %369 = tpu.dynamic_rotate %368 by %c64_i32_101 dim 1 : vector<8x128xf32>, i32 -> vector<8x128xf32>
    %c96_i32_102 = arith.constant 96 : i32
    %370 = tpu.dynamic_rotate %364 by %c96_i32_102 dim 1 : vector<8x128xf32>, i32 -> vector<8x128xf32>
    %cst_103 = arith.constant 1.000000e+00 : f32
    %371 = vector.broadcast %cst_103 : f32 to vector<8x128xf32>
    %372 = arith.subf %371, %370 : vector<8x128xf32>
    %373 = arith.mulf %372, %369 : vector<8x128xf32>
    %374 = arith.mulf %370, %353 : vector<8x128xf32>
    %375 = arith.addf %373, %374 : vector<8x128xf32>
    %c512 = arith.constant 512 : index
    %c0_104 = arith.constant 0 : index
    %376 = vector.load %arg1[%c512, %c0_104] : memref<1152x128xbf16, #tpu.memory_space<vmem>>, vector<128x128xbf16>
    %c640 = arith.constant 640 : index
    %c0_105 = arith.constant 0 : index
    %377 = vector.load %arg1[%c640, %c0_105] : memref<1152x128xbf16, #tpu.memory_space<vmem>>, vector<128x128xbf16>
    %378 = vector.extract_strided_slice %0 {offsets = [3, 0], sizes = [1, 128], strides = [1, 1]} : vector<8x128xf32> to vector<1x128xf32>
    %379 = vector.extract_strided_slice %0 {offsets = [4, 0], sizes = [1, 128], strides = [1, 1]} : vector<8x128xf32> to vector<1x128xf32>
    %380 = arith.truncf %375 : vector<8x128xf32> to vector<8x128xbf16>
    %cst_106 = arith.constant dense<0.000000e+00> : vector<8x128xf32>
    %381 = tpu.matmul %380, %376, %cst_106 {dimension_numbers = #tpu.dot_dimension_numbers<[1], [0], [0], [1], [0, 0, 1, 1], [], []>} : vector<8x128xbf16>, vector<128x128xbf16>, vector<8x128xf32> -> vector<8x128xf32>
    %382 = vector.broadcast %378 : vector<1x128xf32> to vector<8x128xf32>
    %383 = arith.addf %381, %382 : vector<8x128xf32>
    %384 = vector.shape_cast %11 : vector<64x128xf32> to vector<8x8x128xf32>
    %385 = vector.shape_cast %383 : vector<8x128xf32> to vector<1x8x128xf32>
    %386 = vector.broadcast %385 : vector<1x8x128xf32> to vector<8x8x128xf32>
    %387 = arith.addf %384, %386 : vector<8x8x128xf32>
    %388 = vector.shape_cast %387 : vector<8x8x128xf32> to vector<64x128xf32>
    %389 = arith.truncf %190 : vector<8x128xf32> to vector<8x128xbf16>
    %cst_107 = arith.constant dense<0.000000e+00> : vector<8x128xf32>
    %390 = tpu.matmul %389, %377, %cst_107 {dimension_numbers = #tpu.dot_dimension_numbers<[1], [0], [0], [1], [0, 0, 1, 1], [], []>} : vector<8x128xbf16>, vector<128x128xbf16>, vector<8x128xf32> -> vector<8x128xf32>
    %391 = vector.broadcast %379 : vector<1x128xf32> to vector<8x128xf32>
    %392 = arith.addf %390, %391 : vector<8x128xf32>
    %393 = vector.extract_strided_slice %388 {offsets = [0, 0], sizes = [8, 128], strides = [1, 1]} : vector<64x128xf32> to vector<8x128xf32>
    %394 = arith.addf %393, %392 : vector<8x128xf32>
    %395 = arith.negf %394 : vector<8x128xf32>
    %396 = math.exp %395 : vector<8x128xf32>
    %cst_108 = arith.constant 1.000000e+00 : f32
    %397 = vector.broadcast %cst_108 : f32 to vector<8x128xf32>
    %398 = arith.addf %397, %396 : vector<8x128xf32>
    %399 = arith.divf %397, %398 : vector<8x128xf32>
    %c64_i32_109 = arith.constant 64 : i32
    %400 = tpu.dynamic_rotate %399 by %c64_i32_109 dim 1 : vector<8x128xf32>, i32 -> vector<8x128xf32>
    %401 = arith.mulf %400, %392 : vector<8x128xf32>
    %402 = arith.addf %393, %401 : vector<8x128xf32>
    %403 = math.tanh %402 : vector<8x128xf32>
    %c64_i32_110 = arith.constant 64 : i32
    %404 = tpu.dynamic_rotate %403 by %c64_i32_110 dim 1 : vector<8x128xf32>, i32 -> vector<8x128xf32>
    %c96_i32_111 = arith.constant 96 : i32
    %405 = tpu.dynamic_rotate %399 by %c96_i32_111 dim 1 : vector<8x128xf32>, i32 -> vector<8x128xf32>
    %cst_112 = arith.constant 1.000000e+00 : f32
    %406 = vector.broadcast %cst_112 : f32 to vector<8x128xf32>
    %407 = arith.subf %406, %405 : vector<8x128xf32>
    %408 = arith.mulf %407, %404 : vector<8x128xf32>
    %409 = arith.mulf %405, %190 : vector<8x128xf32>
    %410 = arith.addf %408, %409 : vector<8x128xf32>
    %411 = arith.truncf %410 : vector<8x128xf32> to vector<8x128xbf16>
    %cst_113 = arith.constant dense<0.000000e+00> : vector<8x128xf32>
    %412 = tpu.matmul %411, %377, %cst_113 {dimension_numbers = #tpu.dot_dimension_numbers<[1], [0], [0], [1], [0, 0, 1, 1], [], []>} : vector<8x128xbf16>, vector<128x128xbf16>, vector<8x128xf32> -> vector<8x128xf32>
    %413 = vector.broadcast %379 : vector<1x128xf32> to vector<8x128xf32>
    %414 = arith.addf %412, %413 : vector<8x128xf32>
    %415 = vector.extract_strided_slice %388 {offsets = [8, 0], sizes = [8, 128], strides = [1, 1]} : vector<64x128xf32> to vector<8x128xf32>
    %416 = arith.addf %415, %414 : vector<8x128xf32>
    %417 = arith.negf %416 : vector<8x128xf32>
    %418 = math.exp %417 : vector<8x128xf32>
    %cst_114 = arith.constant 1.000000e+00 : f32
    %419 = vector.broadcast %cst_114 : f32 to vector<8x128xf32>
    %420 = arith.addf %419, %418 : vector<8x128xf32>
    %421 = arith.divf %419, %420 : vector<8x128xf32>
    %c64_i32_115 = arith.constant 64 : i32
    %422 = tpu.dynamic_rotate %421 by %c64_i32_115 dim 1 : vector<8x128xf32>, i32 -> vector<8x128xf32>
    %423 = arith.mulf %422, %414 : vector<8x128xf32>
    %424 = arith.addf %415, %423 : vector<8x128xf32>
    %425 = math.tanh %424 : vector<8x128xf32>
    %c64_i32_116 = arith.constant 64 : i32
    %426 = tpu.dynamic_rotate %425 by %c64_i32_116 dim 1 : vector<8x128xf32>, i32 -> vector<8x128xf32>
    %c96_i32_117 = arith.constant 96 : i32
    %427 = tpu.dynamic_rotate %421 by %c96_i32_117 dim 1 : vector<8x128xf32>, i32 -> vector<8x128xf32>
    %cst_118 = arith.constant 1.000000e+00 : f32
    %428 = vector.broadcast %cst_118 : f32 to vector<8x128xf32>
    %429 = arith.subf %428, %427 : vector<8x128xf32>
    %430 = arith.mulf %429, %426 : vector<8x128xf32>
    %431 = arith.mulf %427, %410 : vector<8x128xf32>
    %432 = arith.addf %430, %431 : vector<8x128xf32>
    %433 = arith.truncf %432 : vector<8x128xf32> to vector<8x128xbf16>
    %cst_119 = arith.constant dense<0.000000e+00> : vector<8x128xf32>
    %434 = tpu.matmul %433, %377, %cst_119 {dimension_numbers = #tpu.dot_dimension_numbers<[1], [0], [0], [1], [0, 0, 1, 1], [], []>} : vector<8x128xbf16>, vector<128x128xbf16>, vector<8x128xf32> -> vector<8x128xf32>
    %435 = vector.broadcast %379 : vector<1x128xf32> to vector<8x128xf32>
    %436 = arith.addf %434, %435 : vector<8x128xf32>
    %437 = vector.extract_strided_slice %388 {offsets = [16, 0], sizes = [8, 128], strides = [1, 1]} : vector<64x128xf32> to vector<8x128xf32>
    %438 = arith.addf %437, %436 : vector<8x128xf32>
    %439 = arith.negf %438 : vector<8x128xf32>
    %440 = math.exp %439 : vector<8x128xf32>
    %cst_120 = arith.constant 1.000000e+00 : f32
    %441 = vector.broadcast %cst_120 : f32 to vector<8x128xf32>
    %442 = arith.addf %441, %440 : vector<8x128xf32>
    %443 = arith.divf %441, %442 : vector<8x128xf32>
    %c64_i32_121 = arith.constant 64 : i32
    %444 = tpu.dynamic_rotate %443 by %c64_i32_121 dim 1 : vector<8x128xf32>, i32 -> vector<8x128xf32>
    %445 = arith.mulf %444, %436 : vector<8x128xf32>
    %446 = arith.addf %437, %445 : vector<8x128xf32>
    %447 = math.tanh %446 : vector<8x128xf32>
    %c64_i32_122 = arith.constant 64 : i32
    %448 = tpu.dynamic_rotate %447 by %c64_i32_122 dim 1 : vector<8x128xf32>, i32 -> vector<8x128xf32>
    %c96_i32_123 = arith.constant 96 : i32
    %449 = tpu.dynamic_rotate %443 by %c96_i32_123 dim 1 : vector<8x128xf32>, i32 -> vector<8x128xf32>
    %cst_124 = arith.constant 1.000000e+00 : f32
    %450 = vector.broadcast %cst_124 : f32 to vector<8x128xf32>
    %451 = arith.subf %450, %449 : vector<8x128xf32>
    %452 = arith.mulf %451, %448 : vector<8x128xf32>
    %453 = arith.mulf %449, %432 : vector<8x128xf32>
    %454 = arith.addf %452, %453 : vector<8x128xf32>
    %455 = arith.truncf %454 : vector<8x128xf32> to vector<8x128xbf16>
    %cst_125 = arith.constant dense<0.000000e+00> : vector<8x128xf32>
    %456 = tpu.matmul %455, %377, %cst_125 {dimension_numbers = #tpu.dot_dimension_numbers<[1], [0], [0], [1], [0, 0, 1, 1], [], []>} : vector<8x128xbf16>, vector<128x128xbf16>, vector<8x128xf32> -> vector<8x128xf32>
    %457 = vector.broadcast %379 : vector<1x128xf32> to vector<8x128xf32>
    %458 = arith.addf %456, %457 : vector<8x128xf32>
    %459 = vector.extract_strided_slice %388 {offsets = [24, 0], sizes = [8, 128], strides = [1, 1]} : vector<64x128xf32> to vector<8x128xf32>
    %460 = arith.addf %459, %458 : vector<8x128xf32>
    %461 = arith.negf %460 : vector<8x128xf32>
    %462 = math.exp %461 : vector<8x128xf32>
    %cst_126 = arith.constant 1.000000e+00 : f32
    %463 = vector.broadcast %cst_126 : f32 to vector<8x128xf32>
    %464 = arith.addf %463, %462 : vector<8x128xf32>
    %465 = arith.divf %463, %464 : vector<8x128xf32>
    %c64_i32_127 = arith.constant 64 : i32
    %466 = tpu.dynamic_rotate %465 by %c64_i32_127 dim 1 : vector<8x128xf32>, i32 -> vector<8x128xf32>
    %467 = arith.mulf %466, %458 : vector<8x128xf32>
    %468 = arith.addf %459, %467 : vector<8x128xf32>
    %469 = math.tanh %468 : vector<8x128xf32>
    %c64_i32_128 = arith.constant 64 : i32
    %470 = tpu.dynamic_rotate %469 by %c64_i32_128 dim 1 : vector<8x128xf32>, i32 -> vector<8x128xf32>
    %c96_i32_129 = arith.constant 96 : i32
    %471 = tpu.dynamic_rotate %465 by %c96_i32_129 dim 1 : vector<8x128xf32>, i32 -> vector<8x128xf32>
    %cst_130 = arith.constant 1.000000e+00 : f32
    %472 = vector.broadcast %cst_130 : f32 to vector<8x128xf32>
    %473 = arith.subf %472, %471 : vector<8x128xf32>
    %474 = arith.mulf %473, %470 : vector<8x128xf32>
    %475 = arith.mulf %471, %454 : vector<8x128xf32>
    %476 = arith.addf %474, %475 : vector<8x128xf32>
    %477 = arith.truncf %476 : vector<8x128xf32> to vector<8x128xbf16>
    %cst_131 = arith.constant dense<0.000000e+00> : vector<8x128xf32>
    %478 = tpu.matmul %477, %377, %cst_131 {dimension_numbers = #tpu.dot_dimension_numbers<[1], [0], [0], [1], [0, 0, 1, 1], [], []>} : vector<8x128xbf16>, vector<128x128xbf16>, vector<8x128xf32> -> vector<8x128xf32>
    %479 = vector.broadcast %379 : vector<1x128xf32> to vector<8x128xf32>
    %480 = arith.addf %478, %479 : vector<8x128xf32>
    %481 = vector.extract_strided_slice %388 {offsets = [32, 0], sizes = [8, 128], strides = [1, 1]} : vector<64x128xf32> to vector<8x128xf32>
    %482 = arith.addf %481, %480 : vector<8x128xf32>
    %483 = arith.negf %482 : vector<8x128xf32>
    %484 = math.exp %483 : vector<8x128xf32>
    %cst_132 = arith.constant 1.000000e+00 : f32
    %485 = vector.broadcast %cst_132 : f32 to vector<8x128xf32>
    %486 = arith.addf %485, %484 : vector<8x128xf32>
    %487 = arith.divf %485, %486 : vector<8x128xf32>
    %c64_i32_133 = arith.constant 64 : i32
    %488 = tpu.dynamic_rotate %487 by %c64_i32_133 dim 1 : vector<8x128xf32>, i32 -> vector<8x128xf32>
    %489 = arith.mulf %488, %480 : vector<8x128xf32>
    %490 = arith.addf %481, %489 : vector<8x128xf32>
    %491 = math.tanh %490 : vector<8x128xf32>
    %c64_i32_134 = arith.constant 64 : i32
    %492 = tpu.dynamic_rotate %491 by %c64_i32_134 dim 1 : vector<8x128xf32>, i32 -> vector<8x128xf32>
    %c96_i32_135 = arith.constant 96 : i32
    %493 = tpu.dynamic_rotate %487 by %c96_i32_135 dim 1 : vector<8x128xf32>, i32 -> vector<8x128xf32>
    %cst_136 = arith.constant 1.000000e+00 : f32
    %494 = vector.broadcast %cst_136 : f32 to vector<8x128xf32>
    %495 = arith.subf %494, %493 : vector<8x128xf32>
    %496 = arith.mulf %495, %492 : vector<8x128xf32>
    %497 = arith.mulf %493, %476 : vector<8x128xf32>
    %498 = arith.addf %496, %497 : vector<8x128xf32>
    %499 = arith.truncf %498 : vector<8x128xf32> to vector<8x128xbf16>
    %cst_137 = arith.constant dense<0.000000e+00> : vector<8x128xf32>
    %500 = tpu.matmul %499, %377, %cst_137 {dimension_numbers = #tpu.dot_dimension_numbers<[1], [0], [0], [1], [0, 0, 1, 1], [], []>} : vector<8x128xbf16>, vector<128x128xbf16>, vector<8x128xf32> -> vector<8x128xf32>
    %501 = vector.broadcast %379 : vector<1x128xf32> to vector<8x128xf32>
    %502 = arith.addf %500, %501 : vector<8x128xf32>
    %503 = vector.extract_strided_slice %388 {offsets = [40, 0], sizes = [8, 128], strides = [1, 1]} : vector<64x128xf32> to vector<8x128xf32>
    %504 = arith.addf %503, %502 : vector<8x128xf32>
    %505 = arith.negf %504 : vector<8x128xf32>
    %506 = math.exp %505 : vector<8x128xf32>
    %cst_138 = arith.constant 1.000000e+00 : f32
    %507 = vector.broadcast %cst_138 : f32 to vector<8x128xf32>
    %508 = arith.addf %507, %506 : vector<8x128xf32>
    %509 = arith.divf %507, %508 : vector<8x128xf32>
    %c64_i32_139 = arith.constant 64 : i32
    %510 = tpu.dynamic_rotate %509 by %c64_i32_139 dim 1 : vector<8x128xf32>, i32 -> vector<8x128xf32>
    %511 = arith.mulf %510, %502 : vector<8x128xf32>
    %512 = arith.addf %503, %511 : vector<8x128xf32>
    %513 = math.tanh %512 : vector<8x128xf32>
    %c64_i32_140 = arith.constant 64 : i32
    %514 = tpu.dynamic_rotate %513 by %c64_i32_140 dim 1 : vector<8x128xf32>, i32 -> vector<8x128xf32>
    %c96_i32_141 = arith.constant 96 : i32
    %515 = tpu.dynamic_rotate %509 by %c96_i32_141 dim 1 : vector<8x128xf32>, i32 -> vector<8x128xf32>
    %cst_142 = arith.constant 1.000000e+00 : f32
    %516 = vector.broadcast %cst_142 : f32 to vector<8x128xf32>
    %517 = arith.subf %516, %515 : vector<8x128xf32>
    %518 = arith.mulf %517, %514 : vector<8x128xf32>
    %519 = arith.mulf %515, %498 : vector<8x128xf32>
    %520 = arith.addf %518, %519 : vector<8x128xf32>
    %521 = arith.truncf %520 : vector<8x128xf32> to vector<8x128xbf16>
    %cst_143 = arith.constant dense<0.000000e+00> : vector<8x128xf32>
    %522 = tpu.matmul %521, %377, %cst_143 {dimension_numbers = #tpu.dot_dimension_numbers<[1], [0], [0], [1], [0, 0, 1, 1], [], []>} : vector<8x128xbf16>, vector<128x128xbf16>, vector<8x128xf32> -> vector<8x128xf32>
    %523 = vector.broadcast %379 : vector<1x128xf32> to vector<8x128xf32>
    %524 = arith.addf %522, %523 : vector<8x128xf32>
    %525 = vector.extract_strided_slice %388 {offsets = [48, 0], sizes = [8, 128], strides = [1, 1]} : vector<64x128xf32> to vector<8x128xf32>
    %526 = arith.addf %525, %524 : vector<8x128xf32>
    %527 = arith.negf %526 : vector<8x128xf32>
    %528 = math.exp %527 : vector<8x128xf32>
    %cst_144 = arith.constant 1.000000e+00 : f32
    %529 = vector.broadcast %cst_144 : f32 to vector<8x128xf32>
    %530 = arith.addf %529, %528 : vector<8x128xf32>
    %531 = arith.divf %529, %530 : vector<8x128xf32>
    %c64_i32_145 = arith.constant 64 : i32
    %532 = tpu.dynamic_rotate %531 by %c64_i32_145 dim 1 : vector<8x128xf32>, i32 -> vector<8x128xf32>
    %533 = arith.mulf %532, %524 : vector<8x128xf32>
    %534 = arith.addf %525, %533 : vector<8x128xf32>
    %535 = math.tanh %534 : vector<8x128xf32>
    %c64_i32_146 = arith.constant 64 : i32
    %536 = tpu.dynamic_rotate %535 by %c64_i32_146 dim 1 : vector<8x128xf32>, i32 -> vector<8x128xf32>
    %c96_i32_147 = arith.constant 96 : i32
    %537 = tpu.dynamic_rotate %531 by %c96_i32_147 dim 1 : vector<8x128xf32>, i32 -> vector<8x128xf32>
    %cst_148 = arith.constant 1.000000e+00 : f32
    %538 = vector.broadcast %cst_148 : f32 to vector<8x128xf32>
    %539 = arith.subf %538, %537 : vector<8x128xf32>
    %540 = arith.mulf %539, %536 : vector<8x128xf32>
    %541 = arith.mulf %537, %520 : vector<8x128xf32>
    %542 = arith.addf %540, %541 : vector<8x128xf32>
    %543 = arith.truncf %542 : vector<8x128xf32> to vector<8x128xbf16>
    %cst_149 = arith.constant dense<0.000000e+00> : vector<8x128xf32>
    %544 = tpu.matmul %543, %377, %cst_149 {dimension_numbers = #tpu.dot_dimension_numbers<[1], [0], [0], [1], [0, 0, 1, 1], [], []>} : vector<8x128xbf16>, vector<128x128xbf16>, vector<8x128xf32> -> vector<8x128xf32>
    %545 = vector.broadcast %379 : vector<1x128xf32> to vector<8x128xf32>
    %546 = arith.addf %544, %545 : vector<8x128xf32>
    %547 = vector.extract_strided_slice %388 {offsets = [56, 0], sizes = [8, 128], strides = [1, 1]} : vector<64x128xf32> to vector<8x128xf32>
    %548 = arith.addf %547, %546 : vector<8x128xf32>
    %549 = arith.negf %548 : vector<8x128xf32>
    %550 = math.exp %549 : vector<8x128xf32>
    %cst_150 = arith.constant 1.000000e+00 : f32
    %551 = vector.broadcast %cst_150 : f32 to vector<8x128xf32>
    %552 = arith.addf %551, %550 : vector<8x128xf32>
    %553 = arith.divf %551, %552 : vector<8x128xf32>
    %c64_i32_151 = arith.constant 64 : i32
    %554 = tpu.dynamic_rotate %553 by %c64_i32_151 dim 1 : vector<8x128xf32>, i32 -> vector<8x128xf32>
    %555 = arith.mulf %554, %546 : vector<8x128xf32>
    %556 = arith.addf %547, %555 : vector<8x128xf32>
    %557 = math.tanh %556 : vector<8x128xf32>
    %c64_i32_152 = arith.constant 64 : i32
    %558 = tpu.dynamic_rotate %557 by %c64_i32_152 dim 1 : vector<8x128xf32>, i32 -> vector<8x128xf32>
    %c96_i32_153 = arith.constant 96 : i32
    %559 = tpu.dynamic_rotate %553 by %c96_i32_153 dim 1 : vector<8x128xf32>, i32 -> vector<8x128xf32>
    %cst_154 = arith.constant 1.000000e+00 : f32
    %560 = vector.broadcast %cst_154 : f32 to vector<8x128xf32>
    %561 = arith.subf %560, %559 : vector<8x128xf32>
    %562 = arith.mulf %561, %558 : vector<8x128xf32>
    %563 = arith.mulf %559, %542 : vector<8x128xf32>
    %564 = arith.addf %562, %563 : vector<8x128xf32>
    %565 = tpu.concatenate %410, %432, %454, %476, %498, %520, %542, %564 in 0 : vector<8x128xf32>, vector<8x128xf32>, vector<8x128xf32>, vector<8x128xf32>, vector<8x128xf32>, vector<8x128xf32>, vector<8x128xf32>, vector<8x128xf32> -> vector<64x128xf32>
    %c0_155 = arith.constant 0 : index
    %c0_156 = arith.constant 0 : index
    %c0_157 = arith.constant 0 : index
    %566 = vector.load %arg4[%c0_155, %c0_156, %c0_157] : memref<2x8x128xf32, #tpu.memory_space<vmem>>, vector<1x8x128xf32>
    %567 = vector.shape_cast %566 : vector<1x8x128xf32> to vector<8x128xf32>
    %568 = vector.shape_cast %564 : vector<8x128xf32> to vector<1x8x128xf32>
    tpu.vector_store %arg4[%c0_155, %c0_156, %c0_157], %568 {strides = array<i32>} : memref<2x8x128xf32, #tpu.memory_space<vmem>>, vector<1x8x128xf32>,
    %c768 = arith.constant 768 : index
    %c0_158 = arith.constant 0 : index
    %569 = vector.load %arg1[%c768, %c0_158] : memref<1152x128xbf16, #tpu.memory_space<vmem>>, vector<128x128xbf16>
    %c896 = arith.constant 896 : index
    %c0_159 = arith.constant 0 : index
    %570 = vector.load %arg1[%c896, %c0_159] : memref<1152x128xbf16, #tpu.memory_space<vmem>>, vector<128x128xbf16>
    %571 = vector.extract_strided_slice %0 {offsets = [5, 0], sizes = [1, 128], strides = [1, 1]} : vector<8x128xf32> to vector<1x128xf32>
    %572 = vector.extract_strided_slice %0 {offsets = [6, 0], sizes = [1, 128], strides = [1, 1]} : vector<8x128xf32> to vector<1x128xf32>
    %573 = arith.truncf %565 : vector<64x128xf32> to vector<64x128xbf16>
    %cst_160 = arith.constant dense<0.000000e+00> : vector<64x128xf32>
    %574 = tpu.matmul %573, %569, %cst_160 {dimension_numbers = #tpu.dot_dimension_numbers<[1], [0], [0], [1], [0, 0, 1, 1], [], []>} : vector<64x128xbf16>, vector<128x128xbf16>, vector<64x128xf32> -> vector<64x128xf32>
    %575 = vector.broadcast %571 : vector<1x128xf32> to vector<64x128xf32>
    %576 = arith.addf %574, %575 : vector<64x128xf32>
    %577 = arith.truncf %375 : vector<8x128xf32> to vector<8x128xbf16>
    %cst_161 = arith.constant dense<0.000000e+00> : vector<8x128xf32>
    %578 = tpu.matmul %577, %570, %cst_161 {dimension_numbers = #tpu.dot_dimension_numbers<[1], [0], [0], [1], [0, 0, 1, 1], [], []>} : vector<8x128xbf16>, vector<128x128xbf16>, vector<8x128xf32> -> vector<8x128xf32>
    %579 = vector.broadcast %572 : vector<1x128xf32> to vector<8x128xf32>
    %580 = arith.addf %578, %579 : vector<8x128xf32>
    %581 = vector.extract_strided_slice %576 {offsets = [0, 0], sizes = [8, 128], strides = [1, 1]} : vector<64x128xf32> to vector<8x128xf32>
    %582 = arith.addf %581, %580 : vector<8x128xf32>
    %583 = arith.negf %582 : vector<8x128xf32>
    %584 = math.exp %583 : vector<8x128xf32>
    %cst_162 = arith.constant 1.000000e+00 : f32
    %585 = vector.broadcast %cst_162 : f32 to vector<8x128xf32>
    %586 = arith.addf %585, %584 : vector<8x128xf32>
    %587 = arith.divf %585, %586 : vector<8x128xf32>
    %c64_i32_163 = arith.constant 64 : i32
    %588 = tpu.dynamic_rotate %587 by %c64_i32_163 dim 1 : vector<8x128xf32>, i32 -> vector<8x128xf32>
    %589 = arith.mulf %588, %580 : vector<8x128xf32>
    %590 = arith.addf %581, %589 : vector<8x128xf32>
    %591 = math.tanh %590 : vector<8x128xf32>
    %c64_i32_164 = arith.constant 64 : i32
    %592 = tpu.dynamic_rotate %591 by %c64_i32_164 dim 1 : vector<8x128xf32>, i32 -> vector<8x128xf32>
    %c96_i32_165 = arith.constant 96 : i32
    %593 = tpu.dynamic_rotate %587 by %c96_i32_165 dim 1 : vector<8x128xf32>, i32 -> vector<8x128xf32>
    %cst_166 = arith.constant 1.000000e+00 : f32
    %594 = vector.broadcast %cst_166 : f32 to vector<8x128xf32>
    %595 = arith.subf %594, %593 : vector<8x128xf32>
    %596 = arith.mulf %595, %592 : vector<8x128xf32>
    %597 = arith.mulf %593, %375 : vector<8x128xf32>
    %598 = arith.addf %596, %597 : vector<8x128xf32>
    %599 = arith.truncf %598 : vector<8x128xf32> to vector<8x128xbf16>
    %cst_167 = arith.constant dense<0.000000e+00> : vector<8x128xf32>
    %600 = tpu.matmul %599, %570, %cst_167 {dimension_numbers = #tpu.dot_dimension_numbers<[1], [0], [0], [1], [0, 0, 1, 1], [], []>} : vector<8x128xbf16>, vector<128x128xbf16>, vector<8x128xf32> -> vector<8x128xf32>
    %601 = vector.broadcast %572 : vector<1x128xf32> to vector<8x128xf32>
    %602 = arith.addf %600, %601 : vector<8x128xf32>
    %603 = vector.extract_strided_slice %576 {offsets = [8, 0], sizes = [8, 128], strides = [1, 1]} : vector<64x128xf32> to vector<8x128xf32>
    %604 = arith.addf %603, %602 : vector<8x128xf32>
    %605 = arith.negf %604 : vector<8x128xf32>
    %606 = math.exp %605 : vector<8x128xf32>
    %cst_168 = arith.constant 1.000000e+00 : f32
    %607 = vector.broadcast %cst_168 : f32 to vector<8x128xf32>
    %608 = arith.addf %607, %606 : vector<8x128xf32>
    %609 = arith.divf %607, %608 : vector<8x128xf32>
    %c64_i32_169 = arith.constant 64 : i32
    %610 = tpu.dynamic_rotate %609 by %c64_i32_169 dim 1 : vector<8x128xf32>, i32 -> vector<8x128xf32>
    %611 = arith.mulf %610, %602 : vector<8x128xf32>
    %612 = arith.addf %603, %611 : vector<8x128xf32>
    %613 = math.tanh %612 : vector<8x128xf32>
    %c64_i32_170 = arith.constant 64 : i32
    %614 = tpu.dynamic_rotate %613 by %c64_i32_170 dim 1 : vector<8x128xf32>, i32 -> vector<8x128xf32>
    %c96_i32_171 = arith.constant 96 : i32
    %615 = tpu.dynamic_rotate %609 by %c96_i32_171 dim 1 : vector<8x128xf32>, i32 -> vector<8x128xf32>
    %cst_172 = arith.constant 1.000000e+00 : f32
    %616 = vector.broadcast %cst_172 : f32 to vector<8x128xf32>
    %617 = arith.subf %616, %615 : vector<8x128xf32>
    %618 = arith.mulf %617, %614 : vector<8x128xf32>
    %619 = arith.mulf %615, %598 : vector<8x128xf32>
    %620 = arith.addf %618, %619 : vector<8x128xf32>
    %621 = arith.truncf %620 : vector<8x128xf32> to vector<8x128xbf16>
    %cst_173 = arith.constant dense<0.000000e+00> : vector<8x128xf32>
    %622 = tpu.matmul %621, %570, %cst_173 {dimension_numbers = #tpu.dot_dimension_numbers<[1], [0], [0], [1], [0, 0, 1, 1], [], []>} : vector<8x128xbf16>, vector<128x128xbf16>, vector<8x128xf32> -> vector<8x128xf32>
    %623 = vector.broadcast %572 : vector<1x128xf32> to vector<8x128xf32>
    %624 = arith.addf %622, %623 : vector<8x128xf32>
    %625 = vector.extract_strided_slice %576 {offsets = [16, 0], sizes = [8, 128], strides = [1, 1]} : vector<64x128xf32> to vector<8x128xf32>
    %626 = arith.addf %625, %624 : vector<8x128xf32>
    %627 = arith.negf %626 : vector<8x128xf32>
    %628 = math.exp %627 : vector<8x128xf32>
    %cst_174 = arith.constant 1.000000e+00 : f32
    %629 = vector.broadcast %cst_174 : f32 to vector<8x128xf32>
    %630 = arith.addf %629, %628 : vector<8x128xf32>
    %631 = arith.divf %629, %630 : vector<8x128xf32>
    %c64_i32_175 = arith.constant 64 : i32
    %632 = tpu.dynamic_rotate %631 by %c64_i32_175 dim 1 : vector<8x128xf32>, i32 -> vector<8x128xf32>
    %633 = arith.mulf %632, %624 : vector<8x128xf32>
    %634 = arith.addf %625, %633 : vector<8x128xf32>
    %635 = math.tanh %634 : vector<8x128xf32>
    %c64_i32_176 = arith.constant 64 : i32
    %636 = tpu.dynamic_rotate %635 by %c64_i32_176 dim 1 : vector<8x128xf32>, i32 -> vector<8x128xf32>
    %c96_i32_177 = arith.constant 96 : i32
    %637 = tpu.dynamic_rotate %631 by %c96_i32_177 dim 1 : vector<8x128xf32>, i32 -> vector<8x128xf32>
    %cst_178 = arith.constant 1.000000e+00 : f32
    %638 = vector.broadcast %cst_178 : f32 to vector<8x128xf32>
    %639 = arith.subf %638, %637 : vector<8x128xf32>
    %640 = arith.mulf %639, %636 : vector<8x128xf32>
    %641 = arith.mulf %637, %620 : vector<8x128xf32>
    %642 = arith.addf %640, %641 : vector<8x128xf32>
    %643 = arith.truncf %642 : vector<8x128xf32> to vector<8x128xbf16>
    %cst_179 = arith.constant dense<0.000000e+00> : vector<8x128xf32>
    %644 = tpu.matmul %643, %570, %cst_179 {dimension_numbers = #tpu.dot_dimension_numbers<[1], [0], [0], [1], [0, 0, 1, 1], [], []>} : vector<8x128xbf16>, vector<128x128xbf16>, vector<8x128xf32> -> vector<8x128xf32>
    %645 = vector.broadcast %572 : vector<1x128xf32> to vector<8x128xf32>
    %646 = arith.addf %644, %645 : vector<8x128xf32>
    %647 = vector.extract_strided_slice %576 {offsets = [24, 0], sizes = [8, 128], strides = [1, 1]} : vector<64x128xf32> to vector<8x128xf32>
    %648 = arith.addf %647, %646 : vector<8x128xf32>
    %649 = arith.negf %648 : vector<8x128xf32>
    %650 = math.exp %649 : vector<8x128xf32>
    %cst_180 = arith.constant 1.000000e+00 : f32
    %651 = vector.broadcast %cst_180 : f32 to vector<8x128xf32>
    %652 = arith.addf %651, %650 : vector<8x128xf32>
    %653 = arith.divf %651, %652 : vector<8x128xf32>
    %c64_i32_181 = arith.constant 64 : i32
    %654 = tpu.dynamic_rotate %653 by %c64_i32_181 dim 1 : vector<8x128xf32>, i32 -> vector<8x128xf32>
    %655 = arith.mulf %654, %646 : vector<8x128xf32>
    %656 = arith.addf %647, %655 : vector<8x128xf32>
    %657 = math.tanh %656 : vector<8x128xf32>
    %c64_i32_182 = arith.constant 64 : i32
    %658 = tpu.dynamic_rotate %657 by %c64_i32_182 dim 1 : vector<8x128xf32>, i32 -> vector<8x128xf32>
    %c96_i32_183 = arith.constant 96 : i32
    %659 = tpu.dynamic_rotate %653 by %c96_i32_183 dim 1 : vector<8x128xf32>, i32 -> vector<8x128xf32>
    %cst_184 = arith.constant 1.000000e+00 : f32
    %660 = vector.broadcast %cst_184 : f32 to vector<8x128xf32>
    %661 = arith.subf %660, %659 : vector<8x128xf32>
    %662 = arith.mulf %661, %658 : vector<8x128xf32>
    %663 = arith.mulf %659, %642 : vector<8x128xf32>
    %664 = arith.addf %662, %663 : vector<8x128xf32>
    %665 = arith.truncf %664 : vector<8x128xf32> to vector<8x128xbf16>
    %cst_185 = arith.constant dense<0.000000e+00> : vector<8x128xf32>
    %666 = tpu.matmul %665, %570, %cst_185 {dimension_numbers = #tpu.dot_dimension_numbers<[1], [0], [0], [1], [0, 0, 1, 1], [], []>} : vector<8x128xbf16>, vector<128x128xbf16>, vector<8x128xf32> -> vector<8x128xf32>
    %667 = vector.broadcast %572 : vector<1x128xf32> to vector<8x128xf32>
    %668 = arith.addf %666, %667 : vector<8x128xf32>
    %669 = vector.extract_strided_slice %576 {offsets = [32, 0], sizes = [8, 128], strides = [1, 1]} : vector<64x128xf32> to vector<8x128xf32>
    %670 = arith.addf %669, %668 : vector<8x128xf32>
    %671 = arith.negf %670 : vector<8x128xf32>
    %672 = math.exp %671 : vector<8x128xf32>
    %cst_186 = arith.constant 1.000000e+00 : f32
    %673 = vector.broadcast %cst_186 : f32 to vector<8x128xf32>
    %674 = arith.addf %673, %672 : vector<8x128xf32>
    %675 = arith.divf %673, %674 : vector<8x128xf32>
    %c64_i32_187 = arith.constant 64 : i32
    %676 = tpu.dynamic_rotate %675 by %c64_i32_187 dim 1 : vector<8x128xf32>, i32 -> vector<8x128xf32>
    %677 = arith.mulf %676, %668 : vector<8x128xf32>
    %678 = arith.addf %669, %677 : vector<8x128xf32>
    %679 = math.tanh %678 : vector<8x128xf32>
    %c64_i32_188 = arith.constant 64 : i32
    %680 = tpu.dynamic_rotate %679 by %c64_i32_188 dim 1 : vector<8x128xf32>, i32 -> vector<8x128xf32>
    %c96_i32_189 = arith.constant 96 : i32
    %681 = tpu.dynamic_rotate %675 by %c96_i32_189 dim 1 : vector<8x128xf32>, i32 -> vector<8x128xf32>
    %cst_190 = arith.constant 1.000000e+00 : f32
    %682 = vector.broadcast %cst_190 : f32 to vector<8x128xf32>
    %683 = arith.subf %682, %681 : vector<8x128xf32>
    %684 = arith.mulf %683, %680 : vector<8x128xf32>
    %685 = arith.mulf %681, %664 : vector<8x128xf32>
    %686 = arith.addf %684, %685 : vector<8x128xf32>
    %687 = arith.truncf %686 : vector<8x128xf32> to vector<8x128xbf16>
    %cst_191 = arith.constant dense<0.000000e+00> : vector<8x128xf32>
    %688 = tpu.matmul %687, %570, %cst_191 {dimension_numbers = #tpu.dot_dimension_numbers<[1], [0], [0], [1], [0, 0, 1, 1], [], []>} : vector<8x128xbf16>, vector<128x128xbf16>, vector<8x128xf32> -> vector<8x128xf32>
    %689 = vector.broadcast %572 : vector<1x128xf32> to vector<8x128xf32>
    %690 = arith.addf %688, %689 : vector<8x128xf32>
    %691 = vector.extract_strided_slice %576 {offsets = [40, 0], sizes = [8, 128], strides = [1, 1]} : vector<64x128xf32> to vector<8x128xf32>
    %692 = arith.addf %691, %690 : vector<8x128xf32>
    %693 = arith.negf %692 : vector<8x128xf32>
    %694 = math.exp %693 : vector<8x128xf32>
    %cst_192 = arith.constant 1.000000e+00 : f32
    %695 = vector.broadcast %cst_192 : f32 to vector<8x128xf32>
    %696 = arith.addf %695, %694 : vector<8x128xf32>
    %697 = arith.divf %695, %696 : vector<8x128xf32>
    %c64_i32_193 = arith.constant 64 : i32
    %698 = tpu.dynamic_rotate %697 by %c64_i32_193 dim 1 : vector<8x128xf32>, i32 -> vector<8x128xf32>
    %699 = arith.mulf %698, %690 : vector<8x128xf32>
    %700 = arith.addf %691, %699 : vector<8x128xf32>
    %701 = math.tanh %700 : vector<8x128xf32>
    %c64_i32_194 = arith.constant 64 : i32
    %702 = tpu.dynamic_rotate %701 by %c64_i32_194 dim 1 : vector<8x128xf32>, i32 -> vector<8x128xf32>
    %c96_i32_195 = arith.constant 96 : i32
    %703 = tpu.dynamic_rotate %697 by %c96_i32_195 dim 1 : vector<8x128xf32>, i32 -> vector<8x128xf32>
    %cst_196 = arith.constant 1.000000e+00 : f32
    %704 = vector.broadcast %cst_196 : f32 to vector<8x128xf32>
    %705 = arith.subf %704, %703 : vector<8x128xf32>
    %706 = arith.mulf %705, %702 : vector<8x128xf32>
    %707 = arith.mulf %703, %686 : vector<8x128xf32>
    %708 = arith.addf %706, %707 : vector<8x128xf32>
    %709 = arith.truncf %708 : vector<8x128xf32> to vector<8x128xbf16>
    %cst_197 = arith.constant dense<0.000000e+00> : vector<8x128xf32>
    %710 = tpu.matmul %709, %570, %cst_197 {dimension_numbers = #tpu.dot_dimension_numbers<[1], [0], [0], [1], [0, 0, 1, 1], [], []>} : vector<8x128xbf16>, vector<128x128xbf16>, vector<8x128xf32> -> vector<8x128xf32>
    %711 = vector.broadcast %572 : vector<1x128xf32> to vector<8x128xf32>
    %712 = arith.addf %710, %711 : vector<8x128xf32>
    %713 = vector.extract_strided_slice %576 {offsets = [48, 0], sizes = [8, 128], strides = [1, 1]} : vector<64x128xf32> to vector<8x128xf32>
    %714 = arith.addf %713, %712 : vector<8x128xf32>
    %715 = arith.negf %714 : vector<8x128xf32>
    %716 = math.exp %715 : vector<8x128xf32>
    %cst_198 = arith.constant 1.000000e+00 : f32
    %717 = vector.broadcast %cst_198 : f32 to vector<8x128xf32>
    %718 = arith.addf %717, %716 : vector<8x128xf32>
    %719 = arith.divf %717, %718 : vector<8x128xf32>
    %c64_i32_199 = arith.constant 64 : i32
    %720 = tpu.dynamic_rotate %719 by %c64_i32_199 dim 1 : vector<8x128xf32>, i32 -> vector<8x128xf32>
    %721 = arith.mulf %720, %712 : vector<8x128xf32>
    %722 = arith.addf %713, %721 : vector<8x128xf32>
    %723 = math.tanh %722 : vector<8x128xf32>
    %c64_i32_200 = arith.constant 64 : i32
    %724 = tpu.dynamic_rotate %723 by %c64_i32_200 dim 1 : vector<8x128xf32>, i32 -> vector<8x128xf32>
    %c96_i32_201 = arith.constant 96 : i32
    %725 = tpu.dynamic_rotate %719 by %c96_i32_201 dim 1 : vector<8x128xf32>, i32 -> vector<8x128xf32>
    %cst_202 = arith.constant 1.000000e+00 : f32
    %726 = vector.broadcast %cst_202 : f32 to vector<8x128xf32>
    %727 = arith.subf %726, %725 : vector<8x128xf32>
    %728 = arith.mulf %727, %724 : vector<8x128xf32>
    %729 = arith.mulf %725, %708 : vector<8x128xf32>
    %730 = arith.addf %728, %729 : vector<8x128xf32>
    %731 = arith.truncf %730 : vector<8x128xf32> to vector<8x128xbf16>
    %cst_203 = arith.constant dense<0.000000e+00> : vector<8x128xf32>
    %732 = tpu.matmul %731, %570, %cst_203 {dimension_numbers = #tpu.dot_dimension_numbers<[1], [0], [0], [1], [0, 0, 1, 1], [], []>} : vector<8x128xbf16>, vector<128x128xbf16>, vector<8x128xf32> -> vector<8x128xf32>
    %733 = vector.broadcast %572 : vector<1x128xf32> to vector<8x128xf32>
    %734 = arith.addf %732, %733 : vector<8x128xf32>
    %735 = vector.extract_strided_slice %576 {offsets = [56, 0], sizes = [8, 128], strides = [1, 1]} : vector<64x128xf32> to vector<8x128xf32>
    %736 = arith.addf %735, %734 : vector<8x128xf32>
    %737 = arith.negf %736 : vector<8x128xf32>
    %738 = math.exp %737 : vector<8x128xf32>
    %cst_204 = arith.constant 1.000000e+00 : f32
    %739 = vector.broadcast %cst_204 : f32 to vector<8x128xf32>
    %740 = arith.addf %739, %738 : vector<8x128xf32>
    %741 = arith.divf %739, %740 : vector<8x128xf32>
    %c64_i32_205 = arith.constant 64 : i32
    %742 = tpu.dynamic_rotate %741 by %c64_i32_205 dim 1 : vector<8x128xf32>, i32 -> vector<8x128xf32>
    %743 = arith.mulf %742, %734 : vector<8x128xf32>
    %744 = arith.addf %735, %743 : vector<8x128xf32>
    %745 = math.tanh %744 : vector<8x128xf32>
    %c64_i32_206 = arith.constant 64 : i32
    %746 = tpu.dynamic_rotate %745 by %c64_i32_206 dim 1 : vector<8x128xf32>, i32 -> vector<8x128xf32>
    %c96_i32_207 = arith.constant 96 : i32
    %747 = tpu.dynamic_rotate %741 by %c96_i32_207 dim 1 : vector<8x128xf32>, i32 -> vector<8x128xf32>
    %cst_208 = arith.constant 1.000000e+00 : f32
    %748 = vector.broadcast %cst_208 : f32 to vector<8x128xf32>
    %749 = arith.subf %748, %747 : vector<8x128xf32>
    %750 = arith.mulf %749, %746 : vector<8x128xf32>
    %751 = arith.mulf %747, %730 : vector<8x128xf32>
    %752 = arith.addf %750, %751 : vector<8x128xf32>
    %753 = tpu.concatenate %598, %620, %642, %664, %686, %708, %730, %752 in 0 : vector<8x128xf32>, vector<8x128xf32>, vector<8x128xf32>, vector<8x128xf32>, vector<8x128xf32>, vector<8x128xf32>, vector<8x128xf32>, vector<8x128xf32> -> vector<64x128xf32>
    %c1 = arith.constant 1 : index
    %c0_209 = arith.constant 0 : index
    %c0_210 = arith.constant 0 : index
    %754 = vector.load %arg4[%c1, %c0_209, %c0_210] : memref<2x8x128xf32, #tpu.memory_space<vmem>>, vector<1x8x128xf32>
    %755 = vector.shape_cast %754 : vector<1x8x128xf32> to vector<8x128xf32>
    %756 = vector.shape_cast %752 : vector<8x128xf32> to vector<1x8x128xf32>
    tpu.vector_store %arg4[%c1, %c0_209, %c0_210], %756 {strides = array<i32>} : memref<2x8x128xf32, #tpu.memory_space<vmem>>, vector<1x8x128xf32>,
    %757 = arith.truncf %753 : vector<64x128xf32> to vector<64x128xbf16>
    %c1024 = arith.constant 1024 : index
    %c0_211 = arith.constant 0 : index
    %758 = vector.load %arg1[%c1024, %c0_211] : memref<1152x128xbf16, #tpu.memory_space<vmem>>, vector<128x128xbf16>
    %cst_212 = arith.constant dense<0.000000e+00> : vector<64x128xf32>
    %759 = tpu.matmul %757, %758, %cst_212 {dimension_numbers = #tpu.dot_dimension_numbers<[1], [0], [0], [1], [0, 0, 1, 1], [], []>} : vector<64x128xbf16>, vector<128x128xbf16>, vector<64x128xf32> -> vector<64x128xf32>
    %760 = vector.extract_strided_slice %0 {offsets = [7, 0], sizes = [1, 128], strides = [1, 1]} : vector<8x128xf32> to vector<1x128xf32>
    %761 = vector.broadcast %760 : vector<1x128xf32> to vector<64x128xf32>
    %762 = arith.addf %759, %761 : vector<64x128xf32>
    %763 = vector.shape_cast %762 : vector<64x128xf32> to vector<8x8x128xf32>
    %c0_213 = arith.constant 0 : index
    %c0_214 = arith.constant 0 : index
    %c0_215 = arith.constant 0 : index
    %764 = vector.load %arg3[%c0_213, %c0_214, %c0_215] : memref<8x8x128xf32, #tpu.memory_space<vmem>>, vector<8x8x128xf32>
    tpu.vector_store %arg3[%c0_213, %c0_214, %c0_215], %763 {strides = array<i32>} : memref<8x8x128xf32, #tpu.memory_space<vmem>>, vector<8x8x128xf32>,
    return
  }
}

</mosaic_0001>

<llo_original>
// kernel: encoder_decoder_forward.1
$region0: #{encoder_decoder_forward.1}
  #allocation0 [shape = 'u32[]', space=smem, size = 0x4, offset = 0x4, fixed_abs, tag = 'smem constant byte address 0x4 - core index']
  #allocation1 [shape = 'u32[144,128]{1,0:T(1,128)}', space=vmem, size = 0x12000, scoped, tag = 'internal scratch']
  %s0 = inlined_call_operand.vmem [shape: s32[128,1], index: 0, kind: input, shape index: {}]
  %s1 = inlined_call_operand.hbm [shape: bf16[1152,128], index: 1, kind: input, shape index: {}]
  %s2 = inlined_call_operand.vmem [shape: f32[8,128], index: 2, kind: input, shape index: {}]
  %s3 = inlined_call_operand.vmem [shape: f32[8,8,128], index: 3, kind: output, shape index: {0}]
  %s4 = inlined_call_operand.vmem [shape: f32[2,8,128], index: 4, kind: output, shape index: {1}]
  %5 = xla_tuple %s3, %s4
  %s6 = sld [smem:[#allocation0]]
  $region34: #{encoder_decoder_forward.1} parent=0
    _
  %s8 = ssub.s32 1, %s6
  %s9 = scalar_select 0, %s8, %s6
  $region1: #{encoder_decoder_forward.1} parent=0
    #allocation2 [shape = 'u8[294912]{0}', space=vmem, size = 0x48000, scoped, tag = 'input window, operand 1, single buffered']
    #allocation3 [shape = 's32[1]{0}', space=sflag, size = 0x4, scoped, tag = 'scoped memory for encoder_decoder_forward.1']
    %10 = vsyncpa [#allocation3], 0
    // Predicated region
    $region2: #{encoder_decoder_forward.1} parent=1 // pred_check
      _
    $region3: #{encoder_decoder_forward.1} parent=1 // pred_check_branch
      %12 = sbr.rel (0) target = $region5
    $region4: #{encoder_decoder_forward.1} parent=1 // pred_region
      _
    $region5: #{encoder_decoder_forward.1} parent=1 // pred_fallthru
      _
    // Predicated region
    $region6: #{encoder_decoder_forward.1} parent=1 // pred_check
      _
    $region7: #{encoder_decoder_forward.1} parent=1 // pred_check_branch
      %14 = sbr.rel (0) target = $region9
    $region8: #{encoder_decoder_forward.1} parent=1 // pred_region
      %s16 = ssub.s32 9216, 9216
      %17 = vsyncadd [#allocation3], %s16
      %s18 = sshll.u32 [#allocation2], 4
      %s19 = int_to_ptr.vmem [resolvable:$true] %s18
      %24 = dma.hbm_to_vmem [thread:$0]  %s1, 9216, %s19, [#allocation3], 64, 64, 4
    $region9: #{encoder_decoder_forward.1} parent=1 // pred_fallthru
      _
    // Predicated region
    $region10: #{encoder_decoder_forward.1} parent=1 // pred_check
      _
    $region11: #{encoder_decoder_forward.1} parent=1 // pred_check_branch
      %26 = sbr.rel (0) target = $region13
    $region12: #{encoder_decoder_forward.1} parent=1 // pred_region
      _
    $region13: #{encoder_decoder_forward.1} parent=1 // pred_fallthru
      _
    // Predicated region
    $region14: #{encoder_decoder_forward.1} parent=1 // pred_check
      _
    $region15: #{encoder_decoder_forward.1} parent=1 // pred_check_branch
      %28 = sbr.rel (0) target = $region17
    $region16: #{encoder_decoder_forward.1} parent=1 // pred_region
      %29 = dma.done [#allocation3], 9216
    $region17: #{encoder_decoder_forward.1} parent=1 // pred_fallthru
      _
    %v31 = vld [vmem:[%s2] sm:$0xff]
    %v32 = vld [vmem:[%s0] sm:$0xff]
    %v33 = vld [vmem:[%s0 + $0x8] sm:$0xff]
    %v34 = vld [vmem:[%s0 + $0x10] sm:$0xff]
    %v35 = vld [vmem:[%s0 + $0x18] sm:$0xff]
    %v36 = vld [vmem:[%s0 + $0x20] sm:$0xff]
    %v37 = vld [vmem:[%s0 + $0x28] sm:$0xff]
    %v38 = vld [vmem:[%s0 + $0x30] sm:$0xff]
    %v39 = vld [vmem:[%s0 + $0x38] sm:$0xff]
    %v40 = vld [vmem:[%s0 + $0x40] sm:$0xff]
    %v41 = vld [vmem:[%s0 + $0x48] sm:$0xff]
    %v42 = vld [vmem:[%s0 + $0x50] sm:$0xff]
    %v43 = vld [vmem:[%s0 + $0x58] sm:$0xff]
    %v44 = vld [vmem:[%s0 + $0x60] sm:$0xff]
    %v45 = vld [vmem:[%s0 + $0x68] sm:$0xff]
    %v46 = vld [vmem:[%s0 + $0x70] sm:$0xff]
    %v47 = vld [vmem:[%s0 + $0x78] sm:$0xff]
    %v48 = vlaneseq
    %v49 = vand.u32 %v48, 127
    %50 = vset.pattern.permute.xlu0 0
    %51 = vperm.xlu0 %50, %v32
    %v52 = vpop.permute.xlu0 %51
    %53 = vset.pattern.permute.xlu0 0
    %54 = vperm.xlu0 %53, %v33
    %v55 = vpop.permute.xlu0 %54
    %56 = vset.pattern.permute.xlu0 0
    %57 = vperm.xlu0 %56, %v34
    %v58 = vpop.permute.xlu0 %57
    %59 = vset.pattern.permute.xlu0 0
    %60 = vperm.xlu0 %59, %v35
    %v61 = vpop.permute.xlu0 %60
    %62 = vset.pattern.permute.xlu0 0
    %63 = vperm.xlu0 %62, %v36
    %v64 = vpop.permute.xlu0 %63
    %65 = vset.pattern.permute.xlu0 0
    %66 = vperm.xlu0 %65, %v37
    %v67 = vpop.permute.xlu0 %66
    %68 = vset.pattern.permute.xlu0 0
    %69 = vperm.xlu0 %68, %v38
    %v70 = vpop.permute.xlu0 %69
    %71 = vset.pattern.permute.xlu0 0
    %72 = vperm.xlu0 %71, %v39
    %v73 = vpop.permute.xlu0 %72
    %74 = vset.pattern.permute.xlu0 0
    %75 = vperm.xlu0 %74, %v40
    %v76 = vpop.permute.xlu0 %75
    %77 = vset.pattern.permute.xlu0 0
    %78 = vperm.xlu0 %77, %v41
    %v79 = vpop.permute.xlu0 %78
    %80 = vset.pattern.permute.xlu0 0
    %81 = vperm.xlu0 %80, %v42
    %v82 = vpop.permute.xlu0 %81
    %83 = vset.pattern.permute.xlu0 0
    %84 = vperm.xlu0 %83, %v43
    %v85 = vpop.permute.xlu0 %84
    %86 = vset.pattern.permute.xlu0 0
    %87 = vperm.xlu0 %86, %v44
    %v88 = vpop.permute.xlu0 %87
    %89 = vset.pattern.permute.xlu0 0
    %90 = vperm.xlu0 %89, %v45
    %v91 = vpop.permute.xlu0 %90
    %92 = vset.pattern.permute.xlu0 0
    %93 = vperm.xlu0 %92, %v46
    %v94 = vpop.permute.xlu0 %93
    %95 = vset.pattern.permute.xlu0 0
    %96 = vperm.xlu0 %95, %v47
    %v97 = vpop.permute.xlu0 %96
    %vm98 = vcmp.eq.s32.totalorder %v49, %v52
    %vm99 = vcmp.eq.s32.totalorder %v49, %v55
    %vm100 = vcmp.eq.s32.totalorder %v49, %v58
    %vm101 = vcmp.eq.s32.totalorder %v49, %v61
    %vm102 = vcmp.eq.s32.totalorder %v49, %v64
    %vm103 = vcmp.eq.s32.totalorder %v49, %v67
    %vm104 = vcmp.eq.s32.totalorder %v49, %v70
    %vm105 = vcmp.eq.s32.totalorder %v49, %v73
    %vm106 = vcmp.eq.s32.totalorder %v49, %v76
    %vm107 = vcmp.eq.s32.totalorder %v49, %v79
    %vm108 = vcmp.eq.s32.totalorder %v49, %v82
    %vm109 = vcmp.eq.s32.totalorder %v49, %v85
    %vm110 = vcmp.eq.s32.totalorder %v49, %v88
    %vm111 = vcmp.eq.s32.totalorder %v49, %v91
    %vm112 = vcmp.eq.s32.totalorder %v49, %v94
    %vm113 = vcmp.eq.s32.totalorder %v49, %v97
    %v114 = vsel %vm98, 1, 0
    %v115 = vsel %vm99, 1, 0
    %v116 = vsel %vm100, 1, 0
    %v117 = vsel %vm101, 1, 0
    %v118 = vsel %vm102, 1, 0
    %v119 = vsel %vm103, 1, 0
    %v120 = vsel %vm104, 1, 0
    %v121 = vsel %vm105, 1, 0
    %v122 = vsel %vm106, 1, 0
    %v123 = vsel %vm107, 1, 0
    %v124 = vsel %vm108, 1, 0
    %v125 = vsel %vm109, 1, 0
    %v126 = vsel %vm110, 1, 0
    %v127 = vsel %vm111, 1, 0
    %v128 = vsel %vm112, 1, 0
    %v129 = vsel %vm113, 1, 0
    %v130 = vcvt.s32.f32 %v114
    %v131 = vcvt.s32.f32 %v115
    %v132 = vcvt.s32.f32 %v116
    %v133 = vcvt.s32.f32 %v117
    %v134 = vcvt.s32.f32 %v118
    %v135 = vcvt.s32.f32 %v119
    %v136 = vcvt.s32.f32 %v120
    %v137 = vcvt.s32.f32 %v121
    %v138 = vcvt.s32.f32 %v122
    %v139 = vcvt.s32.f32 %v123
    %v140 = vcvt.s32.f32 %v124
    %v141 = vcvt.s32.f32 %v125
    %v142 = vcvt.s32.f32 %v126
    %v143 = vcvt.s32.f32 %v127
    %v144 = vcvt.s32.f32 %v128
    %v145 = vcvt.s32.f32 %v129
    %v146 = vpack.c.bf16 %v131, %v130
    %v147 = vpack.c.bf16 %v133, %v132
    %v148 = vpack.c.bf16 %v135, %v134
    %v149 = vpack.c.bf16 %v137, %v136
    %v150 = vpack.c.bf16 %v139, %v138
    %v151 = vpack.c.bf16 %v141, %v140
    %v152 = vpack.c.bf16 %v143, %v142
    %v153 = vpack.c.bf16 %v145, %v144
    %v154 = vld [vmem:[#allocation2] sm:$0xf]
    %v155 = vld [vmem:[#allocation2 + $0x4] sm:$0xf]
    %v156 = vld [vmem:[#allocation2 + $0x8] sm:$0xf]
    %v157 = vld [vmem:[#allocation2 + $0xc] sm:$0xf]
    %v158 = vld [vmem:[#allocation2 + $0x10] sm:$0xf]
    %v159 = vld [vmem:[#allocation2 + $0x14] sm:$0xf]
    %v160 = vld [vmem:[#allocation2 + $0x18] sm:$0xf]
    %v161 = vld [vmem:[#allocation2 + $0x1c] sm:$0xf]
    %v162 = vld [vmem:[#allocation2 + $0x20] sm:$0xf]
    %v163 = vld [vmem:[#allocation2 + $0x24] sm:$0xf]
    %v164 = vld [vmem:[#allocation2 + $0x28] sm:$0xf]
    %v165 = vld [vmem:[#allocation2 + $0x2c] sm:$0xf]
    %v166 = vld [vmem:[#allocation2 + $0x30] sm:$0xf]
    %v167 = vld [vmem:[#allocation2 + $0x34] sm:$0xf]
    %v168 = vld [vmem:[#allocation2 + $0x38] sm:$0xf]
    %v169 = vld [vmem:[#allocation2 + $0x3c] sm:$0xf]
    %v186 = vunpack.c.l.b16 %v154
    %v187 = vunpack.c.l.b16 %v155
    %v188 = vunpack.c.l.b16 %v156
    %v189 = vunpack.c.l.b16 %v157
    %v190 = vunpack.c.l.b16 %v158
    %v191 = vunpack.c.l.b16 %v159
    %v192 = vunpack.c.l.b16 %v160
    %v193 = vunpack.c.l.b16 %v161
    %v194 = vunpack.c.l.b16 %v162
    %v195 = vunpack.c.l.b16 %v163
    %v196 = vunpack.c.l.b16 %v164
    %v197 = vunpack.c.l.b16 %v165
    %v198 = vunpack.c.l.b16 %v166
    %v199 = vunpack.c.l.b16 %v167
    %v200 = vunpack.c.l.b16 %v168
    %v201 = vunpack.c.l.b16 %v169
    %v202 = vpack.c.b16 %v187, %v186
    %v203 = vpack.c.b16 %v189, %v188
    %v204 = vpack.c.b16 %v191, %v190
    %v205 = vpack.c.b16 %v193, %v192
    %v206 = vpack.c.b16 %v195, %v194
    %v207 = vpack.c.b16 %v197, %v196
    %v208 = vpack.c.b16 %v199, %v198
    %v209 = vpack.c.b16 %v201, %v200
    %218 = vmatprep.subr.bf16.mxu0 0
    %219 = vmatpush1.bf16.msra.mxu0 %v202
    %220 = vmatprep.subr.bf16.mxu0 0
    %221 = vmatpush1.bf16.msra.mxu0 %v203
    %222 = vmatprep.subr.bf16.mxu0 0
    %223 = vmatpush1.bf16.msra.mxu0 %v204
    %224 = vmatprep.subr.bf16.mxu0 0
    %225 = vmatpush1.bf16.msra.mxu0 %v205
    %226 = vmatprep.subr.bf16.mxu0 0
    %227 = vmatpush1.bf16.msra.mxu0 %v206
    %228 = vmatprep.subr.bf16.mxu0 0
    %229 = vmatpush1.bf16.msra.mxu0 %v207
    %230 = vmatprep.subr.bf16.mxu0 0
    %231 = vmatpush1.bf16.msra.mxu0 %v208
    %232 = vmatprep.subr.bf16.mxu0 0
    %233 = vmatpush1.bf16.msra.mxu0 %v209
    %234 = vmatprep.subr.bf16.mxu0 0
    %235 = vmatpush1.bf16.msra.mxu0 0
    %236 = vmatprep.subr.bf16.mxu0 0
    %237 = vmatpush1.bf16.msra.mxu0 0
    %238 = vmatprep.subr.bf16.mxu0 0
    %239 = vmatpush1.bf16.msra.mxu0 0
    %240 = vmatprep.subr.bf16.mxu0 0
    %241 = vmatpush1.bf16.msra.mxu0 0
    %242 = vmatprep.subr.bf16.mxu0 0
    %243 = vmatpush1.bf16.msra.mxu0 0
    %244 = vmatprep.subr.bf16.mxu0 0
    %245 = vmatpush1.bf16.msra.mxu0 0
    %246 = vmatprep.subr.bf16.mxu0 0
    %247 = vmatpush1.bf16.msra.mxu0 0
    %248 = vmatprep.subr.bf16.mxu0 0
    %249 = vmatpush1.bf16.msra.mxu0 0
    %250 = vmatprep.mubr.bf16.mxu0 0
    %251 = vmatmul.mubr.bf16.gmra.mrb[0].mxu0 %v146
    %v252 = vpop.f32.mrb[0].mxu0
    %v253 = vadd.f32 0.0, %v252
    %v254 = vpop.f32.mrb[0].mxu0
    %v255 = vpop.f32.mrb[0].mxu0
    %v256 = vadd.f32 0.0, %v255
    %v257 = vpop.f32.mrb[0].mxu0
    %258 = vmatprep.mubr.bf16.mxu0 0
    %259 = vmatmul.mubr.bf16.gmra.mrb[0].mxu0 %v147
    %v260 = vpop.f32.mrb[0].mxu0
    %v261 = vadd.f32 0.0, %v260
    %v262 = vpop.f32.mrb[0].mxu0
    %v263 = vpop.f32.mrb[0].mxu0
    %v264 = vadd.f32 0.0, %v263
    %v265 = vpop.f32.mrb[0].mxu0
    %266 = vmatprep.mubr.bf16.mxu0 0
    %267 = vmatmul.mubr.bf16.gmra.mrb[0].mxu0 %v148
    %v268 = vpop.f32.mrb[0].mxu0
    %v269 = vadd.f32 0.0, %v268
    %v270 = vpop.f32.mrb[0].mxu0
    %v271 = vpop.f32.mrb[0].mxu0
    %v272 = vadd.f32 0.0, %v271
    %v273 = vpop.f32.mrb[0].mxu0
    %274 = vmatprep.mubr.bf16.mxu0 0
    %275 = vmatmul.mubr.bf16.gmra.mrb[0].mxu0 %v149
    %v276 = vpop.f32.mrb[0].mxu0
    %v277 = vadd.f32 0.0, %v276
    %v278 = vpop.f32.mrb[0].mxu0
    %v279 = vpop.f32.mrb[0].mxu0
    %v280 = vadd.f32 0.0, %v279
    %v281 = vpop.f32.mrb[0].mxu0
    %282 = vmatprep.mubr.bf16.mxu0 0
    %283 = vmatmul.mubr.bf16.gmra.mrb[0].mxu0 %v150
    %v284 = vpop.f32.mrb[0].mxu0
    %v285 = vadd.f32 0.0, %v284
    %v286 = vpop.f32.mrb[0].mxu0
    %v287 = vpop.f32.mrb[0].mxu0
    %v288 = vadd.f32 0.0, %v287
    %v289 = vpop.f32.mrb[0].mxu0
    %290 = vmatprep.mubr.bf16.mxu0 0
    %291 = vmatmul.mubr.bf16.gmra.mrb[0].mxu0 %v151
    %v292 = vpop.f32.mrb[0].mxu0
    %v293 = vadd.f32 0.0, %v292
    %v294 = vpop.f32.mrb[0].mxu0
    %v295 = vpop.f32.mrb[0].mxu0
    %v296 = vadd.f32 0.0, %v295
    %v297 = vpop.f32.mrb[0].mxu0
    %298 = vmatprep.mubr.bf16.mxu0 0
    %299 = vmatmul.mubr.bf16.gmra.mrb[0].mxu0 %v152
    %v300 = vpop.f32.mrb[0].mxu0
    %v301 = vadd.f32 0.0, %v300
    %v302 = vpop.f32.mrb[0].mxu0
    %v303 = vpop.f32.mrb[0].mxu0
    %v304 = vadd.f32 0.0, %v303
    %v305 = vpop.f32.mrb[0].mxu0
    %306 = vmatprep.mubr.bf16.mxu0 0
    %307 = vmatmul.mubr.bf16.gmra.mrb[0].mxu0 %v153
    %v308 = vpop.f32.mrb[0].mxu0
    %v309 = vadd.f32 0.0, %v308
    %v310 = vpop.f32.mrb[0].mxu0
    %v311 = vpop.f32.mrb[0].mxu0
    %v312 = vadd.f32 0.0, %v311
    %v313 = vpop.f32.mrb[0].mxu0
    %314 = vdwg.mxu0
    %v315 = vld [vmem:[#allocation2 + $0x40] sm:$0xf]
    %v316 = vld [vmem:[#allocation2 + $0x44] sm:$0xf]
    %v317 = vld [vmem:[#allocation2 + $0x48] sm:$0xf]
    %v318 = vld [vmem:[#allocation2 + $0x4c] sm:$0xf]
    %v319 = vld [vmem:[#allocation2 + $0x50] sm:$0xf]
    %v320 = vld [vmem:[#allocation2 + $0x54] sm:$0xf]
    %v321 = vld [vmem:[#allocation2 + $0x58] sm:$0xf]
    %v322 = vld [vmem:[#allocation2 + $0x5c] sm:$0xf]
    %v323 = vld [vmem:[#allocation2 + $0x60] sm:$0xf]
    %v324 = vld [vmem:[#allocation2 + $0x64] sm:$0xf]
    %v325 = vld [vmem:[#allocation2 + $0x68] sm:$0xf]
    %v326 = vld [vmem:[#allocation2 + $0x6c] sm:$0xf]
    %v327 = vld [vmem:[#allocation2 + $0x70] sm:$0xf]
    %v328 = vld [vmem:[#allocation2 + $0x74] sm:$0xf]
    %v329 = vld [vmem:[#allocation2 + $0x78] sm:$0xf]
    %v330 = vld [vmem:[#allocation2 + $0x7c] sm:$0xf]
    %v331 = vlaneseq
    %v332 = vshrl.u32 %v331, 7
    %v333 = vsub.s32 0, %v332
    %v334 = vrot.slane %v31, %v333
    %v351 = vunpack.c.l.b16 %v315
    %v352 = vunpack.c.l.b16 %v316
    %v353 = vunpack.c.l.b16 %v317
    %v354 = vunpack.c.l.b16 %v318
    %v355 = vunpack.c.l.b16 %v319
    %v356 = vunpack.c.l.b16 %v320
    %v357 = vunpack.c.l.b16 %v321
    %v358 = vunpack.c.l.b16 %v322
    %v359 = vunpack.c.l.b16 %v323
    %v360 = vunpack.c.l.b16 %v324
    %v361 = vunpack.c.l.b16 %v325
    %v362 = vunpack.c.l.b16 %v326
    %v363 = vunpack.c.l.b16 %v327
    %v364 = vunpack.c.l.b16 %v328
    %v365 = vunpack.c.l.b16 %v329
    %v366 = vunpack.c.l.b16 %v330
    %v367 = vpack.c.b16 %v352, %v351
    %v368 = vpack.c.b16 %v354, %v353
    %v369 = vpack.c.b16 %v356, %v355
    %v370 = vpack.c.b16 %v358, %v357
    %v371 = vpack.c.b16 %v360, %v359
    %v372 = vpack.c.b16 %v362, %v361
    %v373 = vpack.c.b16 %v364, %v363
    %v374 = vpack.c.b16 %v366, %v365
    %383 = vmatprep.subr.bf16.mxu0 0
    %384 = vmatpush1.bf16.msra.mxu0 %v367
    %385 = vmatprep.subr.bf16.mxu0 0
    %386 = vmatpush1.bf16.msra.mxu0 %v368
    %387 = vmatprep.subr.bf16.mxu0 0
    %388 = vmatpush1.bf16.msra.mxu0 %v369
    %389 = vmatprep.subr.bf16.mxu0 0
    %390 = vmatpush1.bf16.msra.mxu0 %v370
    %391 = vmatprep.subr.bf16.mxu0 0
    %392 = vmatpush1.bf16.msra.mxu0 %v371
    %393 = vmatprep.subr.bf16.mxu0 0
    %394 = vmatpush1.bf16.msra.mxu0 %v372
    %395 = vmatprep.subr.bf16.mxu0 0
    %396 = vmatpush1.bf16.msra.mxu0 %v373
    %397 = vmatprep.subr.bf16.mxu0 0
    %398 = vmatpush1.bf16.msra.mxu0 %v374
    %399 = vmatprep.subr.bf16.mxu0 0
    %400 = vmatpush1.bf16.msra.mxu0 0
    %401 = vmatprep.subr.bf16.mxu0 0
    %402 = vmatpush1.bf16.msra.mxu0 0
    %403 = vmatprep.subr.bf16.mxu0 0
    %404 = vmatpush1.bf16.msra.mxu0 0
    %405 = vmatprep.subr.bf16.mxu0 0
    %406 = vmatpush1.bf16.msra.mxu0 0
    %407 = vmatprep.subr.bf16.mxu0 0
    %408 = vmatpush1.bf16.msra.mxu0 0
    %409 = vmatprep.subr.bf16.mxu0 0
    %410 = vmatpush1.bf16.msra.mxu0 0
    %411 = vmatprep.subr.bf16.mxu0 0
    %412 = vmatpush1.bf16.msra.mxu0 0
    %413 = vmatprep.subr.bf16.mxu0 0
    %414 = vmatpush1.bf16.msra.mxu0 0
    %415 = vmatprep.mubr.bf16.mxu0 0
    %416 = vmatmul.mubr.bf16.gmra.mrb[0].mxu0 0
    %v417 = vpop.f32.mrb[0].mxu0
    %v418 = vadd.f32 %v334, %v417
    %v419 = vpop.f32.mrb[0].mxu0
    %v420 = vpop.f32.mrb[0].mxu0
    %v421 = vpop.f32.mrb[0].mxu0
    %422 = vdwg.mxu0
    %v423 = vadd.f32 %v253, %v418
    %v424 = vxor.u32 %v423, 2147483648
    %v425 = vmul.f32 %v424, 1.442695
    %v426 = vpow.pop %v425
    %v427 = vadd.f32 %v426, 1.0
    %v428 = vrcp.pop %v427
    %v429 = vmul.f32 1.0, %v428
    %430 = vrot.lane.b32.xlu0 %v429, 64
    %v431 = vpop.permute.xlu0 %430
    %v432 = vmul.f32 %v431, %v418
    %v433 = vadd.f32 %v253, %v432
    %v434 = vtanh.pop %v433
    %435 = vrot.lane.b32.xlu0 %v434, 64
    %v436 = vpop.permute.xlu0 %435
    %437 = vrot.lane.b32.xlu0 %v429, 96
    %v438 = vpop.permute.xlu0 %437
    %v439 = vsub.f32 1.0, %v438
    %v440 = vmul.f32 %v439, %v436
    %v441 = vmul.f32 %v438, 0.0
    %v442 = vadd.f32 %v440, %v441
    %v443 = vpack.c.bf16 %v442, %v442
    %444 = vmatprep.subr.bf16.mxu0 0
    %445 = vmatpush1.bf16.msra.mxu0 %v367
    %446 = vmatprep.subr.bf16.mxu0 0
    %447 = vmatpush1.bf16.msra.mxu0 %v368
    %448 = vmatprep.subr.bf16.mxu0 0
    %449 = vmatpush1.bf16.msra.mxu0 %v369
    %450 = vmatprep.subr.bf16.mxu0 0
    %451 = vmatpush1.bf16.msra.mxu0 %v370
    %452 = vmatprep.subr.bf16.mxu0 0
    %453 = vmatpush1.bf16.msra.mxu0 %v371
    %454 = vmatprep.subr.bf16.mxu0 0
    %455 = vmatpush1.bf16.msra.mxu0 %v372
    %456 = vmatprep.subr.bf16.mxu0 0
    %457 = vmatpush1.bf16.msra.mxu0 %v373
    %458 = vmatprep.subr.bf16.mxu0 0
    %459 = vmatpush1.bf16.msra.mxu0 %v374
    %460 = vmatprep.subr.bf16.mxu0 0
    %461 = vmatpush1.bf16.msra.mxu0 0
    %462 = vmatprep.subr.bf16.mxu0 0
    %463 = vmatpush1.bf16.msra.mxu0 0
    %464 = vmatprep.subr.bf16.mxu0 0
    %465 = vmatpush1.bf16.msra.mxu0 0
    %466 = vmatprep.subr.bf16.mxu0 0
    %467 = vmatpush1.bf16.msra.mxu0 0
    %468 = vmatprep.subr.bf16.mxu0 0
    %469 = vmatpush1.bf16.msra.mxu0 0
    %470 = vmatprep.subr.bf16.mxu0 0
    %471 = vmatpush1.bf16.msra.mxu0 0
    %472 = vmatprep.subr.bf16.mxu0 0
    %473 = vmatpush1.bf16.msra.mxu0 0
    %474 = vmatprep.subr.bf16.mxu0 0
    %475 = vmatpush1.bf16.msra.mxu0 0
    %476 = vmatprep.mubr.bf16.mxu0 0
    %477 = vmatmul.mubr.bf16.gmra.mrb[0].mxu0 %v443
    %v478 = vpop.f32.mrb[0].mxu0
    %v479 = vadd.f32 %v334, %v478
    %v480 = vpop.f32.mrb[0].mxu0
    %v481 = vpop.f32.mrb[0].mxu0
    %v482 = vpop.f32.mrb[0].mxu0
    %483 = vdwg.mxu0
    %v484 = vadd.f32 %v256, %v479
    %v485 = vxor.u32 %v484, 2147483648
    %v486 = vmul.f32 %v485, 1.442695
    %v487 = vpow.pop %v486
    %v488 = vadd.f32 %v487, 1.0
    %v489 = vrcp.pop %v488
    %v490 = vmul.f32 1.0, %v489
    %491 = vrot.lane.b32.xlu0 %v490, 64
    %v492 = vpop.permute.xlu0 %491
    %v493 = vmul.f32 %v492, %v479
    %v494 = vadd.f32 %v256, %v493
    %v495 = vtanh.pop %v494
    %496 = vrot.lane.b32.xlu0 %v495, 64
    %v497 = vpop.permute.xlu0 %496
    %498 = vrot.lane.b32.xlu0 %v490, 96
    %v499 = vpop.permute.xlu0 %498
    %v500 = vsub.f32 1.0, %v499
    %v501 = vmul.f32 %v500, %v497
    %v502 = vmul.f32 %v499, %v442
    %v503 = vadd.f32 %v501, %v502
    %v504 = vpack.c.bf16 %v503, %v503
    %505 = vmatprep.subr.bf16.mxu0 0
    %506 = vmatpush1.bf16.msra.mxu0 %v367
    %507 = vmatprep.subr.bf16.mxu0 0
    %508 = vmatpush1.bf16.msra.mxu0 %v368
    %509 = vmatprep.subr.bf16.mxu0 0
    %510 = vmatpush1.bf16.msra.mxu0 %v369
    %511 = vmatprep.subr.bf16.mxu0 0
    %512 = vmatpush1.bf16.msra.mxu0 %v370
    %513 = vmatprep.subr.bf16.mxu0 0
    %514 = vmatpush1.bf16.msra.mxu0 %v371
    %515 = vmatprep.subr.bf16.mxu0 0
    %516 = vmatpush1.bf16.msra.mxu0 %v372
    %517 = vmatprep.subr.bf16.mxu0 0
    %518 = vmatpush1.bf16.msra.mxu0 %v373
    %519 = vmatprep.subr.bf16.mxu0 0
    %520 = vmatpush1.bf16.msra.mxu0 %v374
    %521 = vmatprep.subr.bf16.mxu0 0
    %522 = vmatpush1.bf16.msra.mxu0 0
    %523 = vmatprep.subr.bf16.mxu0 0
    %524 = vmatpush1.bf16.msra.mxu0 0
    %525 = vmatprep.subr.bf16.mxu0 0
    %526 = vmatpush1.bf16.msra.mxu0 0
    %527 = vmatprep.subr.bf16.mxu0 0
    %528 = vmatpush1.bf16.msra.mxu0 0
    %529 = vmatprep.subr.bf16.mxu0 0
    %530 = vmatpush1.bf16.msra.mxu0 0
    %531 = vmatprep.subr.bf16.mxu0 0
    %532 = vmatpush1.bf16.msra.mxu0 0
    %533 = vmatprep.subr.bf16.mxu0 0
    %534 = vmatpush1.bf16.msra.mxu0 0
    %535 = vmatprep.subr.bf16.mxu0 0
    %536 = vmatpush1.bf16.msra.mxu0 0
    %537 = vmatprep.mubr.bf16.mxu0 0
    %538 = vmatmul.mubr.bf16.gmra.mrb[0].mxu0 %v504
    %v539 = vpop.f32.mrb[0].mxu0
    %v540 = vadd.f32 %v334, %v539
    %v541 = vpop.f32.mrb[0].mxu0
    %v542 = vpop.f32.mrb[0].mxu0
    %v543 = vpop.f32.mrb[0].mxu0
    %544 = vdwg.mxu0
    %v545 = vadd.f32 %v261, %v540
    %v546 = vxor.u32 %v545, 2147483648
    %v547 = vmul.f32 %v546, 1.442695
    %v548 = vpow.pop %v547
    %v549 = vadd.f32 %v548, 1.0
    %v550 = vrcp.pop %v549
    %v551 = vmul.f32 1.0, %v550
    %552 = vrot.lane.b32.xlu0 %v551, 64
    %v553 = vpop.permute.xlu0 %552
    %v554 = vmul.f32 %v553, %v540
    %v555 = vadd.f32 %v261, %v554
    %v556 = vtanh.pop %v555
    %557 = vrot.lane.b32.xlu0 %v556, 64
    %v558 = vpop.permute.xlu0 %557
    %559 = vrot.lane.b32.xlu0 %v551, 96
    %v560 = vpop.permute.xlu0 %559
    %v561 = vsub.f32 1.0, %v560
    %v562 = vmul.f32 %v561, %v558
    %v563 = vmul.f32 %v560, %v503
    %v564 = vadd.f32 %v562, %v563
    %v565 = vpack.c.bf16 %v564, %v564
    %566 = vmatprep.subr.bf16.mxu0 0
    %567 = vmatpush1.bf16.msra.mxu0 %v367
    %568 = vmatprep.subr.bf16.mxu0 0
    %569 = vmatpush1.bf16.msra.mxu0 %v368
    %570 = vmatprep.subr.bf16.mxu0 0
    %571 = vmatpush1.bf16.msra.mxu0 %v369
    %572 = vmatprep.subr.bf16.mxu0 0
    %573 = vmatpush1.bf16.msra.mxu0 %v370
    %574 = vmatprep.subr.bf16.mxu0 0
    %575 = vmatpush1.bf16.msra.mxu0 %v371
    %576 = vmatprep.subr.bf16.mxu0 0
    %577 = vmatpush1.bf16.msra.mxu0 %v372
    %578 = vmatprep.subr.bf16.mxu0 0
    %579 = vmatpush1.bf16.msra.mxu0 %v373
    %580 = vmatprep.subr.bf16.mxu0 0
    %581 = vmatpush1.bf16.msra.mxu0 %v374
    %582 = vmatprep.subr.bf16.mxu0 0
    %583 = vmatpush1.bf16.msra.mxu0 0
    %584 = vmatprep.subr.bf16.mxu0 0
    %585 = vmatpush1.bf16.msra.mxu0 0
    %586 = vmatprep.subr.bf16.mxu0 0
    %587 = vmatpush1.bf16.msra.mxu0 0
    %588 = vmatprep.subr.bf16.mxu0 0
    %589 = vmatpush1.bf16.msra.mxu0 0
    %590 = vmatprep.subr.bf16.mxu0 0
    %591 = vmatpush1.bf16.msra.mxu0 0
    %592 = vmatprep.subr.bf16.mxu0 0
    %593 = vmatpush1.bf16.msra.mxu0 0
    %594 = vmatprep.subr.bf16.mxu0 0
    %595 = vmatpush1.bf16.msra.mxu0 0
    %596 = vmatprep.subr.bf16.mxu0 0
    %597 = vmatpush1.bf16.msra.mxu0 0
    %598 = vmatprep.mubr.bf16.mxu0 0
    %599 = vmatmul.mubr.bf16.gmra.mrb[0].mxu0 %v565
    %v600 = vpop.f32.mrb[0].mxu0
    %v601 = vadd.f32 %v334, %v600
    %v602 = vpop.f32.mrb[0].mxu0
    %v603 = vpop.f32.mrb[0].mxu0
    %v604 = vpop.f32.mrb[0].mxu0
    %605 = vdwg.mxu0
    %v606 = vadd.f32 %v264, %v601
    %v607 = vxor.u32 %v606, 2147483648
    %v608 = vmul.f32 %v607, 1.442695
    %v609 = vpow.pop %v608
    %v610 = vadd.f32 %v609, 1.0
    %v611 = vrcp.pop %v610
    %v612 = vmul.f32 1.0, %v611
    %613 = vrot.lane.b32.xlu0 %v612, 64
    %v614 = vpop.permute.xlu0 %613
    %v615 = vmul.f32 %v614, %v601
    %v616 = vadd.f32 %v264, %v615
    %v617 = vtanh.pop %v616
    %618 = vrot.lane.b32.xlu0 %v617, 64
    %v619 = vpop.permute.xlu0 %618
    %620 = vrot.lane.b32.xlu0 %v612, 96
    %v621 = vpop.permute.xlu0 %620
    %v622 = vsub.f32 1.0, %v621
    %v623 = vmul.f32 %v622, %v619
    %v624 = vmul.f32 %v621, %v564
    %v625 = vadd.f32 %v623, %v624
    %v626 = vpack.c.bf16 %v625, %v625
    %627 = vmatprep.subr.bf16.mxu0 0
    %628 = vmatpush1.bf16.msra.mxu0 %v367
    %629 = vmatprep.subr.bf16.mxu0 0
    %630 = vmatpush1.bf16.msra.mxu0 %v368
    %631 = vmatprep.subr.bf16.mxu0 0
    %632 = vmatpush1.bf16.msra.mxu0 %v369
    %633 = vmatprep.subr.bf16.mxu0 0
    %634 = vmatpush1.bf16.msra.mxu0 %v370
    %635 = vmatprep.subr.bf16.mxu0 0
    %636 = vmatpush1.bf16.msra.mxu0 %v371
    %637 = vmatprep.subr.bf16.mxu0 0
    %638 = vmatpush1.bf16.msra.mxu0 %v372
    %639 = vmatprep.subr.bf16.mxu0 0
    %640 = vmatpush1.bf16.msra.mxu0 %v373
    %641 = vmatprep.subr.bf16.mxu0 0
    %642 = vmatpush1.bf16.msra.mxu0 %v374
    %643 = vmatprep.subr.bf16.mxu0 0
    %644 = vmatpush1.bf16.msra.mxu0 0
    %645 = vmatprep.subr.bf16.mxu0 0
    %646 = vmatpush1.bf16.msra.mxu0 0
    %647 = vmatprep.subr.bf16.mxu0 0
    %648 = vmatpush1.bf16.msra.mxu0 0
    %649 = vmatprep.subr.bf16.mxu0 0
    %650 = vmatpush1.bf16.msra.mxu0 0
    %651 = vmatprep.subr.bf16.mxu0 0
    %652 = vmatpush1.bf16.msra.mxu0 0
    %653 = vmatprep.subr.bf16.mxu0 0
    %654 = vmatpush1.bf16.msra.mxu0 0
    %655 = vmatprep.subr.bf16.mxu0 0
    %656 = vmatpush1.bf16.msra.mxu0 0
    %657 = vmatprep.subr.bf16.mxu0 0
    %658 = vmatpush1.bf16.msra.mxu0 0
    %659 = vmatprep.mubr.bf16.mxu0 0
    %660 = vmatmul.mubr.bf16.gmra.mrb[0].mxu0 %v626
    %v661 = vpop.f32.mrb[0].mxu0
    %v662 = vadd.f32 %v334, %v661
    %v663 = vpop.f32.mrb[0].mxu0
    %v664 = vpop.f32.mrb[0].mxu0
    %v665 = vpop.f32.mrb[0].mxu0
    %666 = vdwg.mxu0
    %v667 = vadd.f32 %v269, %v662
    %v668 = vxor.u32 %v667, 2147483648
    %v669 = vmul.f32 %v668, 1.442695
    %v670 = vpow.pop %v669
    %v671 = vadd.f32 %v670, 1.0
    %v672 = vrcp.pop %v671
    %v673 = vmul.f32 1.0, %v672
    %674 = vrot.lane.b32.xlu0 %v673, 64
    %v675 = vpop.permute.xlu0 %674
    %v676 = vmul.f32 %v675, %v662
    %v677 = vadd.f32 %v269, %v676
    %v678 = vtanh.pop %v677
    %679 = vrot.lane.b32.xlu0 %v678, 64
    %v680 = vpop.permute.xlu0 %679
    %681 = vrot.lane.b32.xlu0 %v673, 96
    %v682 = vpop.permute.xlu0 %681
    %v683 = vsub.f32 1.0, %v682
    %v684 = vmul.f32 %v683, %v680
    %v685 = vmul.f32 %v682, %v625
    %v686 = vadd.f32 %v684, %v685
    %v687 = vpack.c.bf16 %v686, %v686
    %688 = vmatprep.subr.bf16.mxu0 0
    %689 = vmatpush1.bf16.msra.mxu0 %v367
    %690 = vmatprep.subr.bf16.mxu0 0
    %691 = vmatpush1.bf16.msra.mxu0 %v368
    %692 = vmatprep.subr.bf16.mxu0 0
    %693 = vmatpush1.bf16.msra.mxu0 %v369
    %694 = vmatprep.subr.bf16.mxu0 0
    %695 = vmatpush1.bf16.msra.mxu0 %v370
    %696 = vmatprep.subr.bf16.mxu0 0
    %697 = vmatpush1.bf16.msra.mxu0 %v371
    %698 = vmatprep.subr.bf16.mxu0 0
    %699 = vmatpush1.bf16.msra.mxu0 %v372
    %700 = vmatprep.subr.bf16.mxu0 0
    %701 = vmatpush1.bf16.msra.mxu0 %v373
    %702 = vmatprep.subr.bf16.mxu0 0
    %703 = vmatpush1.bf16.msra.mxu0 %v374
    %704 = vmatprep.subr.bf16.mxu0 0
    %705 = vmatpush1.bf16.msra.mxu0 0
    %706 = vmatprep.subr.bf16.mxu0 0
    %707 = vmatpush1.bf16.msra.mxu0 0
    %708 = vmatprep.subr.bf16.mxu0 0
    %709 = vmatpush1.bf16.msra.mxu0 0
    %710 = vmatprep.subr.bf16.mxu0 0
    %711 = vmatpush1.bf16.msra.mxu0 0
    %712 = vmatprep.subr.bf16.mxu0 0
    %713 = vmatpush1.bf16.msra.mxu0 0
    %714 = vmatprep.subr.bf16.mxu0 0
    %715 = vmatpush1.bf16.msra.mxu0 0
    %716 = vmatprep.subr.bf16.mxu0 0
    %717 = vmatpush1.bf16.msra.mxu0 0
    %718 = vmatprep.subr.bf16.mxu0 0
    %719 = vmatpush1.bf16.msra.mxu0 0
    %720 = vmatprep.mubr.bf16.mxu0 0
    %721 = vmatmul.mubr.bf16.gmra.mrb[0].mxu0 %v687
    %v722 = vpop.f32.mrb[0].mxu0
    %v723 = vadd.f32 %v334, %v722
    %v724 = vpop.f32.mrb[0].mxu0
    %v725 = vpop.f32.mrb[0].mxu0
    %v726 = vpop.f32.mrb[0].mxu0
    %727 = vdwg.mxu0
    %v728 = vadd.f32 %v272, %v723
    %v729 = vxor.u32 %v728, 2147483648
    %v730 = vmul.f32 %v729, 1.442695
    %v731 = vpow.pop %v730
    %v732 = vadd.f32 %v731, 1.0
    %v733 = vrcp.pop %v732
    %v734 = vmul.f32 1.0, %v733
    %735 = vrot.lane.b32.xlu0 %v734, 64
    %v736 = vpop.permute.xlu0 %735
    %v737 = vmul.f32 %v736, %v723
    %v738 = vadd.f32 %v272, %v737
    %v739 = vtanh.pop %v738
    %740 = vrot.lane.b32.xlu0 %v739, 64
    %v741 = vpop.permute.xlu0 %740
    %742 = vrot.lane.b32.xlu0 %v734, 96
    %v743 = vpop.permute.xlu0 %742
    %v744 = vsub.f32 1.0, %v743
    %v745 = vmul.f32 %v744, %v741
    %v746 = vmul.f32 %v743, %v686
    %v747 = vadd.f32 %v745, %v746
    %v748 = vpack.c.bf16 %v747, %v747
    %749 = vmatprep.subr.bf16.mxu0 0
    %750 = vmatpush1.bf16.msra.mxu0 %v367
    %751 = vmatprep.subr.bf16.mxu0 0
    %752 = vmatpush1.bf16.msra.mxu0 %v368
    %753 = vmatprep.subr.bf16.mxu0 0
    %754 = vmatpush1.bf16.msra.mxu0 %v369
    %755 = vmatprep.subr.bf16.mxu0 0
    %756 = vmatpush1.bf16.msra.mxu0 %v370
    %757 = vmatprep.subr.bf16.mxu0 0
    %758 = vmatpush1.bf16.msra.mxu0 %v371
    %759 = vmatprep.subr.bf16.mxu0 0
    %760 = vmatpush1.bf16.msra.mxu0 %v372
    %761 = vmatprep.subr.bf16.mxu0 0
    %762 = vmatpush1.bf16.msra.mxu0 %v373
    %763 = vmatprep.subr.bf16.mxu0 0
    %764 = vmatpush1.bf16.msra.mxu0 %v374
    %765 = vmatprep.subr.bf16.mxu0 0
    %766 = vmatpush1.bf16.msra.mxu0 0
    %767 = vmatprep.subr.bf16.mxu0 0
    %768 = vmatpush1.bf16.msra.mxu0 0
    %769 = vmatprep.subr.bf16.mxu0 0
    %770 = vmatpush1.bf16.msra.mxu0 0
    %771 = vmatprep.subr.bf16.mxu0 0
    %772 = vmatpush1.bf16.msra.mxu0 0
    %773 = vmatprep.subr.bf16.mxu0 0
    %774 = vmatpush1.bf16.msra.mxu0 0
    %775 = vmatprep.subr.bf16.mxu0 0
    %776 = vmatpush1.bf16.msra.mxu0 0
    %777 = vmatprep.subr.bf16.mxu0 0
    %778 = vmatpush1.bf16.msra.mxu0 0
    %779 = vmatprep.subr.bf16.mxu0 0
    %780 = vmatpush1.bf16.msra.mxu0 0
    %781 = vmatprep.mubr.bf16.mxu0 0
    %782 = vmatmul.mubr.bf16.gmra.mrb[0].mxu0 %v748
    %v783 = vpop.f32.mrb[0].mxu0
    %v784 = vadd.f32 %v334, %v783
    %v785 = vpop.f32.mrb[0].mxu0
    %v786 = vpop.f32.mrb[0].mxu0
    %v787 = vpop.f32.mrb[0].mxu0
    %788 = vdwg.mxu0
    %v789 = vadd.f32 %v277, %v784
    %v790 = vxor.u32 %v789, 2147483648
    %v791 = vmul.f32 %v790, 1.442695
    %v792 = vpow.pop %v791
    %v793 = vadd.f32 %v792, 1.0
    %v794 = vrcp.pop %v793
    %v795 = vmul.f32 1.0, %v794
    %796 = vrot.lane.b32.xlu0 %v795, 64
    %v797 = vpop.permute.xlu0 %796
    %v798 = vmul.f32 %v797, %v784
    %v799 = vadd.f32 %v277, %v798
    %v800 = vtanh.pop %v799
    %801 = vrot.lane.b32.xlu0 %v800, 64
    %v802 = vpop.permute.xlu0 %801
    %803 = vrot.lane.b32.xlu0 %v795, 96
    %v804 = vpop.permute.xlu0 %803
    %v805 = vsub.f32 1.0, %v804
    %v806 = vmul.f32 %v805, %v802
    %v807 = vmul.f32 %v804, %v747
    %v808 = vadd.f32 %v806, %v807
    %v809 = vpack.c.bf16 %v808, %v808
    %810 = vmatprep.subr.bf16.mxu0 0
    %811 = vmatpush1.bf16.msra.mxu0 %v367
    %812 = vmatprep.subr.bf16.mxu0 0
    %813 = vmatpush1.bf16.msra.mxu0 %v368
    %814 = vmatprep.subr.bf16.mxu0 0
    %815 = vmatpush1.bf16.msra.mxu0 %v369
    %816 = vmatprep.subr.bf16.mxu0 0
    %817 = vmatpush1.bf16.msra.mxu0 %v370
    %818 = vmatprep.subr.bf16.mxu0 0
    %819 = vmatpush1.bf16.msra.mxu0 %v371
    %820 = vmatprep.subr.bf16.mxu0 0
    %821 = vmatpush1.bf16.msra.mxu0 %v372
    %822 = vmatprep.subr.bf16.mxu0 0
    %823 = vmatpush1.bf16.msra.mxu0 %v373
    %824 = vmatprep.subr.bf16.mxu0 0
    %825 = vmatpush1.bf16.msra.mxu0 %v374
    %826 = vmatprep.subr.bf16.mxu0 0
    %827 = vmatpush1.bf16.msra.mxu0 0
    %828 = vmatprep.subr.bf16.mxu0 0
    %829 = vmatpush1.bf16.msra.mxu0 0
    %830 = vmatprep.subr.bf16.mxu0 0
    %831 = vmatpush1.bf16.msra.mxu0 0
    %832 = vmatprep.subr.bf16.mxu0 0
    %833 = vmatpush1.bf16.msra.mxu0 0
    %834 = vmatprep.subr.bf16.mxu0 0
    %835 = vmatpush1.bf16.msra.mxu0 0
    %836 = vmatprep.subr.bf16.mxu0 0
    %837 = vmatpush1.bf16.msra.mxu0 0
    %838 = vmatprep.subr.bf16.mxu0 0
    %839 = vmatpush1.bf16.msra.mxu0 0
    %840 = vmatprep.subr.bf16.mxu0 0
    %841 = vmatpush1.bf16.msra.mxu0 0
    %842 = vmatprep.mubr.bf16.mxu0 0
    %843 = vmatmul.mubr.bf16.gmra.mrb[0].mxu0 %v809
    %v844 = vpop.f32.mrb[0].mxu0
    %v845 = vadd.f32 %v334, %v844
    %v846 = vpop.f32.mrb[0].mxu0
    %v847 = vpop.f32.mrb[0].mxu0
    %v848 = vpop.f32.mrb[0].mxu0
    %849 = vdwg.mxu0
    %v850 = vadd.f32 %v280, %v845
    %v851 = vxor.u32 %v850, 2147483648
    %v852 = vmul.f32 %v851, 1.442695
    %v853 = vpow.pop %v852
    %v854 = vadd.f32 %v853, 1.0
    %v855 = vrcp.pop %v854
    %v856 = vmul.f32 1.0, %v855
    %857 = vrot.lane.b32.xlu0 %v856, 64
    %v858 = vpop.permute.xlu0 %857
    %v859 = vmul.f32 %v858, %v845
    %v860 = vadd.f32 %v280, %v859
    %v861 = vtanh.pop %v860
    %862 = vrot.lane.b32.xlu0 %v861, 64
    %v863 = vpop.permute.xlu0 %862
    %864 = vrot.lane.b32.xlu0 %v856, 96
    %v865 = vpop.permute.xlu0 %864
    %v866 = vsub.f32 1.0, %v865
    %v867 = vmul.f32 %v866, %v863
    %v868 = vmul.f32 %v865, %v808
    %v869 = vadd.f32 %v867, %v868
    %v870 = vld [vmem:[#allocation2 + $0x80] sm:$0xf]
    %v871 = vld [vmem:[#allocation2 + $0x84] sm:$0xf]
    %v872 = vld [vmem:[#allocation2 + $0x88] sm:$0xf]
    %v873 = vld [vmem:[#allocation2 + $0x8c] sm:$0xf]
    %v874 = vld [vmem:[#allocation2 + $0x90] sm:$0xf]
    %v875 = vld [vmem:[#allocation2 + $0x94] sm:$0xf]
    %v876 = vld [vmem:[#allocation2 + $0x98] sm:$0xf]
    %v877 = vld [vmem:[#allocation2 + $0x9c] sm:$0xf]
    %v878 = vld [vmem:[#allocation2 + $0xa0] sm:$0xf]
    %v879 = vld [vmem:[#allocation2 + $0xa4] sm:$0xf]
    %v880 = vld [vmem:[#allocation2 + $0xa8] sm:$0xf]
    %v881 = vld [vmem:[#allocation2 + $0xac] sm:$0xf]
    %v882 = vld [vmem:[#allocation2 + $0xb0] sm:$0xf]
    %v883 = vld [vmem:[#allocation2 + $0xb4] sm:$0xf]
    %v884 = vld [vmem:[#allocation2 + $0xb8] sm:$0xf]
    %v885 = vld [vmem:[#allocation2 + $0xbc] sm:$0xf]
    %v886 = vld [vmem:[#allocation2 + $0xc0] sm:$0xf]
    %v887 = vld [vmem:[#allocation2 + $0xc4] sm:$0xf]
    %v888 = vld [vmem:[#allocation2 + $0xc8] sm:$0xf]
    %v889 = vld [vmem:[#allocation2 + $0xcc] sm:$0xf]
    %v890 = vld [vmem:[#allocation2 + $0xd0] sm:$0xf]
    %v891 = vld [vmem:[#allocation2 + $0xd4] sm:$0xf]
    %v892 = vld [vmem:[#allocation2 + $0xd8] sm:$0xf]
    %v893 = vld [vmem:[#allocation2 + $0xdc] sm:$0xf]
    %v894 = vld [vmem:[#allocation2 + $0xe0] sm:$0xf]
    %v895 = vld [vmem:[#allocation2 + $0xe4] sm:$0xf]
    %v896 = vld [vmem:[#allocation2 + $0xe8] sm:$0xf]
    %v897 = vld [vmem:[#allocation2 + $0xec] sm:$0xf]
    %v898 = vld [vmem:[#allocation2 + $0xf0] sm:$0xf]
    %v899 = vld [vmem:[#allocation2 + $0xf4] sm:$0xf]
    %v900 = vld [vmem:[#allocation2 + $0xf8] sm:$0xf]
    %v901 = vld [vmem:[#allocation2 + $0xfc] sm:$0xf]
    %v902 = vpack.c.bf16 %v503, %v442
    %v903 = vpack.c.bf16 %v625, %v564
    %v904 = vpack.c.bf16 %v747, %v686
    %v905 = vpack.c.bf16 %v869, %v808
    %v906 = vlaneseq
    %v907 = vshrl.u32 %v906, 7
    %v908 = vsub.s32 1, %v907
    %v909 = vrot.slane %v31, %v908
    %v926 = vunpack.c.l.b16 %v870
    %v927 = vunpack.c.l.b16 %v871
    %v928 = vunpack.c.l.b16 %v872
    %v929 = vunpack.c.l.b16 %v873
    %v930 = vunpack.c.l.b16 %v874
    %v931 = vunpack.c.l.b16 %v875
    %v932 = vunpack.c.l.b16 %v876
    %v933 = vunpack.c.l.b16 %v877
    %v934 = vunpack.c.l.b16 %v878
    %v935 = vunpack.c.l.b16 %v879
    %v936 = vunpack.c.l.b16 %v880
    %v937 = vunpack.c.l.b16 %v881
    %v938 = vunpack.c.l.b16 %v882
    %v939 = vunpack.c.l.b16 %v883
    %v940 = vunpack.c.l.b16 %v884
    %v941 = vunpack.c.l.b16 %v885
    %v942 = vpack.c.b16 %v927, %v926
    %v943 = vpack.c.b16 %v929, %v928
    %v944 = vpack.c.b16 %v931, %v930
    %v945 = vpack.c.b16 %v933, %v932
    %v946 = vpack.c.b16 %v935, %v934
    %v947 = vpack.c.b16 %v937, %v936
    %v948 = vpack.c.b16 %v939, %v938
    %v949 = vpack.c.b16 %v941, %v940
    %958 = vmatprep.subr.bf16.mxu0 0
    %959 = vmatpush1.bf16.msra.mxu0 %v942
    %960 = vmatprep.subr.bf16.mxu0 0
    %961 = vmatpush1.bf16.msra.mxu0 %v943
    %962 = vmatprep.subr.bf16.mxu0 0
    %963 = vmatpush1.bf16.msra.mxu0 %v944
    %964 = vmatprep.subr.bf16.mxu0 0
    %965 = vmatpush1.bf16.msra.mxu0 %v945
    %966 = vmatprep.subr.bf16.mxu0 0
    %967 = vmatpush1.bf16.msra.mxu0 %v946
    %968 = vmatprep.subr.bf16.mxu0 0
    %969 = vmatpush1.bf16.msra.mxu0 %v947
    %970 = vmatprep.subr.bf16.mxu0 0
    %971 = vmatpush1.bf16.msra.mxu0 %v948
    %972 = vmatprep.subr.bf16.mxu0 0
    %973 = vmatpush1.bf16.msra.mxu0 %v949
    %974 = vmatprep.subr.bf16.mxu0 0
    %975 = vmatpush1.bf16.msra.mxu0 0
    %976 = vmatprep.subr.bf16.mxu0 0
    %977 = vmatpush1.bf16.msra.mxu0 0
    %978 = vmatprep.subr.bf16.mxu0 0
    %979 = vmatpush1.bf16.msra.mxu0 0
    %980 = vmatprep.subr.bf16.mxu0 0
    %981 = vmatpush1.bf16.msra.mxu0 0
    %982 = vmatprep.subr.bf16.mxu0 0
    %983 = vmatpush1.bf16.msra.mxu0 0
    %984 = vmatprep.subr.bf16.mxu0 0
    %985 = vmatpush1.bf16.msra.mxu0 0
    %986 = vmatprep.subr.bf16.mxu0 0
    %987 = vmatpush1.bf16.msra.mxu0 0
    %988 = vmatprep.subr.bf16.mxu0 0
    %989 = vmatpush1.bf16.msra.mxu0 0
    %990 = vmatprep.mubr.bf16.mxu0 0
    %991 = vmatmul.mubr.bf16.gmra.mrb[0].mxu0 %v902
    %v992 = vpop.f32.mrb[0].mxu0
    %v993 = vadd.f32 %v909, %v992
    %v994 = vpop.f32.mrb[0].mxu0
    %v995 = vpop.f32.mrb[0].mxu0
    %v996 = vadd.f32 %v909, %v995
    %v997 = vpop.f32.mrb[0].mxu0
    %998 = vmatprep.mubr.bf16.mxu0 0
    %999 = vmatmul.mubr.bf16.gmra.mrb[0].mxu0 %v903
    %v1000 = vpop.f32.mrb[0].mxu0
    %v1001 = vadd.f32 %v909, %v1000
    %v1002 = vpop.f32.mrb[0].mxu0
    %v1003 = vpop.f32.mrb[0].mxu0
    %v1004 = vadd.f32 %v909, %v1003
    %v1005 = vpop.f32.mrb[0].mxu0
    %1006 = vmatprep.mubr.bf16.mxu0 0
    %1007 = vmatmul.mubr.bf16.gmra.mrb[0].mxu0 %v904
    %v1008 = vpop.f32.mrb[0].mxu0
    %v1009 = vadd.f32 %v909, %v1008
    %v1010 = vpop.f32.mrb[0].mxu0
    %v1011 = vpop.f32.mrb[0].mxu0
    %v1012 = vadd.f32 %v909, %v1011
    %v1013 = vpop.f32.mrb[0].mxu0
    %1014 = vmatprep.mubr.bf16.mxu0 0
    %1015 = vmatmul.mubr.bf16.gmra.mrb[0].mxu0 %v905
    %v1016 = vpop.f32.mrb[0].mxu0
    %v1017 = vadd.f32 %v909, %v1016
    %v1018 = vpop.f32.mrb[0].mxu0
    %v1019 = vpop.f32.mrb[0].mxu0
    %v1020 = vadd.f32 %v909, %v1019
    %v1021 = vpop.f32.mrb[0].mxu0
    %1022 = vdwg.mxu0
    %v1023 = vlaneseq
    %v1024 = vshrl.u32 %v1023, 7
    %v1025 = vsub.s32 2, %v1024
    %v1026 = vrot.slane %v31, %v1025
    %v1043 = vunpack.c.l.b16 %v886
    %v1044 = vunpack.c.l.b16 %v887
    %v1045 = vunpack.c.l.b16 %v888
    %v1046 = vunpack.c.l.b16 %v889
    %v1047 = vunpack.c.l.b16 %v890
    %v1048 = vunpack.c.l.b16 %v891
    %v1049 = vunpack.c.l.b16 %v892
    %v1050 = vunpack.c.l.b16 %v893
    %v1051 = vunpack.c.l.b16 %v894
    %v1052 = vunpack.c.l.b16 %v895
    %v1053 = vunpack.c.l.b16 %v896
    %v1054 = vunpack.c.l.b16 %v897
    %v1055 = vunpack.c.l.b16 %v898
    %v1056 = vunpack.c.l.b16 %v899
    %v1057 = vunpack.c.l.b16 %v900
    %v1058 = vunpack.c.l.b16 %v901
    %v1059 = vpack.c.b16 %v1044, %v1043
    %v1060 = vpack.c.b16 %v1046, %v1045
    %v1061 = vpack.c.b16 %v1048, %v1047
    %v1062 = vpack.c.b16 %v1050, %v1049
    %v1063 = vpack.c.b16 %v1052, %v1051
    %v1064 = vpack.c.b16 %v1054, %v1053
    %v1065 = vpack.c.b16 %v1056, %v1055
    %v1066 = vpack.c.b16 %v1058, %v1057
    %1075 = vmatprep.subr.bf16.mxu0 0
    %1076 = vmatpush1.bf16.msra.mxu0 %v1059
    %1077 = vmatprep.subr.bf16.mxu0 0
    %1078 = vmatpush1.bf16.msra.mxu0 %v1060
    %1079 = vmatprep.subr.bf16.mxu0 0
    %1080 = vmatpush1.bf16.msra.mxu0 %v1061
    %1081 = vmatprep.subr.bf16.mxu0 0
    %1082 = vmatpush1.bf16.msra.mxu0 %v1062
    %1083 = vmatprep.subr.bf16.mxu0 0
    %1084 = vmatpush1.bf16.msra.mxu0 %v1063
    %1085 = vmatprep.subr.bf16.mxu0 0
    %1086 = vmatpush1.bf16.msra.mxu0 %v1064
    %1087 = vmatprep.subr.bf16.mxu0 0
    %1088 = vmatpush1.bf16.msra.mxu0 %v1065
    %1089 = vmatprep.subr.bf16.mxu0 0
    %1090 = vmatpush1.bf16.msra.mxu0 %v1066
    %1091 = vmatprep.subr.bf16.mxu0 0
    %1092 = vmatpush1.bf16.msra.mxu0 0
    %1093 = vmatprep.subr.bf16.mxu0 0
    %1094 = vmatpush1.bf16.msra.mxu0 0
    %1095 = vmatprep.subr.bf16.mxu0 0
    %1096 = vmatpush1.bf16.msra.mxu0 0
    %1097 = vmatprep.subr.bf16.mxu0 0
    %1098 = vmatpush1.bf16.msra.mxu0 0
    %1099 = vmatprep.subr.bf16.mxu0 0
    %1100 = vmatpush1.bf16.msra.mxu0 0
    %1101 = vmatprep.subr.bf16.mxu0 0
    %1102 = vmatpush1.bf16.msra.mxu0 0
    %1103 = vmatprep.subr.bf16.mxu0 0
    %1104 = vmatpush1.bf16.msra.mxu0 0
    %1105 = vmatprep.subr.bf16.mxu0 0
    %1106 = vmatpush1.bf16.msra.mxu0 0
    %1107 = vmatprep.mubr.bf16.mxu0 0
    %1108 = vmatmul.mubr.bf16.gmra.mrb[0].mxu0 0
    %v1109 = vpop.f32.mrb[0].mxu0
    %v1110 = vadd.f32 %v1026, %v1109
    %v1111 = vpop.f32.mrb[0].mxu0
    %v1112 = vpop.f32.mrb[0].mxu0
    %v1113 = vpop.f32.mrb[0].mxu0
    %1114 = vdwg.mxu0
    %v1115 = vadd.f32 %v993, %v1110
    %v1116 = vxor.u32 %v1115, 2147483648
    %v1117 = vmul.f32 %v1116, 1.442695
    %v1118 = vpow.pop %v1117
    %v1119 = vadd.f32 %v1118, 1.0
    %v1120 = vrcp.pop %v1119
    %v1121 = vmul.f32 1.0, %v1120
    %1122 = vrot.lane.b32.xlu0 %v1121, 64
    %v1123 = vpop.permute.xlu0 %1122
    %v1124 = vmul.f32 %v1123, %v1110
    %v1125 = vadd.f32 %v993, %v1124
    %v1126 = vtanh.pop %v1125
    %1127 = vrot.lane.b32.xlu0 %v1126, 64
    %v1128 = vpop.permute.xlu0 %1127
    %1129 = vrot.lane.b32.xlu0 %v1121, 96
    %v1130 = vpop.permute.xlu0 %1129
    %v1131 = vsub.f32 1.0, %v1130
    %v1132 = vmul.f32 %v1131, %v1128
    %v1133 = vmul.f32 %v1130, 0.0
    %v1134 = vadd.f32 %v1132, %v1133
    %v1135 = vpack.c.bf16 %v1134, %v1134
    %1136 = vmatprep.subr.bf16.mxu0 0
    %1137 = vmatpush1.bf16.msra.mxu0 %v1059
    %1138 = vmatprep.subr.bf16.mxu0 0
    %1139 = vmatpush1.bf16.msra.mxu0 %v1060
    %1140 = vmatprep.subr.bf16.mxu0 0
    %1141 = vmatpush1.bf16.msra.mxu0 %v1061
    %1142 = vmatprep.subr.bf16.mxu0 0
    %1143 = vmatpush1.bf16.msra.mxu0 %v1062
    %1144 = vmatprep.subr.bf16.mxu0 0
    %1145 = vmatpush1.bf16.msra.mxu0 %v1063
    %1146 = vmatprep.subr.bf16.mxu0 0
    %1147 = vmatpush1.bf16.msra.mxu0 %v1064
    %1148 = vmatprep.subr.bf16.mxu0 0
    %1149 = vmatpush1.bf16.msra.mxu0 %v1065
    %1150 = vmatprep.subr.bf16.mxu0 0
    %1151 = vmatpush1.bf16.msra.mxu0 %v1066
    %1152 = vmatprep.subr.bf16.mxu0 0
    %1153 = vmatpush1.bf16.msra.mxu0 0
    %1154 = vmatprep.subr.bf16.mxu0 0
    %1155 = vmatpush1.bf16.msra.mxu0 0
    %1156 = vmatprep.subr.bf16.mxu0 0
    %1157 = vmatpush1.bf16.msra.mxu0 0
    %1158 = vmatprep.subr.bf16.mxu0 0
    %1159 = vmatpush1.bf16.msra.mxu0 0
    %1160 = vmatprep.subr.bf16.mxu0 0
    %1161 = vmatpush1.bf16.msra.mxu0 0
    %1162 = vmatprep.subr.bf16.mxu0 0
    %1163 = vmatpush1.bf16.msra.mxu0 0
    %1164 = vmatprep.subr.bf16.mxu0 0
    %1165 = vmatpush1.bf16.msra.mxu0 0
    %1166 = vmatprep.subr.bf16.mxu0 0
    %1167 = vmatpush1.bf16.msra.mxu0 0
    %1168 = vmatprep.mubr.bf16.mxu0 0
    %1169 = vmatmul.mubr.bf16.gmra.mrb[0].mxu0 %v1135
    %v1170 = vpop.f32.mrb[0].mxu0
    %v1171 = vadd.f32 %v1026, %v1170
    %v1172 = vpop.f32.mrb[0].mxu0
    %v1173 = vpop.f32.mrb[0].mxu0
    %v1174 = vpop.f32.mrb[0].mxu0
    %1175 = vdwg.mxu0
    %v1176 = vadd.f32 %v996, %v1171
    %v1177 = vxor.u32 %v1176, 2147483648
    %v1178 = vmul.f32 %v1177, 1.442695
    %v1179 = vpow.pop %v1178
    %v1180 = vadd.f32 %v1179, 1.0
    %v1181 = vrcp.pop %v1180
    %v1182 = vmul.f32 1.0, %v1181
    %1183 = vrot.lane.b32.xlu0 %v1182, 64
    %v1184 = vpop.permute.xlu0 %1183
    %v1185 = vmul.f32 %v1184, %v1171
    %v1186 = vadd.f32 %v996, %v1185
    %v1187 = vtanh.pop %v1186
    %1188 = vrot.lane.b32.xlu0 %v1187, 64
    %v1189 = vpop.permute.xlu0 %1188
    %1190 = vrot.lane.b32.xlu0 %v1182, 96
    %v1191 = vpop.permute.xlu0 %1190
    %v1192 = vsub.f32 1.0, %v1191
    %v1193 = vmul.f32 %v1192, %v1189
    %v1194 = vmul.f32 %v1191, %v1134
    %v1195 = vadd.f32 %v1193, %v1194
    %v1196 = vpack.c.bf16 %v1195, %v1195
    %1197 = vmatprep.subr.bf16.mxu0 0
    %1198 = vmatpush1.bf16.msra.mxu0 %v1059
    %1199 = vmatprep.subr.bf16.mxu0 0
    %1200 = vmatpush1.bf16.msra.mxu0 %v1060
    %1201 = vmatprep.subr.bf16.mxu0 0
    %1202 = vmatpush1.bf16.msra.mxu0 %v1061
    %1203 = vmatprep.subr.bf16.mxu0 0
    %1204 = vmatpush1.bf16.msra.mxu0 %v1062
    %1205 = vmatprep.subr.bf16.mxu0 0
    %1206 = vmatpush1.bf16.msra.mxu0 %v1063
    %1207 = vmatprep.subr.bf16.mxu0 0
    %1208 = vmatpush1.bf16.msra.mxu0 %v1064
    %1209 = vmatprep.subr.bf16.mxu0 0
    %1210 = vmatpush1.bf16.msra.mxu0 %v1065
    %1211 = vmatprep.subr.bf16.mxu0 0
    %1212 = vmatpush1.bf16.msra.mxu0 %v1066
    %1213 = vmatprep.subr.bf16.mxu0 0
    %1214 = vmatpush1.bf16.msra.mxu0 0
    %1215 = vmatprep.subr.bf16.mxu0 0
    %1216 = vmatpush1.bf16.msra.mxu0 0
    %1217 = vmatprep.subr.bf16.mxu0 0
    %1218 = vmatpush1.bf16.msra.mxu0 0
    %1219 = vmatprep.subr.bf16.mxu0 0
    %1220 = vmatpush1.bf16.msra.mxu0 0
    %1221 = vmatprep.subr.bf16.mxu0 0
    %1222 = vmatpush1.bf16.msra.mxu0 0
    %1223 = vmatprep.subr.bf16.mxu0 0
    %1224 = vmatpush1.bf16.msra.mxu0 0
    %1225 = vmatprep.subr.bf16.mxu0 0
    %1226 = vmatpush1.bf16.msra.mxu0 0
    %1227 = vmatprep.subr.bf16.mxu0 0
    %1228 = vmatpush1.bf16.msra.mxu0 0
    %1229 = vmatprep.mubr.bf16.mxu0 0
    %1230 = vmatmul.mubr.bf16.gmra.mrb[0].mxu0 %v1196
    %v1231 = vpop.f32.mrb[0].mxu0
    %v1232 = vadd.f32 %v1026, %v1231
    %v1233 = vpop.f32.mrb[0].mxu0
    %v1234 = vpop.f32.mrb[0].mxu0
    %v1235 = vpop.f32.mrb[0].mxu0
    %1236 = vdwg.mxu0
    %v1237 = vadd.f32 %v1001, %v1232
    %v1238 = vxor.u32 %v1237, 2147483648
    %v1239 = vmul.f32 %v1238, 1.442695
    %v1240 = vpow.pop %v1239
    %v1241 = vadd.f32 %v1240, 1.0
    %v1242 = vrcp.pop %v1241
    %v1243 = vmul.f32 1.0, %v1242
    %1244 = vrot.lane.b32.xlu0 %v1243, 64
    %v1245 = vpop.permute.xlu0 %1244
    %v1246 = vmul.f32 %v1245, %v1232
    %v1247 = vadd.f32 %v1001, %v1246
    %v1248 = vtanh.pop %v1247
    %1249 = vrot.lane.b32.xlu0 %v1248, 64
    %v1250 = vpop.permute.xlu0 %1249
    %1251 = vrot.lane.b32.xlu0 %v1243, 96
    %v1252 = vpop.permute.xlu0 %1251
    %v1253 = vsub.f32 1.0, %v1252
    %v1254 = vmul.f32 %v1253, %v1250
    %v1255 = vmul.f32 %v1252, %v1195
    %v1256 = vadd.f32 %v1254, %v1255
    %v1257 = vpack.c.bf16 %v1256, %v1256
    %1258 = vmatprep.subr.bf16.mxu0 0
    %1259 = vmatpush1.bf16.msra.mxu0 %v1059
    %1260 = vmatprep.subr.bf16.mxu0 0
    %1261 = vmatpush1.bf16.msra.mxu0 %v1060
    %1262 = vmatprep.subr.bf16.mxu0 0
    %1263 = vmatpush1.bf16.msra.mxu0 %v1061
    %1264 = vmatprep.subr.bf16.mxu0 0
    %1265 = vmatpush1.bf16.msra.mxu0 %v1062
    %1266 = vmatprep.subr.bf16.mxu0 0
    %1267 = vmatpush1.bf16.msra.mxu0 %v1063
    %1268 = vmatprep.subr.bf16.mxu0 0
    %1269 = vmatpush1.bf16.msra.mxu0 %v1064
    %1270 = vmatprep.subr.bf16.mxu0 0
    %1271 = vmatpush1.bf16.msra.mxu0 %v1065
    %1272 = vmatprep.subr.bf16.mxu0 0
    %1273 = vmatpush1.bf16.msra.mxu0 %v1066
    %1274 = vmatprep.subr.bf16.mxu0 0
    %1275 = vmatpush1.bf16.msra.mxu0 0
    %1276 = vmatprep.subr.bf16.mxu0 0
    %1277 = vmatpush1.bf16.msra.mxu0 0
    %1278 = vmatprep.subr.bf16.mxu0 0
    %1279 = vmatpush1.bf16.msra.mxu0 0
    %1280 = vmatprep.subr.bf16.mxu0 0
    %1281 = vmatpush1.bf16.msra.mxu0 0
    %1282 = vmatprep.subr.bf16.mxu0 0
    %1283 = vmatpush1.bf16.msra.mxu0 0
    %1284 = vmatprep.subr.bf16.mxu0 0
    %1285 = vmatpush1.bf16.msra.mxu0 0
    %1286 = vmatprep.subr.bf16.mxu0 0
    %1287 = vmatpush1.bf16.msra.mxu0 0
    %1288 = vmatprep.subr.bf16.mxu0 0
    %1289 = vmatpush1.bf16.msra.mxu0 0
    %1290 = vmatprep.mubr.bf16.mxu0 0
    %1291 = vmatmul.mubr.bf16.gmra.mrb[0].mxu0 %v1257
    %v1292 = vpop.f32.mrb[0].mxu0
    %v1293 = vadd.f32 %v1026, %v1292
    %v1294 = vpop.f32.mrb[0].mxu0
    %v1295 = vpop.f32.mrb[0].mxu0
    %v1296 = vpop.f32.mrb[0].mxu0
    %1297 = vdwg.mxu0
    %v1298 = vadd.f32 %v1004, %v1293
    %v1299 = vxor.u32 %v1298, 2147483648
    %v1300 = vmul.f32 %v1299, 1.442695
    %v1301 = vpow.pop %v1300
    %v1302 = vadd.f32 %v1301, 1.0
    %v1303 = vrcp.pop %v1302
    %v1304 = vmul.f32 1.0, %v1303
    %1305 = vrot.lane.b32.xlu0 %v1304, 64
    %v1306 = vpop.permute.xlu0 %1305
    %v1307 = vmul.f32 %v1306, %v1293
    %v1308 = vadd.f32 %v1004, %v1307
    %v1309 = vtanh.pop %v1308
    %1310 = vrot.lane.b32.xlu0 %v1309, 64
    %v1311 = vpop.permute.xlu0 %1310
    %1312 = vrot.lane.b32.xlu0 %v1304, 96
    %v1313 = vpop.permute.xlu0 %1312
    %v1314 = vsub.f32 1.0, %v1313
    %v1315 = vmul.f32 %v1314, %v1311
    %v1316 = vmul.f32 %v1313, %v1256
    %v1317 = vadd.f32 %v1315, %v1316
    %v1318 = vpack.c.bf16 %v1317, %v1317
    %1319 = vmatprep.subr.bf16.mxu0 0
    %1320 = vmatpush1.bf16.msra.mxu0 %v1059
    %1321 = vmatprep.subr.bf16.mxu0 0
    %1322 = vmatpush1.bf16.msra.mxu0 %v1060
    %1323 = vmatprep.subr.bf16.mxu0 0
    %1324 = vmatpush1.bf16.msra.mxu0 %v1061
    %1325 = vmatprep.subr.bf16.mxu0 0
    %1326 = vmatpush1.bf16.msra.mxu0 %v1062
    %1327 = vmatprep.subr.bf16.mxu0 0
    %1328 = vmatpush1.bf16.msra.mxu0 %v1063
    %1329 = vmatprep.subr.bf16.mxu0 0
    %1330 = vmatpush1.bf16.msra.mxu0 %v1064
    %1331 = vmatprep.subr.bf16.mxu0 0
    %1332 = vmatpush1.bf16.msra.mxu0 %v1065
    %1333 = vmatprep.subr.bf16.mxu0 0
    %1334 = vmatpush1.bf16.msra.mxu0 %v1066
    %1335 = vmatprep.subr.bf16.mxu0 0
    %1336 = vmatpush1.bf16.msra.mxu0 0
    %1337 = vmatprep.subr.bf16.mxu0 0
    %1338 = vmatpush1.bf16.msra.mxu0 0
    %1339 = vmatprep.subr.bf16.mxu0 0
    %1340 = vmatpush1.bf16.msra.mxu0 0
    %1341 = vmatprep.subr.bf16.mxu0 0
    %1342 = vmatpush1.bf16.msra.mxu0 0
    %1343 = vmatprep.subr.bf16.mxu0 0
    %1344 = vmatpush1.bf16.msra.mxu0 0
    %1345 = vmatprep.subr.bf16.mxu0 0
    %1346 = vmatpush1.bf16.msra.mxu0 0
    %1347 = vmatprep.subr.bf16.mxu0 0
    %1348 = vmatpush1.bf16.msra.mxu0 0
    %1349 = vmatprep.subr.bf16.mxu0 0
    %1350 = vmatpush1.bf16.msra.mxu0 0
    %1351 = vmatprep.mubr.bf16.mxu0 0
    %1352 = vmatmul.mubr.bf16.gmra.mrb[0].mxu0 %v1318
    %v1353 = vpop.f32.mrb[0].mxu0
    %v1354 = vadd.f32 %v1026, %v1353
    %v1355 = vpop.f32.mrb[0].mxu0
    %v1356 = vpop.f32.mrb[0].mxu0
    %v1357 = vpop.f32.mrb[0].mxu0
    %1358 = vdwg.mxu0
    %v1359 = vadd.f32 %v1009, %v1354
    %v1360 = vxor.u32 %v1359, 2147483648
    %v1361 = vmul.f32 %v1360, 1.442695
    %v1362 = vpow.pop %v1361
    %v1363 = vadd.f32 %v1362, 1.0
    %v1364 = vrcp.pop %v1363
    %v1365 = vmul.f32 1.0, %v1364
    %1366 = vrot.lane.b32.xlu0 %v1365, 64
    %v1367 = vpop.permute.xlu0 %1366
    %v1368 = vmul.f32 %v1367, %v1354
    %v1369 = vadd.f32 %v1009, %v1368
    %v1370 = vtanh.pop %v1369
    %1371 = vrot.lane.b32.xlu0 %v1370, 64
    %v1372 = vpop.permute.xlu0 %1371
    %1373 = vrot.lane.b32.xlu0 %v1365, 96
    %v1374 = vpop.permute.xlu0 %1373
    %v1375 = vsub.f32 1.0, %v1374
    %v1376 = vmul.f32 %v1375, %v1372
    %v1377 = vmul.f32 %v1374, %v1317
    %v1378 = vadd.f32 %v1376, %v1377
    %v1379 = vpack.c.bf16 %v1378, %v1378
    %1380 = vmatprep.subr.bf16.mxu0 0
    %1381 = vmatpush1.bf16.msra.mxu0 %v1059
    %1382 = vmatprep.subr.bf16.mxu0 0
    %1383 = vmatpush1.bf16.msra.mxu0 %v1060
    %1384 = vmatprep.subr.bf16.mxu0 0
    %1385 = vmatpush1.bf16.msra.mxu0 %v1061
    %1386 = vmatprep.subr.bf16.mxu0 0
    %1387 = vmatpush1.bf16.msra.mxu0 %v1062
    %1388 = vmatprep.subr.bf16.mxu0 0
    %1389 = vmatpush1.bf16.msra.mxu0 %v1063
    %1390 = vmatprep.subr.bf16.mxu0 0
    %1391 = vmatpush1.bf16.msra.mxu0 %v1064
    %1392 = vmatprep.subr.bf16.mxu0 0
    %1393 = vmatpush1.bf16.msra.mxu0 %v1065
    %1394 = vmatprep.subr.bf16.mxu0 0
    %1395 = vmatpush1.bf16.msra.mxu0 %v1066
    %1396 = vmatprep.subr.bf16.mxu0 0
    %1397 = vmatpush1.bf16.msra.mxu0 0
    %1398 = vmatprep.subr.bf16.mxu0 0
    %1399 = vmatpush1.bf16.msra.mxu0 0
    %1400 = vmatprep.subr.bf16.mxu0 0
    %1401 = vmatpush1.bf16.msra.mxu0 0
    %1402 = vmatprep.subr.bf16.mxu0 0
    %1403 = vmatpush1.bf16.msra.mxu0 0
    %1404 = vmatprep.subr.bf16.mxu0 0
    %1405 = vmatpush1.bf16.msra.mxu0 0
    %1406 = vmatprep.subr.bf16.mxu0 0
    %1407 = vmatpush1.bf16.msra.mxu0 0
    %1408 = vmatprep.subr.bf16.mxu0 0
    %1409 = vmatpush1.bf16.msra.mxu0 0
    %1410 = vmatprep.subr.bf16.mxu0 0
    %1411 = vmatpush1.bf16.msra.mxu0 0
    %1412 = vmatprep.mubr.bf16.mxu0 0
    %1413 = vmatmul.mubr.bf16.gmra.mrb[0].mxu0 %v1379
    %v1414 = vpop.f32.mrb[0].mxu0
    %v1415 = vadd.f32 %v1026, %v1414
    %v1416 = vpop.f32.mrb[0].mxu0
    %v1417 = vpop.f32.mrb[0].mxu0
    %v1418 = vpop.f32.mrb[0].mxu0
    %1419 = vdwg.mxu0
    %v1420 = vadd.f32 %v1012, %v1415
    %v1421 = vxor.u32 %v1420, 2147483648
    %v1422 = vmul.f32 %v1421, 1.442695
    %v1423 = vpow.pop %v1422
    %v1424 = vadd.f32 %v1423, 1.0
    %v1425 = vrcp.pop %v1424
    %v1426 = vmul.f32 1.0, %v1425
    %1427 = vrot.lane.b32.xlu0 %v1426, 64
    %v1428 = vpop.permute.xlu0 %1427
    %v1429 = vmul.f32 %v1428, %v1415
    %v1430 = vadd.f32 %v1012, %v1429
    %v1431 = vtanh.pop %v1430
    %1432 = vrot.lane.b32.xlu0 %v1431, 64
    %v1433 = vpop.permute.xlu0 %1432
    %1434 = vrot.lane.b32.xlu0 %v1426, 96
    %v1435 = vpop.permute.xlu0 %1434
    %v1436 = vsub.f32 1.0, %v1435
    %v1437 = vmul.f32 %v1436, %v1433
    %v1438 = vmul.f32 %v1435, %v1378
    %v1439 = vadd.f32 %v1437, %v1438
    %v1440 = vpack.c.bf16 %v1439, %v1439
    %1441 = vmatprep.subr.bf16.mxu0 0
    %1442 = vmatpush1.bf16.msra.mxu0 %v1059
    %1443 = vmatprep.subr.bf16.mxu0 0
    %1444 = vmatpush1.bf16.msra.mxu0 %v1060
    %1445 = vmatprep.subr.bf16.mxu0 0
    %1446 = vmatpush1.bf16.msra.mxu0 %v1061
    %1447 = vmatprep.subr.bf16.mxu0 0
    %1448 = vmatpush1.bf16.msra.mxu0 %v1062
    %1449 = vmatprep.subr.bf16.mxu0 0
    %1450 = vmatpush1.bf16.msra.mxu0 %v1063
    %1451 = vmatprep.subr.bf16.mxu0 0
    %1452 = vmatpush1.bf16.msra.mxu0 %v1064
    %1453 = vmatprep.subr.bf16.mxu0 0
    %1454 = vmatpush1.bf16.msra.mxu0 %v1065
    %1455 = vmatprep.subr.bf16.mxu0 0
    %1456 = vmatpush1.bf16.msra.mxu0 %v1066
    %1457 = vmatprep.subr.bf16.mxu0 0
    %1458 = vmatpush1.bf16.msra.mxu0 0
    %1459 = vmatprep.subr.bf16.mxu0 0
    %1460 = vmatpush1.bf16.msra.mxu0 0
    %1461 = vmatprep.subr.bf16.mxu0 0
    %1462 = vmatpush1.bf16.msra.mxu0 0
    %1463 = vmatprep.subr.bf16.mxu0 0
    %1464 = vmatpush1.bf16.msra.mxu0 0
    %1465 = vmatprep.subr.bf16.mxu0 0
    %1466 = vmatpush1.bf16.msra.mxu0 0
    %1467 = vmatprep.subr.bf16.mxu0 0
    %1468 = vmatpush1.bf16.msra.mxu0 0
    %1469 = vmatprep.subr.bf16.mxu0 0
    %1470 = vmatpush1.bf16.msra.mxu0 0
    %1471 = vmatprep.subr.bf16.mxu0 0
    %1472 = vmatpush1.bf16.msra.mxu0 0
    %1473 = vmatprep.mubr.bf16.mxu0 0
    %1474 = vmatmul.mubr.bf16.gmra.mrb[0].mxu0 %v1440
    %v1475 = vpop.f32.mrb[0].mxu0
    %v1476 = vadd.f32 %v1026, %v1475
    %v1477 = vpop.f32.mrb[0].mxu0
    %v1478 = vpop.f32.mrb[0].mxu0
    %v1479 = vpop.f32.mrb[0].mxu0
    %1480 = vdwg.mxu0
    %v1481 = vadd.f32 %v1017, %v1476
    %v1482 = vxor.u32 %v1481, 2147483648
    %v1483 = vmul.f32 %v1482, 1.442695
    %v1484 = vpow.pop %v1483
    %v1485 = vadd.f32 %v1484, 1.0
    %v1486 = vrcp.pop %v1485
    %v1487 = vmul.f32 1.0, %v1486
    %1488 = vrot.lane.b32.xlu0 %v1487, 64
    %v1489 = vpop.permute.xlu0 %1488
    %v1490 = vmul.f32 %v1489, %v1476
    %v1491 = vadd.f32 %v1017, %v1490
    %v1492 = vtanh.pop %v1491
    %1493 = vrot.lane.b32.xlu0 %v1492, 64
    %v1494 = vpop.permute.xlu0 %1493
    %1495 = vrot.lane.b32.xlu0 %v1487, 96
    %v1496 = vpop.permute.xlu0 %1495
    %v1497 = vsub.f32 1.0, %v1496
    %v1498 = vmul.f32 %v1497, %v1494
    %v1499 = vmul.f32 %v1496, %v1439
    %v1500 = vadd.f32 %v1498, %v1499
    %v1501 = vpack.c.bf16 %v1500, %v1500
    %1502 = vmatprep.subr.bf16.mxu0 0
    %1503 = vmatpush1.bf16.msra.mxu0 %v1059
    %1504 = vmatprep.subr.bf16.mxu0 0
    %1505 = vmatpush1.bf16.msra.mxu0 %v1060
    %1506 = vmatprep.subr.bf16.mxu0 0
    %1507 = vmatpush1.bf16.msra.mxu0 %v1061
    %1508 = vmatprep.subr.bf16.mxu0 0
    %1509 = vmatpush1.bf16.msra.mxu0 %v1062
    %1510 = vmatprep.subr.bf16.mxu0 0
    %1511 = vmatpush1.bf16.msra.mxu0 %v1063
    %1512 = vmatprep.subr.bf16.mxu0 0
    %1513 = vmatpush1.bf16.msra.mxu0 %v1064
    %1514 = vmatprep.subr.bf16.mxu0 0
    %1515 = vmatpush1.bf16.msra.mxu0 %v1065
    %1516 = vmatprep.subr.bf16.mxu0 0
    %1517 = vmatpush1.bf16.msra.mxu0 %v1066
    %1518 = vmatprep.subr.bf16.mxu0 0
    %1519 = vmatpush1.bf16.msra.mxu0 0
    %1520 = vmatprep.subr.bf16.mxu0 0
    %1521 = vmatpush1.bf16.msra.mxu0 0
    %1522 = vmatprep.subr.bf16.mxu0 0
    %1523 = vmatpush1.bf16.msra.mxu0 0
    %1524 = vmatprep.subr.bf16.mxu0 0
    %1525 = vmatpush1.bf16.msra.mxu0 0
    %1526 = vmatprep.subr.bf16.mxu0 0
    %1527 = vmatpush1.bf16.msra.mxu0 0
    %1528 = vmatprep.subr.bf16.mxu0 0
    %1529 = vmatpush1.bf16.msra.mxu0 0
    %1530 = vmatprep.subr.bf16.mxu0 0
    %1531 = vmatpush1.bf16.msra.mxu0 0
    %1532 = vmatprep.subr.bf16.mxu0 0
    %1533 = vmatpush1.bf16.msra.mxu0 0
    %1534 = vmatprep.mubr.bf16.mxu0 0
    %1535 = vmatmul.mubr.bf16.gmra.mrb[0].mxu0 %v1501
    %v1536 = vpop.f32.mrb[0].mxu0
    %v1537 = vadd.f32 %v1026, %v1536
    %v1538 = vpop.f32.mrb[0].mxu0
    %v1539 = vpop.f32.mrb[0].mxu0
    %v1540 = vpop.f32.mrb[0].mxu0
    %1541 = vdwg.mxu0
    %v1542 = vadd.f32 %v1020, %v1537
    %v1543 = vxor.u32 %v1542, 2147483648
    %v1544 = vmul.f32 %v1543, 1.442695
    %v1545 = vpow.pop %v1544
    %v1546 = vadd.f32 %v1545, 1.0
    %v1547 = vrcp.pop %v1546
    %v1548 = vmul.f32 1.0, %v1547
    %1549 = vrot.lane.b32.xlu0 %v1548, 64
    %v1550 = vpop.permute.xlu0 %1549
    %v1551 = vmul.f32 %v1550, %v1537
    %v1552 = vadd.f32 %v1020, %v1551
    %v1553 = vtanh.pop %v1552
    %1554 = vrot.lane.b32.xlu0 %v1553, 64
    %v1555 = vpop.permute.xlu0 %1554
    %1556 = vrot.lane.b32.xlu0 %v1548, 96
    %v1557 = vpop.permute.xlu0 %1556
    %v1558 = vsub.f32 1.0, %v1557
    %v1559 = vmul.f32 %v1558, %v1555
    %v1560 = vmul.f32 %v1557, %v1500
    %v1561 = vadd.f32 %v1559, %v1560
    %v1562 = vld [vmem:[#allocation2 + $0x100] sm:$0xf]
    %v1563 = vld [vmem:[#allocation2 + $0x104] sm:$0xf]
    %v1564 = vld [vmem:[#allocation2 + $0x108] sm:$0xf]
    %v1565 = vld [vmem:[#allocation2 + $0x10c] sm:$0xf]
    %v1566 = vld [vmem:[#allocation2 + $0x110] sm:$0xf]
    %v1567 = vld [vmem:[#allocation2 + $0x114] sm:$0xf]
    %v1568 = vld [vmem:[#allocation2 + $0x118] sm:$0xf]
    %v1569 = vld [vmem:[#allocation2 + $0x11c] sm:$0xf]
    %v1570 = vld [vmem:[#allocation2 + $0x120] sm:$0xf]
    %v1571 = vld [vmem:[#allocation2 + $0x124] sm:$0xf]
    %v1572 = vld [vmem:[#allocation2 + $0x128] sm:$0xf]
    %v1573 = vld [vmem:[#allocation2 + $0x12c] sm:$0xf]
    %v1574 = vld [vmem:[#allocation2 + $0x130] sm:$0xf]
    %v1575 = vld [vmem:[#allocation2 + $0x134] sm:$0xf]
    %v1576 = vld [vmem:[#allocation2 + $0x138] sm:$0xf]
    %v1577 = vld [vmem:[#allocation2 + $0x13c] sm:$0xf]
    %v1578 = vld [vmem:[#allocation2 + $0x140] sm:$0xf]
    %v1579 = vld [vmem:[#allocation2 + $0x144] sm:$0xf]
    %v1580 = vld [vmem:[#allocation2 + $0x148] sm:$0xf]
    %v1581 = vld [vmem:[#allocation2 + $0x14c] sm:$0xf]
    %v1582 = vld [vmem:[#allocation2 + $0x150] sm:$0xf]
    %v1583 = vld [vmem:[#allocation2 + $0x154] sm:$0xf]
    %v1584 = vld [vmem:[#allocation2 + $0x158] sm:$0xf]
    %v1585 = vld [vmem:[#allocation2 + $0x15c] sm:$0xf]
    %v1586 = vld [vmem:[#allocation2 + $0x160] sm:$0xf]
    %v1587 = vld [vmem:[#allocation2 + $0x164] sm:$0xf]
    %v1588 = vld [vmem:[#allocation2 + $0x168] sm:$0xf]
    %v1589 = vld [vmem:[#allocation2 + $0x16c] sm:$0xf]
    %v1590 = vld [vmem:[#allocation2 + $0x170] sm:$0xf]
    %v1591 = vld [vmem:[#allocation2 + $0x174] sm:$0xf]
    %v1592 = vld [vmem:[#allocation2 + $0x178] sm:$0xf]
    %v1593 = vld [vmem:[#allocation2 + $0x17c] sm:$0xf]
    %v1594 = vpack.c.bf16 %v1561, %v1561
    %v1595 = vlaneseq
    %v1596 = vshrl.u32 %v1595, 7
    %v1597 = vsub.s32 3, %v1596
    %v1598 = vrot.slane %v31, %v1597
    %v1615 = vunpack.c.l.b16 %v1562
    %v1616 = vunpack.c.l.b16 %v1563
    %v1617 = vunpack.c.l.b16 %v1564
    %v1618 = vunpack.c.l.b16 %v1565
    %v1619 = vunpack.c.l.b16 %v1566
    %v1620 = vunpack.c.l.b16 %v1567
    %v1621 = vunpack.c.l.b16 %v1568
    %v1622 = vunpack.c.l.b16 %v1569
    %v1623 = vunpack.c.l.b16 %v1570
    %v1624 = vunpack.c.l.b16 %v1571
    %v1625 = vunpack.c.l.b16 %v1572
    %v1626 = vunpack.c.l.b16 %v1573
    %v1627 = vunpack.c.l.b16 %v1574
    %v1628 = vunpack.c.l.b16 %v1575
    %v1629 = vunpack.c.l.b16 %v1576
    %v1630 = vunpack.c.l.b16 %v1577
    %v1631 = vpack.c.b16 %v1616, %v1615
    %v1632 = vpack.c.b16 %v1618, %v1617
    %v1633 = vpack.c.b16 %v1620, %v1619
    %v1634 = vpack.c.b16 %v1622, %v1621
    %v1635 = vpack.c.b16 %v1624, %v1623
    %v1636 = vpack.c.b16 %v1626, %v1625
    %v1637 = vpack.c.b16 %v1628, %v1627
    %v1638 = vpack.c.b16 %v1630, %v1629
    %1647 = vmatprep.subr.bf16.mxu0 0
    %1648 = vmatpush1.bf16.msra.mxu0 %v1631
    %1649 = vmatprep.subr.bf16.mxu0 0
    %1650 = vmatpush1.bf16.msra.mxu0 %v1632
    %1651 = vmatprep.subr.bf16.mxu0 0
    %1652 = vmatpush1.bf16.msra.mxu0 %v1633
    %1653 = vmatprep.subr.bf16.mxu0 0
    %1654 = vmatpush1.bf16.msra.mxu0 %v1634
    %1655 = vmatprep.subr.bf16.mxu0 0
    %1656 = vmatpush1.bf16.msra.mxu0 %v1635
    %1657 = vmatprep.subr.bf16.mxu0 0
    %1658 = vmatpush1.bf16.msra.mxu0 %v1636
    %1659 = vmatprep.subr.bf16.mxu0 0
    %1660 = vmatpush1.bf16.msra.mxu0 %v1637
    %1661 = vmatprep.subr.bf16.mxu0 0
    %1662 = vmatpush1.bf16.msra.mxu0 %v1638
    %1663 = vmatprep.subr.bf16.mxu0 0
    %1664 = vmatpush1.bf16.msra.mxu0 0
    %1665 = vmatprep.subr.bf16.mxu0 0
    %1666 = vmatpush1.bf16.msra.mxu0 0
    %1667 = vmatprep.subr.bf16.mxu0 0
    %1668 = vmatpush1.bf16.msra.mxu0 0
    %1669 = vmatprep.subr.bf16.mxu0 0
    %1670 = vmatpush1.bf16.msra.mxu0 0
    %1671 = vmatprep.subr.bf16.mxu0 0
    %1672 = vmatpush1.bf16.msra.mxu0 0
    %1673 = vmatprep.subr.bf16.mxu0 0
    %1674 = vmatpush1.bf16.msra.mxu0 0
    %1675 = vmatprep.subr.bf16.mxu0 0
    %1676 = vmatpush1.bf16.msra.mxu0 0
    %1677 = vmatprep.subr.bf16.mxu0 0
    %1678 = vmatpush1.bf16.msra.mxu0 0
    %1679 = vmatprep.mubr.bf16.mxu0 0
    %1680 = vmatmul.mubr.bf16.gmra.mrb[0].mxu0 %v1594
    %v1681 = vpop.f32.mrb[0].mxu0
    %v1682 = vadd.f32 %v1598, %v1681
    %v1683 = vpop.f32.mrb[0].mxu0
    %v1684 = vpop.f32.mrb[0].mxu0
    %v1685 = vpop.f32.mrb[0].mxu0
    %1686 = vdwg.mxu0
    %v1687 = vadd.f32 %v285, %v1682
    %v1688 = vadd.f32 %v288, %v1682
    %v1689 = vadd.f32 %v293, %v1682
    %v1690 = vadd.f32 %v296, %v1682
    %v1691 = vadd.f32 %v301, %v1682
    %v1692 = vadd.f32 %v304, %v1682
    %v1693 = vadd.f32 %v309, %v1682
    %v1694 = vadd.f32 %v312, %v1682
    %v1695 = vpack.c.bf16 %v869, %v869
    %v1696 = vlaneseq
    %v1697 = vshrl.u32 %v1696, 7
    %v1698 = vsub.s32 4, %v1697
    %v1699 = vrot.slane %v31, %v1698
    %v1716 = vunpack.c.l.b16 %v1578
    %v1717 = vunpack.c.l.b16 %v1579
    %v1718 = vunpack.c.l.b16 %v1580
    %v1719 = vunpack.c.l.b16 %v1581
    %v1720 = vunpack.c.l.b16 %v1582
    %v1721 = vunpack.c.l.b16 %v1583
    %v1722 = vunpack.c.l.b16 %v1584
    %v1723 = vunpack.c.l.b16 %v1585
    %v1724 = vunpack.c.l.b16 %v1586
    %v1725 = vunpack.c.l.b16 %v1587
    %v1726 = vunpack.c.l.b16 %v1588
    %v1727 = vunpack.c.l.b16 %v1589
    %v1728 = vunpack.c.l.b16 %v1590
    %v1729 = vunpack.c.l.b16 %v1591
    %v1730 = vunpack.c.l.b16 %v1592
    %v1731 = vunpack.c.l.b16 %v1593
    %v1732 = vpack.c.b16 %v1717, %v1716
    %v1733 = vpack.c.b16 %v1719, %v1718
    %v1734 = vpack.c.b16 %v1721, %v1720
    %v1735 = vpack.c.b16 %v1723, %v1722
    %v1736 = vpack.c.b16 %v1725, %v1724
    %v1737 = vpack.c.b16 %v1727, %v1726
    %v1738 = vpack.c.b16 %v1729, %v1728
    %v1739 = vpack.c.b16 %v1731, %v1730
    %1748 = vmatprep.subr.bf16.mxu0 0
    %1749 = vmatpush1.bf16.msra.mxu0 %v1732
    %1750 = vmatprep.subr.bf16.mxu0 0
    %1751 = vmatpush1.bf16.msra.mxu0 %v1733
    %1752 = vmatprep.subr.bf16.mxu0 0
    %1753 = vmatpush1.bf16.msra.mxu0 %v1734
    %1754 = vmatprep.subr.bf16.mxu0 0
    %1755 = vmatpush1.bf16.msra.mxu0 %v1735
    %1756 = vmatprep.subr.bf16.mxu0 0
    %1757 = vmatpush1.bf16.msra.mxu0 %v1736
    %1758 = vmatprep.subr.bf16.mxu0 0
    %1759 = vmatpush1.bf16.msra.mxu0 %v1737
    %1760 = vmatprep.subr.bf16.mxu0 0
    %1761 = vmatpush1.bf16.msra.mxu0 %v1738
    %1762 = vmatprep.subr.bf16.mxu0 0
    %1763 = vmatpush1.bf16.msra.mxu0 %v1739
    %1764 = vmatprep.subr.bf16.mxu0 0
    %1765 = vmatpush1.bf16.msra.mxu0 0
    %1766 = vmatprep.subr.bf16.mxu0 0
    %1767 = vmatpush1.bf16.msra.mxu0 0
    %1768 = vmatprep.subr.bf16.mxu0 0
    %1769 = vmatpush1.bf16.msra.mxu0 0
    %1770 = vmatprep.subr.bf16.mxu0 0
    %1771 = vmatpush1.bf16.msra.mxu0 0
    %1772 = vmatprep.subr.bf16.mxu0 0
    %1773 = vmatpush1.bf16.msra.mxu0 0
    %1774 = vmatprep.subr.bf16.mxu0 0
    %1775 = vmatpush1.bf16.msra.mxu0 0
    %1776 = vmatprep.subr.bf16.mxu0 0
    %1777 = vmatpush1.bf16.msra.mxu0 0
    %1778 = vmatprep.subr.bf16.mxu0 0
    %1779 = vmatpush1.bf16.msra.mxu0 0
    %1780 = vmatprep.mubr.bf16.mxu0 0
    %1781 = vmatmul.mubr.bf16.gmra.mrb[0].mxu0 %v1695
    %v1782 = vpop.f32.mrb[0].mxu0
    %v1783 = vadd.f32 %v1699, %v1782
    %v1784 = vpop.f32.mrb[0].mxu0
    %v1785 = vpop.f32.mrb[0].mxu0
    %v1786 = vpop.f32.mrb[0].mxu0
    %1787 = vdwg.mxu0
    %v1788 = vadd.f32 %v1687, %v1783
    %v1789 = vxor.u32 %v1788, 2147483648
    %v1790 = vmul.f32 %v1789, 1.442695
    %v1791 = vpow.pop %v1790
    %v1792 = vadd.f32 %v1791, 1.0
    %v1793 = vrcp.pop %v1792
    %v1794 = vmul.f32 1.0, %v1793
    %1795 = vrot.lane.b32.xlu0 %v1794, 64
    %v1796 = vpop.permute.xlu0 %1795
    %v1797 = vmul.f32 %v1796, %v1783
    %v1798 = vadd.f32 %v1687, %v1797
    %v1799 = vtanh.pop %v1798
    %1800 = vrot.lane.b32.xlu0 %v1799, 64
    %v1801 = vpop.permute.xlu0 %1800
    %1802 = vrot.lane.b32.xlu0 %v1794, 96
    %v1803 = vpop.permute.xlu0 %1802
    %v1804 = vsub.f32 1.0, %v1803
    %v1805 = vmul.f32 %v1804, %v1801
    %v1806 = vmul.f32 %v1803, %v869
    %v1807 = vadd.f32 %v1805, %v1806
    %v1808 = vpack.c.bf16 %v1807, %v1807
    %1809 = vmatprep.subr.bf16.mxu0 0
    %1810 = vmatpush1.bf16.msra.mxu0 %v1732
    %1811 = vmatprep.subr.bf16.mxu0 0
    %1812 = vmatpush1.bf16.msra.mxu0 %v1733
    %1813 = vmatprep.subr.bf16.mxu0 0
    %1814 = vmatpush1.bf16.msra.mxu0 %v1734
    %1815 = vmatprep.subr.bf16.mxu0 0
    %1816 = vmatpush1.bf16.msra.mxu0 %v1735
    %1817 = vmatprep.subr.bf16.mxu0 0
    %1818 = vmatpush1.bf16.msra.mxu0 %v1736
    %1819 = vmatprep.subr.bf16.mxu0 0
    %1820 = vmatpush1.bf16.msra.mxu0 %v1737
    %1821 = vmatprep.subr.bf16.mxu0 0
    %1822 = vmatpush1.bf16.msra.mxu0 %v1738
    %1823 = vmatprep.subr.bf16.mxu0 0
    %1824 = vmatpush1.bf16.msra.mxu0 %v1739
    %1825 = vmatprep.subr.bf16.mxu0 0
    %1826 = vmatpush1.bf16.msra.mxu0 0
    %1827 = vmatprep.subr.bf16.mxu0 0
    %1828 = vmatpush1.bf16.msra.mxu0 0
    %1829 = vmatprep.subr.bf16.mxu0 0
    %1830 = vmatpush1.bf16.msra.mxu0 0
    %1831 = vmatprep.subr.bf16.mxu0 0
    %1832 = vmatpush1.bf16.msra.mxu0 0
    %1833 = vmatprep.subr.bf16.mxu0 0
    %1834 = vmatpush1.bf16.msra.mxu0 0
    %1835 = vmatprep.subr.bf16.mxu0 0
    %1836 = vmatpush1.bf16.msra.mxu0 0
    %1837 = vmatprep.subr.bf16.mxu0 0
    %1838 = vmatpush1.bf16.msra.mxu0 0
    %1839 = vmatprep.subr.bf16.mxu0 0
    %1840 = vmatpush1.bf16.msra.mxu0 0
    %1841 = vmatprep.mubr.bf16.mxu0 0
    %1842 = vmatmul.mubr.bf16.gmra.mrb[0].mxu0 %v1808
    %v1843 = vpop.f32.mrb[0].mxu0
    %v1844 = vadd.f32 %v1699, %v1843
    %v1845 = vpop.f32.mrb[0].mxu0
    %v1846 = vpop.f32.mrb[0].mxu0
    %v1847 = vpop.f32.mrb[0].mxu0
    %1848 = vdwg.mxu0
    %v1849 = vadd.f32 %v1688, %v1844
    %v1850 = vxor.u32 %v1849, 2147483648
    %v1851 = vmul.f32 %v1850, 1.442695
    %v1852 = vpow.pop %v1851
    %v1853 = vadd.f32 %v1852, 1.0
    %v1854 = vrcp.pop %v1853
    %v1855 = vmul.f32 1.0, %v1854
    %1856 = vrot.lane.b32.xlu0 %v1855, 64
    %v1857 = vpop.permute.xlu0 %1856
    %v1858 = vmul.f32 %v1857, %v1844
    %v1859 = vadd.f32 %v1688, %v1858
    %v1860 = vtanh.pop %v1859
    %1861 = vrot.lane.b32.xlu0 %v1860, 64
    %v1862 = vpop.permute.xlu0 %1861
    %1863 = vrot.lane.b32.xlu0 %v1855, 96
    %v1864 = vpop.permute.xlu0 %1863
    %v1865 = vsub.f32 1.0, %v1864
    %v1866 = vmul.f32 %v1865, %v1862
    %v1867 = vmul.f32 %v1864, %v1807
    %v1868 = vadd.f32 %v1866, %v1867
    %v1869 = vpack.c.bf16 %v1868, %v1868
    %1870 = vmatprep.subr.bf16.mxu0 0
    %1871 = vmatpush1.bf16.msra.mxu0 %v1732
    %1872 = vmatprep.subr.bf16.mxu0 0
    %1873 = vmatpush1.bf16.msra.mxu0 %v1733
    %1874 = vmatprep.subr.bf16.mxu0 0
    %1875 = vmatpush1.bf16.msra.mxu0 %v1734
    %1876 = vmatprep.subr.bf16.mxu0 0
    %1877 = vmatpush1.bf16.msra.mxu0 %v1735
    %1878 = vmatprep.subr.bf16.mxu0 0
    %1879 = vmatpush1.bf16.msra.mxu0 %v1736
    %1880 = vmatprep.subr.bf16.mxu0 0
    %1881 = vmatpush1.bf16.msra.mxu0 %v1737
    %1882 = vmatprep.subr.bf16.mxu0 0
    %1883 = vmatpush1.bf16.msra.mxu0 %v1738
    %1884 = vmatprep.subr.bf16.mxu0 0
    %1885 = vmatpush1.bf16.msra.mxu0 %v1739
    %1886 = vmatprep.subr.bf16.mxu0 0
    %1887 = vmatpush1.bf16.msra.mxu0 0
    %1888 = vmatprep.subr.bf16.mxu0 0
    %1889 = vmatpush1.bf16.msra.mxu0 0
    %1890 = vmatprep.subr.bf16.mxu0 0
    %1891 = vmatpush1.bf16.msra.mxu0 0
    %1892 = vmatprep.subr.bf16.mxu0 0
    %1893 = vmatpush1.bf16.msra.mxu0 0
    %1894 = vmatprep.subr.bf16.mxu0 0
    %1895 = vmatpush1.bf16.msra.mxu0 0
    %1896 = vmatprep.subr.bf16.mxu0 0
    %1897 = vmatpush1.bf16.msra.mxu0 0
    %1898 = vmatprep.subr.bf16.mxu0 0
    %1899 = vmatpush1.bf16.msra.mxu0 0
    %1900 = vmatprep.subr.bf16.mxu0 0
    %1901 = vmatpush1.bf16.msra.mxu0 0
    %1902 = vmatprep.mubr.bf16.mxu0 0
    %1903 = vmatmul.mubr.bf16.gmra.mrb[0].mxu0 %v1869
    %v1904 = vpop.f32.mrb[0].mxu0
    %v1905 = vadd.f32 %v1699, %v1904
    %v1906 = vpop.f32.mrb[0].mxu0
    %v1907 = vpop.f32.mrb[0].mxu0
    %v1908 = vpop.f32.mrb[0].mxu0
    %1909 = vdwg.mxu0
    %v1910 = vadd.f32 %v1689, %v1905
    %v1911 = vxor.u32 %v1910, 2147483648
    %v1912 = vmul.f32 %v1911, 1.442695
    %v1913 = vpow.pop %v1912
    %v1914 = vadd.f32 %v1913, 1.0
    %v1915 = vrcp.pop %v1914
    %v1916 = vmul.f32 1.0, %v1915
    %1917 = vrot.lane.b32.xlu0 %v1916, 64
    %v1918 = vpop.permute.xlu0 %1917
    %v1919 = vmul.f32 %v1918, %v1905
    %v1920 = vadd.f32 %v1689, %v1919
    %v1921 = vtanh.pop %v1920
    %1922 = vrot.lane.b32.xlu0 %v1921, 64
    %v1923 = vpop.permute.xlu0 %1922
    %1924 = vrot.lane.b32.xlu0 %v1916, 96
    %v1925 = vpop.permute.xlu0 %1924
    %v1926 = vsub.f32 1.0, %v1925
    %v1927 = vmul.f32 %v1926, %v1923
    %v1928 = vmul.f32 %v1925, %v1868
    %v1929 = vadd.f32 %v1927, %v1928
    %v1930 = vpack.c.bf16 %v1929, %v1929
    %1931 = vmatprep.subr.bf16.mxu0 0
    %1932 = vmatpush1.bf16.msra.mxu0 %v1732
    %1933 = vmatprep.subr.bf16.mxu0 0
    %1934 = vmatpush1.bf16.msra.mxu0 %v1733
    %1935 = vmatprep.subr.bf16.mxu0 0
    %1936 = vmatpush1.bf16.msra.mxu0 %v1734
    %1937 = vmatprep.subr.bf16.mxu0 0
    %1938 = vmatpush1.bf16.msra.mxu0 %v1735
    %1939 = vmatprep.subr.bf16.mxu0 0
    %1940 = vmatpush1.bf16.msra.mxu0 %v1736
    %1941 = vmatprep.subr.bf16.mxu0 0
    %1942 = vmatpush1.bf16.msra.mxu0 %v1737
    %1943 = vmatprep.subr.bf16.mxu0 0
    %1944 = vmatpush1.bf16.msra.mxu0 %v1738
    %1945 = vmatprep.subr.bf16.mxu0 0
    %1946 = vmatpush1.bf16.msra.mxu0 %v1739
    %1947 = vmatprep.subr.bf16.mxu0 0
    %1948 = vmatpush1.bf16.msra.mxu0 0
    %1949 = vmatprep.subr.bf16.mxu0 0
    %1950 = vmatpush1.bf16.msra.mxu0 0
    %1951 = vmatprep.subr.bf16.mxu0 0
    %1952 = vmatpush1.bf16.msra.mxu0 0
    %1953 = vmatprep.subr.bf16.mxu0 0
    %1954 = vmatpush1.bf16.msra.mxu0 0
    %1955 = vmatprep.subr.bf16.mxu0 0
    %1956 = vmatpush1.bf16.msra.mxu0 0
    %1957 = vmatprep.subr.bf16.mxu0 0
    %1958 = vmatpush1.bf16.msra.mxu0 0
    %1959 = vmatprep.subr.bf16.mxu0 0
    %1960 = vmatpush1.bf16.msra.mxu0 0
    %1961 = vmatprep.subr.bf16.mxu0 0
    %1962 = vmatpush1.bf16.msra.mxu0 0
    %1963 = vmatprep.mubr.bf16.mxu0 0
    %1964 = vmatmul.mubr.bf16.gmra.mrb[0].mxu0 %v1930
    %v1965 = vpop.f32.mrb[0].mxu0
    %v1966 = vadd.f32 %v1699, %v1965
    %v1967 = vpop.f32.mrb[0].mxu0
    %v1968 = vpop.f32.mrb[0].mxu0
    %v1969 = vpop.f32.mrb[0].mxu0
    %1970 = vdwg.mxu0
    %v1971 = vadd.f32 %v1690, %v1966
    %v1972 = vxor.u32 %v1971, 2147483648
    %v1973 = vmul.f32 %v1972, 1.442695
    %v1974 = vpow.pop %v1973
    %v1975 = vadd.f32 %v1974, 1.0
    %v1976 = vrcp.pop %v1975
    %v1977 = vmul.f32 1.0, %v1976
    %1978 = vrot.lane.b32.xlu0 %v1977, 64
    %v1979 = vpop.permute.xlu0 %1978
    %v1980 = vmul.f32 %v1979, %v1966
    %v1981 = vadd.f32 %v1690, %v1980
    %v1982 = vtanh.pop %v1981
    %1983 = vrot.lane.b32.xlu0 %v1982, 64
    %v1984 = vpop.permute.xlu0 %1983
    %1985 = vrot.lane.b32.xlu0 %v1977, 96
    %v1986 = vpop.permute.xlu0 %1985
    %v1987 = vsub.f32 1.0, %v1986
    %v1988 = vmul.f32 %v1987, %v1984
    %v1989 = vmul.f32 %v1986, %v1929
    %v1990 = vadd.f32 %v1988, %v1989
    %v1991 = vpack.c.bf16 %v1990, %v1990
    %1992 = vmatprep.subr.bf16.mxu0 0
    %1993 = vmatpush1.bf16.msra.mxu0 %v1732
    %1994 = vmatprep.subr.bf16.mxu0 0
    %1995 = vmatpush1.bf16.msra.mxu0 %v1733
    %1996 = vmatprep.subr.bf16.mxu0 0
    %1997 = vmatpush1.bf16.msra.mxu0 %v1734
    %1998 = vmatprep.subr.bf16.mxu0 0
    %1999 = vmatpush1.bf16.msra.mxu0 %v1735
    %2000 = vmatprep.subr.bf16.mxu0 0
    %2001 = vmatpush1.bf16.msra.mxu0 %v1736
    %2002 = vmatprep.subr.bf16.mxu0 0
    %2003 = vmatpush1.bf16.msra.mxu0 %v1737
    %2004 = vmatprep.subr.bf16.mxu0 0
    %2005 = vmatpush1.bf16.msra.mxu0 %v1738
    %2006 = vmatprep.subr.bf16.mxu0 0
    %2007 = vmatpush1.bf16.msra.mxu0 %v1739
    %2008 = vmatprep.subr.bf16.mxu0 0
    %2009 = vmatpush1.bf16.msra.mxu0 0
    %2010 = vmatprep.subr.bf16.mxu0 0
    %2011 = vmatpush1.bf16.msra.mxu0 0
    %2012 = vmatprep.subr.bf16.mxu0 0
    %2013 = vmatpush1.bf16.msra.mxu0 0
    %2014 = vmatprep.subr.bf16.mxu0 0
    %2015 = vmatpush1.bf16.msra.mxu0 0
    %2016 = vmatprep.subr.bf16.mxu0 0
    %2017 = vmatpush1.bf16.msra.mxu0 0
    %2018 = vmatprep.subr.bf16.mxu0 0
    %2019 = vmatpush1.bf16.msra.mxu0 0
    %2020 = vmatprep.subr.bf16.mxu0 0
    %2021 = vmatpush1.bf16.msra.mxu0 0
    %2022 = vmatprep.subr.bf16.mxu0 0
    %2023 = vmatpush1.bf16.msra.mxu0 0
    %2024 = vmatprep.mubr.bf16.mxu0 0
    %2025 = vmatmul.mubr.bf16.gmra.mrb[0].mxu0 %v1991
    %v2026 = vpop.f32.mrb[0].mxu0
    %v2027 = vadd.f32 %v1699, %v2026
    %v2028 = vpop.f32.mrb[0].mxu0
    %v2029 = vpop.f32.mrb[0].mxu0
    %v2030 = vpop.f32.mrb[0].mxu0
    %2031 = vdwg.mxu0
    %v2032 = vadd.f32 %v1691, %v2027
    %v2033 = vxor.u32 %v2032, 2147483648
    %v2034 = vmul.f32 %v2033, 1.442695
    %v2035 = vpow.pop %v2034
    %v2036 = vadd.f32 %v2035, 1.0
    %v2037 = vrcp.pop %v2036
    %v2038 = vmul.f32 1.0, %v2037
    %2039 = vrot.lane.b32.xlu0 %v2038, 64
    %v2040 = vpop.permute.xlu0 %2039
    %v2041 = vmul.f32 %v2040, %v2027
    %v2042 = vadd.f32 %v1691, %v2041
    %v2043 = vtanh.pop %v2042
    %2044 = vrot.lane.b32.xlu0 %v2043, 64
    %v2045 = vpop.permute.xlu0 %2044
    %2046 = vrot.lane.b32.xlu0 %v2038, 96
    %v2047 = vpop.permute.xlu0 %2046
    %v2048 = vsub.f32 1.0, %v2047
    %v2049 = vmul.f32 %v2048, %v2045
    %v2050 = vmul.f32 %v2047, %v1990
    %v2051 = vadd.f32 %v2049, %v2050
    %v2052 = vpack.c.bf16 %v2051, %v2051
    %2053 = vmatprep.subr.bf16.mxu0 0
    %2054 = vmatpush1.bf16.msra.mxu0 %v1732
    %2055 = vmatprep.subr.bf16.mxu0 0
    %2056 = vmatpush1.bf16.msra.mxu0 %v1733
    %2057 = vmatprep.subr.bf16.mxu0 0
    %2058 = vmatpush1.bf16.msra.mxu0 %v1734
    %2059 = vmatprep.subr.bf16.mxu0 0
    %2060 = vmatpush1.bf16.msra.mxu0 %v1735
    %2061 = vmatprep.subr.bf16.mxu0 0
    %2062 = vmatpush1.bf16.msra.mxu0 %v1736
    %2063 = vmatprep.subr.bf16.mxu0 0
    %2064 = vmatpush1.bf16.msra.mxu0 %v1737
    %2065 = vmatprep.subr.bf16.mxu0 0
    %2066 = vmatpush1.bf16.msra.mxu0 %v1738
    %2067 = vmatprep.subr.bf16.mxu0 0
    %2068 = vmatpush1.bf16.msra.mxu0 %v1739
    %2069 = vmatprep.subr.bf16.mxu0 0
    %2070 = vmatpush1.bf16.msra.mxu0 0
    %2071 = vmatprep.subr.bf16.mxu0 0
    %2072 = vmatpush1.bf16.msra.mxu0 0
    %2073 = vmatprep.subr.bf16.mxu0 0
    %2074 = vmatpush1.bf16.msra.mxu0 0
    %2075 = vmatprep.subr.bf16.mxu0 0
    %2076 = vmatpush1.bf16.msra.mxu0 0
    %2077 = vmatprep.subr.bf16.mxu0 0
    %2078 = vmatpush1.bf16.msra.mxu0 0
    %2079 = vmatprep.subr.bf16.mxu0 0
    %2080 = vmatpush1.bf16.msra.mxu0 0
    %2081 = vmatprep.subr.bf16.mxu0 0
    %2082 = vmatpush1.bf16.msra.mxu0 0
    %2083 = vmatprep.subr.bf16.mxu0 0
    %2084 = vmatpush1.bf16.msra.mxu0 0
    %2085 = vmatprep.mubr.bf16.mxu0 0
    %2086 = vmatmul.mubr.bf16.gmra.mrb[0].mxu0 %v2052
    %v2087 = vpop.f32.mrb[0].mxu0
    %v2088 = vadd.f32 %v1699, %v2087
    %v2089 = vpop.f32.mrb[0].mxu0
    %v2090 = vpop.f32.mrb[0].mxu0
    %v2091 = vpop.f32.mrb[0].mxu0
    %2092 = vdwg.mxu0
    %v2093 = vadd.f32 %v1692, %v2088
    %v2094 = vxor.u32 %v2093, 2147483648
    %v2095 = vmul.f32 %v2094, 1.442695
    %v2096 = vpow.pop %v2095
    %v2097 = vadd.f32 %v2096, 1.0
    %v2098 = vrcp.pop %v2097
    %v2099 = vmul.f32 1.0, %v2098
    %2100 = vrot.lane.b32.xlu0 %v2099, 64
    %v2101 = vpop.permute.xlu0 %2100
    %v2102 = vmul.f32 %v2101, %v2088
    %v2103 = vadd.f32 %v1692, %v2102
    %v2104 = vtanh.pop %v2103
    %2105 = vrot.lane.b32.xlu0 %v2104, 64
    %v2106 = vpop.permute.xlu0 %2105
    %2107 = vrot.lane.b32.xlu0 %v2099, 96
    %v2108 = vpop.permute.xlu0 %2107
    %v2109 = vsub.f32 1.0, %v2108
    %v2110 = vmul.f32 %v2109, %v2106
    %v2111 = vmul.f32 %v2108, %v2051
    %v2112 = vadd.f32 %v2110, %v2111
    %v2113 = vpack.c.bf16 %v2112, %v2112
    %2114 = vmatprep.subr.bf16.mxu0 0
    %2115 = vmatpush1.bf16.msra.mxu0 %v1732
    %2116 = vmatprep.subr.bf16.mxu0 0
    %2117 = vmatpush1.bf16.msra.mxu0 %v1733
    %2118 = vmatprep.subr.bf16.mxu0 0
    %2119 = vmatpush1.bf16.msra.mxu0 %v1734
    %2120 = vmatprep.subr.bf16.mxu0 0
    %2121 = vmatpush1.bf16.msra.mxu0 %v1735
    %2122 = vmatprep.subr.bf16.mxu0 0
    %2123 = vmatpush1.bf16.msra.mxu0 %v1736
    %2124 = vmatprep.subr.bf16.mxu0 0
    %2125 = vmatpush1.bf16.msra.mxu0 %v1737
    %2126 = vmatprep.subr.bf16.mxu0 0
    %2127 = vmatpush1.bf16.msra.mxu0 %v1738
    %2128 = vmatprep.subr.bf16.mxu0 0
    %2129 = vmatpush1.bf16.msra.mxu0 %v1739
    %2130 = vmatprep.subr.bf16.mxu0 0
    %2131 = vmatpush1.bf16.msra.mxu0 0
    %2132 = vmatprep.subr.bf16.mxu0 0
    %2133 = vmatpush1.bf16.msra.mxu0 0
    %2134 = vmatprep.subr.bf16.mxu0 0
    %2135 = vmatpush1.bf16.msra.mxu0 0
    %2136 = vmatprep.subr.bf16.mxu0 0
    %2137 = vmatpush1.bf16.msra.mxu0 0
    %2138 = vmatprep.subr.bf16.mxu0 0
    %2139 = vmatpush1.bf16.msra.mxu0 0
    %2140 = vmatprep.subr.bf16.mxu0 0
    %2141 = vmatpush1.bf16.msra.mxu0 0
    %2142 = vmatprep.subr.bf16.mxu0 0
    %2143 = vmatpush1.bf16.msra.mxu0 0
    %2144 = vmatprep.subr.bf16.mxu0 0
    %2145 = vmatpush1.bf16.msra.mxu0 0
    %2146 = vmatprep.mubr.bf16.mxu0 0
    %2147 = vmatmul.mubr.bf16.gmra.mrb[0].mxu0 %v2113
    %v2148 = vpop.f32.mrb[0].mxu0
    %v2149 = vadd.f32 %v1699, %v2148
    %v2150 = vpop.f32.mrb[0].mxu0
    %v2151 = vpop.f32.mrb[0].mxu0
    %v2152 = vpop.f32.mrb[0].mxu0
    %2153 = vdwg.mxu0
    %v2154 = vadd.f32 %v1693, %v2149
    %v2155 = vxor.u32 %v2154, 2147483648
    %v2156 = vmul.f32 %v2155, 1.442695
    %v2157 = vpow.pop %v2156
    %v2158 = vadd.f32 %v2157, 1.0
    %v2159 = vrcp.pop %v2158
    %v2160 = vmul.f32 1.0, %v2159
    %2161 = vrot.lane.b32.xlu0 %v2160, 64
    %v2162 = vpop.permute.xlu0 %2161
    %v2163 = vmul.f32 %v2162, %v2149
    %v2164 = vadd.f32 %v1693, %v2163
    %v2165 = vtanh.pop %v2164
    %2166 = vrot.lane.b32.xlu0 %v2165, 64
    %v2167 = vpop.permute.xlu0 %2166
    %2168 = vrot.lane.b32.xlu0 %v2160, 96
    %v2169 = vpop.permute.xlu0 %2168
    %v2170 = vsub.f32 1.0, %v2169
    %v2171 = vmul.f32 %v2170, %v2167
    %v2172 = vmul.f32 %v2169, %v2112
    %v2173 = vadd.f32 %v2171, %v2172
    %v2174 = vpack.c.bf16 %v2173, %v2173
    %2175 = vmatprep.subr.bf16.mxu0 0
    %2176 = vmatpush1.bf16.msra.mxu0 %v1732
    %2177 = vmatprep.subr.bf16.mxu0 0
    %2178 = vmatpush1.bf16.msra.mxu0 %v1733
    %2179 = vmatprep.subr.bf16.mxu0 0
    %2180 = vmatpush1.bf16.msra.mxu0 %v1734
    %2181 = vmatprep.subr.bf16.mxu0 0
    %2182 = vmatpush1.bf16.msra.mxu0 %v1735
    %2183 = vmatprep.subr.bf16.mxu0 0
    %2184 = vmatpush1.bf16.msra.mxu0 %v1736
    %2185 = vmatprep.subr.bf16.mxu0 0
    %2186 = vmatpush1.bf16.msra.mxu0 %v1737
    %2187 = vmatprep.subr.bf16.mxu0 0
    %2188 = vmatpush1.bf16.msra.mxu0 %v1738
    %2189 = vmatprep.subr.bf16.mxu0 0
    %2190 = vmatpush1.bf16.msra.mxu0 %v1739
    %2191 = vmatprep.subr.bf16.mxu0 0
    %2192 = vmatpush1.bf16.msra.mxu0 0
    %2193 = vmatprep.subr.bf16.mxu0 0
    %2194 = vmatpush1.bf16.msra.mxu0 0
    %2195 = vmatprep.subr.bf16.mxu0 0
    %2196 = vmatpush1.bf16.msra.mxu0 0
    %2197 = vmatprep.subr.bf16.mxu0 0
    %2198 = vmatpush1.bf16.msra.mxu0 0
    %2199 = vmatprep.subr.bf16.mxu0 0
    %2200 = vmatpush1.bf16.msra.mxu0 0
    %2201 = vmatprep.subr.bf16.mxu0 0
    %2202 = vmatpush1.bf16.msra.mxu0 0
    %2203 = vmatprep.subr.bf16.mxu0 0
    %2204 = vmatpush1.bf16.msra.mxu0 0
    %2205 = vmatprep.subr.bf16.mxu0 0
    %2206 = vmatpush1.bf16.msra.mxu0 0
    %2207 = vmatprep.mubr.bf16.mxu0 0
    %2208 = vmatmul.mubr.bf16.gmra.mrb[0].mxu0 %v2174
    %v2209 = vpop.f32.mrb[0].mxu0
    %v2210 = vadd.f32 %v1699, %v2209
    %v2211 = vpop.f32.mrb[0].mxu0
    %v2212 = vpop.f32.mrb[0].mxu0
    %v2213 = vpop.f32.mrb[0].mxu0
    %2214 = vdwg.mxu0
    %v2215 = vadd.f32 %v1694, %v2210
    %v2216 = vxor.u32 %v2215, 2147483648
    %v2217 = vmul.f32 %v2216, 1.442695
    %v2218 = vpow.pop %v2217
    %v2219 = vadd.f32 %v2218, 1.0
    %v2220 = vrcp.pop %v2219
    %v2221 = vmul.f32 1.0, %v2220
    %2222 = vrot.lane.b32.xlu0 %v2221, 64
    %v2223 = vpop.permute.xlu0 %2222
    %v2224 = vmul.f32 %v2223, %v2210
    %v2225 = vadd.f32 %v1694, %v2224
    %v2226 = vtanh.pop %v2225
    %2227 = vrot.lane.b32.xlu0 %v2226, 64
    %v2228 = vpop.permute.xlu0 %2227
    %2229 = vrot.lane.b32.xlu0 %v2221, 96
    %v2230 = vpop.permute.xlu0 %2229
    %v2231 = vsub.f32 1.0, %v2230
    %v2232 = vmul.f32 %v2231, %v2228
    %v2233 = vmul.f32 %v2230, %v2173
    %v2234 = vadd.f32 %v2232, %v2233
    %2235 = vst [vmem:[%s4] sm:$0xff] %v2234
    %v2236 = vld [vmem:[#allocation2 + $0x180] sm:$0xf]
    %v2237 = vld [vmem:[#allocation2 + $0x184] sm:$0xf]
    %v2238 = vld [vmem:[#allocation2 + $0x188] sm:$0xf]
    %v2239 = vld [vmem:[#allocation2 + $0x18c] sm:$0xf]
    %v2240 = vld [vmem:[#allocation2 + $0x190] sm:$0xf]
    %v2241 = vld [vmem:[#allocation2 + $0x194] sm:$0xf]
    %v2242 = vld [vmem:[#allocation2 + $0x198] sm:$0xf]
    %v2243 = vld [vmem:[#allocation2 + $0x19c] sm:$0xf]
    %v2244 = vld [vmem:[#allocation2 + $0x1a0] sm:$0xf]
    %v2245 = vld [vmem:[#allocation2 + $0x1a4] sm:$0xf]
    %v2246 = vld [vmem:[#allocation2 + $0x1a8] sm:$0xf]
    %v2247 = vld [vmem:[#allocation2 + $0x1ac] sm:$0xf]
    %v2248 = vld [vmem:[#allocation2 + $0x1b0] sm:$0xf]
    %v2249 = vld [vmem:[#allocation2 + $0x1b4] sm:$0xf]
    %v2250 = vld [vmem:[#allocation2 + $0x1b8] sm:$0xf]
    %v2251 = vld [vmem:[#allocation2 + $0x1bc] sm:$0xf]
    %v2252 = vld [vmem:[#allocation2 + $0x1c0] sm:$0xf]
    %v2253 = vld [vmem:[#allocation2 + $0x1c4] sm:$0xf]
    %v2254 = vld [vmem:[#allocation2 + $0x1c8] sm:$0xf]
    %v2255 = vld [vmem:[#allocation2 + $0x1cc] sm:$0xf]
    %v2256 = vld [vmem:[#allocation2 + $0x1d0] sm:$0xf]
    %v2257 = vld [vmem:[#allocation2 + $0x1d4] sm:$0xf]
    %v2258 = vld [vmem:[#allocation2 + $0x1d8] sm:$0xf]
    %v2259 = vld [vmem:[#allocation2 + $0x1dc] sm:$0xf]
    %v2260 = vld [vmem:[#allocation2 + $0x1e0] sm:$0xf]
    %v2261 = vld [vmem:[#allocation2 + $0x1e4] sm:$0xf]
    %v2262 = vld [vmem:[#allocation2 + $0x1e8] sm:$0xf]
    %v2263 = vld [vmem:[#allocation2 + $0x1ec] sm:$0xf]
    %v2264 = vld [vmem:[#allocation2 + $0x1f0] sm:$0xf]
    %v2265 = vld [vmem:[#allocation2 + $0x1f4] sm:$0xf]
    %v2266 = vld [vmem:[#allocation2 + $0x1f8] sm:$0xf]
    %v2267 = vld [vmem:[#allocation2 + $0x1fc] sm:$0xf]
    %v2268 = vpack.c.bf16 %v1868, %v1807
    %v2269 = vpack.c.bf16 %v1990, %v1929
    %v2270 = vpack.c.bf16 %v2112, %v2051
    %v2271 = vpack.c.bf16 %v2234, %v2173
    %v2272 = vlaneseq
    %v2273 = vshrl.u32 %v2272, 7
    %v2274 = vsub.s32 5, %v2273
    %v2275 = vrot.slane %v31, %v2274
    %v2292 = vunpack.c.l.b16 %v2236
    %v2293 = vunpack.c.l.b16 %v2237
    %v2294 = vunpack.c.l.b16 %v2238
    %v2295 = vunpack.c.l.b16 %v2239
    %v2296 = vunpack.c.l.b16 %v2240
    %v2297 = vunpack.c.l.b16 %v2241
    %v2298 = vunpack.c.l.b16 %v2242
    %v2299 = vunpack.c.l.b16 %v2243
    %v2300 = vunpack.c.l.b16 %v2244
    %v2301 = vunpack.c.l.b16 %v2245
    %v2302 = vunpack.c.l.b16 %v2246
    %v2303 = vunpack.c.l.b16 %v2247
    %v2304 = vunpack.c.l.b16 %v2248
    %v2305 = vunpack.c.l.b16 %v2249
    %v2306 = vunpack.c.l.b16 %v2250
    %v2307 = vunpack.c.l.b16 %v2251
    %v2308 = vpack.c.b16 %v2293, %v2292
    %v2309 = vpack.c.b16 %v2295, %v2294
    %v2310 = vpack.c.b16 %v2297, %v2296
    %v2311 = vpack.c.b16 %v2299, %v2298
    %v2312 = vpack.c.b16 %v2301, %v2300
    %v2313 = vpack.c.b16 %v2303, %v2302
    %v2314 = vpack.c.b16 %v2305, %v2304
    %v2315 = vpack.c.b16 %v2307, %v2306
    %2324 = vmatprep.subr.bf16.mxu0 0
    %2325 = vmatpush1.bf16.msra.mxu0 %v2308
    %2326 = vmatprep.subr.bf16.mxu0 0
    %2327 = vmatpush1.bf16.msra.mxu0 %v2309
    %2328 = vmatprep.subr.bf16.mxu0 0
    %2329 = vmatpush1.bf16.msra.mxu0 %v2310
    %2330 = vmatprep.subr.bf16.mxu0 0
    %2331 = vmatpush1.bf16.msra.mxu0 %v2311
    %2332 = vmatprep.subr.bf16.mxu0 0
    %2333 = vmatpush1.bf16.msra.mxu0 %v2312
    %2334 = vmatprep.subr.bf16.mxu0 0
    %2335 = vmatpush1.bf16.msra.mxu0 %v2313
    %2336 = vmatprep.subr.bf16.mxu0 0
    %2337 = vmatpush1.bf16.msra.mxu0 %v2314
    %2338 = vmatprep.subr.bf16.mxu0 0
    %2339 = vmatpush1.bf16.msra.mxu0 %v2315
    %2340 = vmatprep.subr.bf16.mxu0 0
    %2341 = vmatpush1.bf16.msra.mxu0 0
    %2342 = vmatprep.subr.bf16.mxu0 0
    %2343 = vmatpush1.bf16.msra.mxu0 0
    %2344 = vmatprep.subr.bf16.mxu0 0
    %2345 = vmatpush1.bf16.msra.mxu0 0
    %2346 = vmatprep.subr.bf16.mxu0 0
    %2347 = vmatpush1.bf16.msra.mxu0 0
    %2348 = vmatprep.subr.bf16.mxu0 0
    %2349 = vmatpush1.bf16.msra.mxu0 0
    %2350 = vmatprep.subr.bf16.mxu0 0
    %2351 = vmatpush1.bf16.msra.mxu0 0
    %2352 = vmatprep.subr.bf16.mxu0 0
    %2353 = vmatpush1.bf16.msra.mxu0 0
    %2354 = vmatprep.subr.bf16.mxu0 0
    %2355 = vmatpush1.bf16.msra.mxu0 0
    %2356 = vmatprep.mubr.bf16.mxu0 0
    %2357 = vmatmul.mubr.bf16.gmra.mrb[0].mxu0 %v2268
    %v2358 = vpop.f32.mrb[0].mxu0
    %v2359 = vadd.f32 %v2275, %v2358
    %v2360 = vpop.f32.mrb[0].mxu0
    %v2361 = vpop.f32.mrb[0].mxu0
    %v2362 = vadd.f32 %v2275, %v2361
    %v2363 = vpop.f32.mrb[0].mxu0
    %2364 = vmatprep.mubr.bf16.mxu0 0
    %2365 = vmatmul.mubr.bf16.gmra.mrb[0].mxu0 %v2269
    %v2366 = vpop.f32.mrb[0].mxu0
    %v2367 = vadd.f32 %v2275, %v2366
    %v2368 = vpop.f32.mrb[0].mxu0
    %v2369 = vpop.f32.mrb[0].mxu0
    %v2370 = vadd.f32 %v2275, %v2369
    %v2371 = vpop.f32.mrb[0].mxu0
    %2372 = vmatprep.mubr.bf16.mxu0 0
    %2373 = vmatmul.mubr.bf16.gmra.mrb[0].mxu0 %v2270
    %v2374 = vpop.f32.mrb[0].mxu0
    %v2375 = vadd.f32 %v2275, %v2374
    %v2376 = vpop.f32.mrb[0].mxu0
    %v2377 = vpop.f32.mrb[0].mxu0
    %v2378 = vadd.f32 %v2275, %v2377
    %v2379 = vpop.f32.mrb[0].mxu0
    %2380 = vmatprep.mubr.bf16.mxu0 0
    %2381 = vmatmul.mubr.bf16.gmra.mrb[0].mxu0 %v2271
    %v2382 = vpop.f32.mrb[0].mxu0
    %v2383 = vadd.f32 %v2275, %v2382
    %v2384 = vpop.f32.mrb[0].mxu0
    %v2385 = vpop.f32.mrb[0].mxu0
    %v2386 = vadd.f32 %v2275, %v2385
    %v2387 = vpop.f32.mrb[0].mxu0
    %2388 = vdwg.mxu0
    %v2389 = vlaneseq
    %v2390 = vshrl.u32 %v2389, 7
    %v2391 = vsub.s32 6, %v2390
    %v2392 = vrot.slane %v31, %v2391
    %v2409 = vunpack.c.l.b16 %v2252
    %v2410 = vunpack.c.l.b16 %v2253
    %v2411 = vunpack.c.l.b16 %v2254
    %v2412 = vunpack.c.l.b16 %v2255
    %v2413 = vunpack.c.l.b16 %v2256
    %v2414 = vunpack.c.l.b16 %v2257
    %v2415 = vunpack.c.l.b16 %v2258
    %v2416 = vunpack.c.l.b16 %v2259
    %v2417 = vunpack.c.l.b16 %v2260
    %v2418 = vunpack.c.l.b16 %v2261
    %v2419 = vunpack.c.l.b16 %v2262
    %v2420 = vunpack.c.l.b16 %v2263
    %v2421 = vunpack.c.l.b16 %v2264
    %v2422 = vunpack.c.l.b16 %v2265
    %v2423 = vunpack.c.l.b16 %v2266
    %v2424 = vunpack.c.l.b16 %v2267
    %v2425 = vpack.c.b16 %v2410, %v2409
    %v2426 = vpack.c.b16 %v2412, %v2411
    %v2427 = vpack.c.b16 %v2414, %v2413
    %v2428 = vpack.c.b16 %v2416, %v2415
    %v2429 = vpack.c.b16 %v2418, %v2417
    %v2430 = vpack.c.b16 %v2420, %v2419
    %v2431 = vpack.c.b16 %v2422, %v2421
    %v2432 = vpack.c.b16 %v2424, %v2423
    %2441 = vmatprep.subr.bf16.mxu0 0
    %2442 = vmatpush1.bf16.msra.mxu0 %v2425
    %2443 = vmatprep.subr.bf16.mxu0 0
    %2444 = vmatpush1.bf16.msra.mxu0 %v2426
    %2445 = vmatprep.subr.bf16.mxu0 0
    %2446 = vmatpush1.bf16.msra.mxu0 %v2427
    %2447 = vmatprep.subr.bf16.mxu0 0
    %2448 = vmatpush1.bf16.msra.mxu0 %v2428
    %2449 = vmatprep.subr.bf16.mxu0 0
    %2450 = vmatpush1.bf16.msra.mxu0 %v2429
    %2451 = vmatprep.subr.bf16.mxu0 0
    %2452 = vmatpush1.bf16.msra.mxu0 %v2430
    %2453 = vmatprep.subr.bf16.mxu0 0
    %2454 = vmatpush1.bf16.msra.mxu0 %v2431
    %2455 = vmatprep.subr.bf16.mxu0 0
    %2456 = vmatpush1.bf16.msra.mxu0 %v2432
    %2457 = vmatprep.subr.bf16.mxu0 0
    %2458 = vmatpush1.bf16.msra.mxu0 0
    %2459 = vmatprep.subr.bf16.mxu0 0
    %2460 = vmatpush1.bf16.msra.mxu0 0
    %2461 = vmatprep.subr.bf16.mxu0 0
    %2462 = vmatpush1.bf16.msra.mxu0 0
    %2463 = vmatprep.subr.bf16.mxu0 0
    %2464 = vmatpush1.bf16.msra.mxu0 0
    %2465 = vmatprep.subr.bf16.mxu0 0
    %2466 = vmatpush1.bf16.msra.mxu0 0
    %2467 = vmatprep.subr.bf16.mxu0 0
    %2468 = vmatpush1.bf16.msra.mxu0 0
    %2469 = vmatprep.subr.bf16.mxu0 0
    %2470 = vmatpush1.bf16.msra.mxu0 0
    %2471 = vmatprep.subr.bf16.mxu0 0
    %2472 = vmatpush1.bf16.msra.mxu0 0
    %2473 = vmatprep.mubr.bf16.mxu0 0
    %2474 = vmatmul.mubr.bf16.gmra.mrb[0].mxu0 %v1594
    %v2475 = vpop.f32.mrb[0].mxu0
    %v2476 = vadd.f32 %v2392, %v2475
    %v2477 = vpop.f32.mrb[0].mxu0
    %v2478 = vpop.f32.mrb[0].mxu0
    %v2479 = vpop.f32.mrb[0].mxu0
    %2480 = vdwg.mxu0
    %v2481 = vadd.f32 %v2359, %v2476
    %v2482 = vxor.u32 %v2481, 2147483648
    %v2483 = vmul.f32 %v2482, 1.442695
    %v2484 = vpow.pop %v2483
    %v2485 = vadd.f32 %v2484, 1.0
    %v2486 = vrcp.pop %v2485
    %v2487 = vmul.f32 1.0, %v2486
    %2488 = vrot.lane.b32.xlu0 %v2487, 64
    %v2489 = vpop.permute.xlu0 %2488
    %v2490 = vmul.f32 %v2489, %v2476
    %v2491 = vadd.f32 %v2359, %v2490
    %v2492 = vtanh.pop %v2491
    %2493 = vrot.lane.b32.xlu0 %v2492, 64
    %v2494 = vpop.permute.xlu0 %2493
    %2495 = vrot.lane.b32.xlu0 %v2487, 96
    %v2496 = vpop.permute.xlu0 %2495
    %v2497 = vsub.f32 1.0, %v2496
    %v2498 = vmul.f32 %v2497, %v2494
    %v2499 = vmul.f32 %v2496, %v1561
    %v2500 = vadd.f32 %v2498, %v2499
    %v2501 = vpack.c.bf16 %v2500, %v2500
    %2502 = vmatprep.subr.bf16.mxu0 0
    %2503 = vmatpush1.bf16.msra.mxu0 %v2425
    %2504 = vmatprep.subr.bf16.mxu0 0
    %2505 = vmatpush1.bf16.msra.mxu0 %v2426
    %2506 = vmatprep.subr.bf16.mxu0 0
    %2507 = vmatpush1.bf16.msra.mxu0 %v2427
    %2508 = vmatprep.subr.bf16.mxu0 0
    %2509 = vmatpush1.bf16.msra.mxu0 %v2428
    %2510 = vmatprep.subr.bf16.mxu0 0
    %2511 = vmatpush1.bf16.msra.mxu0 %v2429
    %2512 = vmatprep.subr.bf16.mxu0 0
    %2513 = vmatpush1.bf16.msra.mxu0 %v2430
    %2514 = vmatprep.subr.bf16.mxu0 0
    %2515 = vmatpush1.bf16.msra.mxu0 %v2431
    %2516 = vmatprep.subr.bf16.mxu0 0
    %2517 = vmatpush1.bf16.msra.mxu0 %v2432
    %2518 = vmatprep.subr.bf16.mxu0 0
    %2519 = vmatpush1.bf16.msra.mxu0 0
    %2520 = vmatprep.subr.bf16.mxu0 0
    %2521 = vmatpush1.bf16.msra.mxu0 0
    %2522 = vmatprep.subr.bf16.mxu0 0
    %2523 = vmatpush1.bf16.msra.mxu0 0
    %2524 = vmatprep.subr.bf16.mxu0 0
    %2525 = vmatpush1.bf16.msra.mxu0 0
    %2526 = vmatprep.subr.bf16.mxu0 0
    %2527 = vmatpush1.bf16.msra.mxu0 0
    %2528 = vmatprep.subr.bf16.mxu0 0
    %2529 = vmatpush1.bf16.msra.mxu0 0
    %2530 = vmatprep.subr.bf16.mxu0 0
    %2531 = vmatpush1.bf16.msra.mxu0 0
    %2532 = vmatprep.subr.bf16.mxu0 0
    %2533 = vmatpush1.bf16.msra.mxu0 0
    %2534 = vmatprep.mubr.bf16.mxu0 0
    %2535 = vmatmul.mubr.bf16.gmra.mrb[0].mxu0 %v2501
    %v2536 = vpop.f32.mrb[0].mxu0
    %v2537 = vadd.f32 %v2392, %v2536
    %v2538 = vpop.f32.mrb[0].mxu0
    %v2539 = vpop.f32.mrb[0].mxu0
    %v2540 = vpop.f32.mrb[0].mxu0
    %2541 = vdwg.mxu0
    %v2542 = vadd.f32 %v2362, %v2537
    %v2543 = vxor.u32 %v2542, 2147483648
    %v2544 = vmul.f32 %v2543, 1.442695
    %v2545 = vpow.pop %v2544
    %v2546 = vadd.f32 %v2545, 1.0
    %v2547 = vrcp.pop %v2546
    %v2548 = vmul.f32 1.0, %v2547
    %2549 = vrot.lane.b32.xlu0 %v2548, 64
    %v2550 = vpop.permute.xlu0 %2549
    %v2551 = vmul.f32 %v2550, %v2537
    %v2552 = vadd.f32 %v2362, %v2551
    %v2553 = vtanh.pop %v2552
    %2554 = vrot.lane.b32.xlu0 %v2553, 64
    %v2555 = vpop.permute.xlu0 %2554
    %2556 = vrot.lane.b32.xlu0 %v2548, 96
    %v2557 = vpop.permute.xlu0 %2556
    %v2558 = vsub.f32 1.0, %v2557
    %v2559 = vmul.f32 %v2558, %v2555
    %v2560 = vmul.f32 %v2557, %v2500
    %v2561 = vadd.f32 %v2559, %v2560
    %v2562 = vpack.c.bf16 %v2561, %v2561
    %2563 = vmatprep.subr.bf16.mxu0 0
    %2564 = vmatpush1.bf16.msra.mxu0 %v2425
    %2565 = vmatprep.subr.bf16.mxu0 0
    %2566 = vmatpush1.bf16.msra.mxu0 %v2426
    %2567 = vmatprep.subr.bf16.mxu0 0
    %2568 = vmatpush1.bf16.msra.mxu0 %v2427
    %2569 = vmatprep.subr.bf16.mxu0 0
    %2570 = vmatpush1.bf16.msra.mxu0 %v2428
    %2571 = vmatprep.subr.bf16.mxu0 0
    %2572 = vmatpush1.bf16.msra.mxu0 %v2429
    %2573 = vmatprep.subr.bf16.mxu0 0
    %2574 = vmatpush1.bf16.msra.mxu0 %v2430
    %2575 = vmatprep.subr.bf16.mxu0 0
    %2576 = vmatpush1.bf16.msra.mxu0 %v2431
    %2577 = vmatprep.subr.bf16.mxu0 0
    %2578 = vmatpush1.bf16.msra.mxu0 %v2432
    %2579 = vmatprep.subr.bf16.mxu0 0
    %2580 = vmatpush1.bf16.msra.mxu0 0
    %2581 = vmatprep.subr.bf16.mxu0 0
    %2582 = vmatpush1.bf16.msra.mxu0 0
    %2583 = vmatprep.subr.bf16.mxu0 0
    %2584 = vmatpush1.bf16.msra.mxu0 0
    %2585 = vmatprep.subr.bf16.mxu0 0
    %2586 = vmatpush1.bf16.msra.mxu0 0
    %2587 = vmatprep.subr.bf16.mxu0 0
    %2588 = vmatpush1.bf16.msra.mxu0 0
    %2589 = vmatprep.subr.bf16.mxu0 0
    %2590 = vmatpush1.bf16.msra.mxu0 0
    %2591 = vmatprep.subr.bf16.mxu0 0
    %2592 = vmatpush1.bf16.msra.mxu0 0
    %2593 = vmatprep.subr.bf16.mxu0 0
    %2594 = vmatpush1.bf16.msra.mxu0 0
    %2595 = vmatprep.mubr.bf16.mxu0 0
    %2596 = vmatmul.mubr.bf16.gmra.mrb[0].mxu0 %v2562
    %v2597 = vpop.f32.mrb[0].mxu0
    %v2598 = vadd.f32 %v2392, %v2597
    %v2599 = vpop.f32.mrb[0].mxu0
    %v2600 = vpop.f32.mrb[0].mxu0
    %v2601 = vpop.f32.mrb[0].mxu0
    %2602 = vdwg.mxu0
    %v2603 = vadd.f32 %v2367, %v2598
    %v2604 = vxor.u32 %v2603, 2147483648
    %v2605 = vmul.f32 %v2604, 1.442695
    %v2606 = vpow.pop %v2605
    %v2607 = vadd.f32 %v2606, 1.0
    %v2608 = vrcp.pop %v2607
    %v2609 = vmul.f32 1.0, %v2608
    %2610 = vrot.lane.b32.xlu0 %v2609, 64
    %v2611 = vpop.permute.xlu0 %2610
    %v2612 = vmul.f32 %v2611, %v2598
    %v2613 = vadd.f32 %v2367, %v2612
    %v2614 = vtanh.pop %v2613
    %2615 = vrot.lane.b32.xlu0 %v2614, 64
    %v2616 = vpop.permute.xlu0 %2615
    %2617 = vrot.lane.b32.xlu0 %v2609, 96
    %v2618 = vpop.permute.xlu0 %2617
    %v2619 = vsub.f32 1.0, %v2618
    %v2620 = vmul.f32 %v2619, %v2616
    %v2621 = vmul.f32 %v2618, %v2561
    %v2622 = vadd.f32 %v2620, %v2621
    %v2623 = vpack.c.bf16 %v2622, %v2622
    %2624 = vmatprep.subr.bf16.mxu0 0
    %2625 = vmatpush1.bf16.msra.mxu0 %v2425
    %2626 = vmatprep.subr.bf16.mxu0 0
    %2627 = vmatpush1.bf16.msra.mxu0 %v2426
    %2628 = vmatprep.subr.bf16.mxu0 0
    %2629 = vmatpush1.bf16.msra.mxu0 %v2427
    %2630 = vmatprep.subr.bf16.mxu0 0
    %2631 = vmatpush1.bf16.msra.mxu0 %v2428
    %2632 = vmatprep.subr.bf16.mxu0 0
    %2633 = vmatpush1.bf16.msra.mxu0 %v2429
    %2634 = vmatprep.subr.bf16.mxu0 0
    %2635 = vmatpush1.bf16.msra.mxu0 %v2430
    %2636 = vmatprep.subr.bf16.mxu0 0
    %2637 = vmatpush1.bf16.msra.mxu0 %v2431
    %2638 = vmatprep.subr.bf16.mxu0 0
    %2639 = vmatpush1.bf16.msra.mxu0 %v2432
    %2640 = vmatprep.subr.bf16.mxu0 0
    %2641 = vmatpush1.bf16.msra.mxu0 0
    %2642 = vmatprep.subr.bf16.mxu0 0
    %2643 = vmatpush1.bf16.msra.mxu0 0
    %2644 = vmatprep.subr.bf16.mxu0 0
    %2645 = vmatpush1.bf16.msra.mxu0 0
    %2646 = vmatprep.subr.bf16.mxu0 0
    %2647 = vmatpush1.bf16.msra.mxu0 0
    %2648 = vmatprep.subr.bf16.mxu0 0
    %2649 = vmatpush1.bf16.msra.mxu0 0
    %2650 = vmatprep.subr.bf16.mxu0 0
    %2651 = vmatpush1.bf16.msra.mxu0 0
    %2652 = vmatprep.subr.bf16.mxu0 0
    %2653 = vmatpush1.bf16.msra.mxu0 0
    %2654 = vmatprep.subr.bf16.mxu0 0
    %2655 = vmatpush1.bf16.msra.mxu0 0
    %2656 = vmatprep.mubr.bf16.mxu0 0
    %2657 = vmatmul.mubr.bf16.gmra.mrb[0].mxu0 %v2623
    %v2658 = vpop.f32.mrb[0].mxu0
    %v2659 = vadd.f32 %v2392, %v2658
    %v2660 = vpop.f32.mrb[0].mxu0
    %v2661 = vpop.f32.mrb[0].mxu0
    %v2662 = vpop.f32.mrb[0].mxu0
    %2663 = vdwg.mxu0
    %v2664 = vadd.f32 %v2370, %v2659
    %v2665 = vxor.u32 %v2664, 2147483648
    %v2666 = vmul.f32 %v2665, 1.442695
    %v2667 = vpow.pop %v2666
    %v2668 = vadd.f32 %v2667, 1.0
    %v2669 = vrcp.pop %v2668
    %v2670 = vmul.f32 1.0, %v2669
    %2671 = vrot.lane.b32.xlu0 %v2670, 64
    %v2672 = vpop.permute.xlu0 %2671
    %v2673 = vmul.f32 %v2672, %v2659
    %v2674 = vadd.f32 %v2370, %v2673
    %v2675 = vtanh.pop %v2674
    %2676 = vrot.lane.b32.xlu0 %v2675, 64
    %v2677 = vpop.permute.xlu0 %2676
    %2678 = vrot.lane.b32.xlu0 %v2670, 96
    %v2679 = vpop.permute.xlu0 %2678
    %v2680 = vsub.f32 1.0, %v2679
    %v2681 = vmul.f32 %v2680, %v2677
    %v2682 = vmul.f32 %v2679, %v2622
    %v2683 = vadd.f32 %v2681, %v2682
    %v2684 = vpack.c.bf16 %v2683, %v2683
    %2685 = vmatprep.subr.bf16.mxu0 0
    %2686 = vmatpush1.bf16.msra.mxu0 %v2425
    %2687 = vmatprep.subr.bf16.mxu0 0
    %2688 = vmatpush1.bf16.msra.mxu0 %v2426
    %2689 = vmatprep.subr.bf16.mxu0 0
    %2690 = vmatpush1.bf16.msra.mxu0 %v2427
    %2691 = vmatprep.subr.bf16.mxu0 0
    %2692 = vmatpush1.bf16.msra.mxu0 %v2428
    %2693 = vmatprep.subr.bf16.mxu0 0
    %2694 = vmatpush1.bf16.msra.mxu0 %v2429
    %2695 = vmatprep.subr.bf16.mxu0 0
    %2696 = vmatpush1.bf16.msra.mxu0 %v2430
    %2697 = vmatprep.subr.bf16.mxu0 0
    %2698 = vmatpush1.bf16.msra.mxu0 %v2431
    %2699 = vmatprep.subr.bf16.mxu0 0
    %2700 = vmatpush1.bf16.msra.mxu0 %v2432
    %2701 = vmatprep.subr.bf16.mxu0 0
    %2702 = vmatpush1.bf16.msra.mxu0 0
    %2703 = vmatprep.subr.bf16.mxu0 0
    %2704 = vmatpush1.bf16.msra.mxu0 0
    %2705 = vmatprep.subr.bf16.mxu0 0
    %2706 = vmatpush1.bf16.msra.mxu0 0
    %2707 = vmatprep.subr.bf16.mxu0 0
    %2708 = vmatpush1.bf16.msra.mxu0 0
    %2709 = vmatprep.subr.bf16.mxu0 0
    %2710 = vmatpush1.bf16.msra.mxu0 0
    %2711 = vmatprep.subr.bf16.mxu0 0
    %2712 = vmatpush1.bf16.msra.mxu0 0
    %2713 = vmatprep.subr.bf16.mxu0 0
    %2714 = vmatpush1.bf16.msra.mxu0 0
    %2715 = vmatprep.subr.bf16.mxu0 0
    %2716 = vmatpush1.bf16.msra.mxu0 0
    %2717 = vmatprep.mubr.bf16.mxu0 0
    %2718 = vmatmul.mubr.bf16.gmra.mrb[0].mxu0 %v2684
    %v2719 = vpop.f32.mrb[0].mxu0
    %v2720 = vadd.f32 %v2392, %v2719
    %v2721 = vpop.f32.mrb[0].mxu0
    %v2722 = vpop.f32.mrb[0].mxu0
    %v2723 = vpop.f32.mrb[0].mxu0
    %2724 = vdwg.mxu0
    %v2725 = vadd.f32 %v2375, %v2720
    %v2726 = vxor.u32 %v2725, 2147483648
    %v2727 = vmul.f32 %v2726, 1.442695
    %v2728 = vpow.pop %v2727
    %v2729 = vadd.f32 %v2728, 1.0
    %v2730 = vrcp.pop %v2729
    %v2731 = vmul.f32 1.0, %v2730
    %2732 = vrot.lane.b32.xlu0 %v2731, 64
    %v2733 = vpop.permute.xlu0 %2732
    %v2734 = vmul.f32 %v2733, %v2720
    %v2735 = vadd.f32 %v2375, %v2734
    %v2736 = vtanh.pop %v2735
    %2737 = vrot.lane.b32.xlu0 %v2736, 64
    %v2738 = vpop.permute.xlu0 %2737
    %2739 = vrot.lane.b32.xlu0 %v2731, 96
    %v2740 = vpop.permute.xlu0 %2739
    %v2741 = vsub.f32 1.0, %v2740
    %v2742 = vmul.f32 %v2741, %v2738
    %v2743 = vmul.f32 %v2740, %v2683
    %v2744 = vadd.f32 %v2742, %v2743
    %v2745 = vpack.c.bf16 %v2744, %v2744
    %2746 = vmatprep.subr.bf16.mxu0 0
    %2747 = vmatpush1.bf16.msra.mxu0 %v2425
    %2748 = vmatprep.subr.bf16.mxu0 0
    %2749 = vmatpush1.bf16.msra.mxu0 %v2426
    %2750 = vmatprep.subr.bf16.mxu0 0
    %2751 = vmatpush1.bf16.msra.mxu0 %v2427
    %2752 = vmatprep.subr.bf16.mxu0 0
    %2753 = vmatpush1.bf16.msra.mxu0 %v2428
    %2754 = vmatprep.subr.bf16.mxu0 0
    %2755 = vmatpush1.bf16.msra.mxu0 %v2429
    %2756 = vmatprep.subr.bf16.mxu0 0
    %2757 = vmatpush1.bf16.msra.mxu0 %v2430
    %2758 = vmatprep.subr.bf16.mxu0 0
    %2759 = vmatpush1.bf16.msra.mxu0 %v2431
    %2760 = vmatprep.subr.bf16.mxu0 0
    %2761 = vmatpush1.bf16.msra.mxu0 %v2432
    %2762 = vmatprep.subr.bf16.mxu0 0
    %2763 = vmatpush1.bf16.msra.mxu0 0
    %2764 = vmatprep.subr.bf16.mxu0 0
    %2765 = vmatpush1.bf16.msra.mxu0 0
    %2766 = vmatprep.subr.bf16.mxu0 0
    %2767 = vmatpush1.bf16.msra.mxu0 0
    %2768 = vmatprep.subr.bf16.mxu0 0
    %2769 = vmatpush1.bf16.msra.mxu0 0
    %2770 = vmatprep.subr.bf16.mxu0 0
    %2771 = vmatpush1.bf16.msra.mxu0 0
    %2772 = vmatprep.subr.bf16.mxu0 0
    %2773 = vmatpush1.bf16.msra.mxu0 0
    %2774 = vmatprep.subr.bf16.mxu0 0
    %2775 = vmatpush1.bf16.msra.mxu0 0
    %2776 = vmatprep.subr.bf16.mxu0 0
    %2777 = vmatpush1.bf16.msra.mxu0 0
    %2778 = vmatprep.mubr.bf16.mxu0 0
    %2779 = vmatmul.mubr.bf16.gmra.mrb[0].mxu0 %v2745
    %v2780 = vpop.f32.mrb[0].mxu0
    %v2781 = vadd.f32 %v2392, %v2780
    %v2782 = vpop.f32.mrb[0].mxu0
    %v2783 = vpop.f32.mrb[0].mxu0
    %v2784 = vpop.f32.mrb[0].mxu0
    %2785 = vdwg.mxu0
    %v2786 = vadd.f32 %v2378, %v2781
    %v2787 = vxor.u32 %v2786, 2147483648
    %v2788 = vmul.f32 %v2787, 1.442695
    %v2789 = vpow.pop %v2788
    %v2790 = vadd.f32 %v2789, 1.0
    %v2791 = vrcp.pop %v2790
    %v2792 = vmul.f32 1.0, %v2791
    %2793 = vrot.lane.b32.xlu0 %v2792, 64
    %v2794 = vpop.permute.xlu0 %2793
    %v2795 = vmul.f32 %v2794, %v2781
    %v2796 = vadd.f32 %v2378, %v2795
    %v2797 = vtanh.pop %v2796
    %2798 = vrot.lane.b32.xlu0 %v2797, 64
    %v2799 = vpop.permute.xlu0 %2798
    %2800 = vrot.lane.b32.xlu0 %v2792, 96
    %v2801 = vpop.permute.xlu0 %2800
    %v2802 = vsub.f32 1.0, %v2801
    %v2803 = vmul.f32 %v2802, %v2799
    %v2804 = vmul.f32 %v2801, %v2744
    %v2805 = vadd.f32 %v2803, %v2804
    %v2806 = vpack.c.bf16 %v2805, %v2805
    %2807 = vmatprep.subr.bf16.mxu0 0
    %2808 = vmatpush1.bf16.msra.mxu0 %v2425
    %2809 = vmatprep.subr.bf16.mxu0 0
    %2810 = vmatpush1.bf16.msra.mxu0 %v2426
    %2811 = vmatprep.subr.bf16.mxu0 0
    %2812 = vmatpush1.bf16.msra.mxu0 %v2427
    %2813 = vmatprep.subr.bf16.mxu0 0
    %2814 = vmatpush1.bf16.msra.mxu0 %v2428
    %2815 = vmatprep.subr.bf16.mxu0 0
    %2816 = vmatpush1.bf16.msra.mxu0 %v2429
    %2817 = vmatprep.subr.bf16.mxu0 0
    %2818 = vmatpush1.bf16.msra.mxu0 %v2430
    %2819 = vmatprep.subr.bf16.mxu0 0
    %2820 = vmatpush1.bf16.msra.mxu0 %v2431
    %2821 = vmatprep.subr.bf16.mxu0 0
    %2822 = vmatpush1.bf16.msra.mxu0 %v2432
    %2823 = vmatprep.subr.bf16.mxu0 0
    %2824 = vmatpush1.bf16.msra.mxu0 0
    %2825 = vmatprep.subr.bf16.mxu0 0
    %2826 = vmatpush1.bf16.msra.mxu0 0
    %2827 = vmatprep.subr.bf16.mxu0 0
    %2828 = vmatpush1.bf16.msra.mxu0 0
    %2829 = vmatprep.subr.bf16.mxu0 0
    %2830 = vmatpush1.bf16.msra.mxu0 0
    %2831 = vmatprep.subr.bf16.mxu0 0
    %2832 = vmatpush1.bf16.msra.mxu0 0
    %2833 = vmatprep.subr.bf16.mxu0 0
    %2834 = vmatpush1.bf16.msra.mxu0 0
    %2835 = vmatprep.subr.bf16.mxu0 0
    %2836 = vmatpush1.bf16.msra.mxu0 0
    %2837 = vmatprep.subr.bf16.mxu0 0
    %2838 = vmatpush1.bf16.msra.mxu0 0
    %2839 = vmatprep.mubr.bf16.mxu0 0
    %2840 = vmatmul.mubr.bf16.gmra.mrb[0].mxu0 %v2806
    %v2841 = vpop.f32.mrb[0].mxu0
    %v2842 = vadd.f32 %v2392, %v2841
    %v2843 = vpop.f32.mrb[0].mxu0
    %v2844 = vpop.f32.mrb[0].mxu0
    %v2845 = vpop.f32.mrb[0].mxu0
    %2846 = vdwg.mxu0
    %v2847 = vadd.f32 %v2383, %v2842
    %v2848 = vxor.u32 %v2847, 2147483648
    %v2849 = vmul.f32 %v2848, 1.442695
    %v2850 = vpow.pop %v2849
    %v2851 = vadd.f32 %v2850, 1.0
    %v2852 = vrcp.pop %v2851
    %v2853 = vmul.f32 1.0, %v2852
    %2854 = vrot.lane.b32.xlu0 %v2853, 64
    %v2855 = vpop.permute.xlu0 %2854
    %v2856 = vmul.f32 %v2855, %v2842
    %v2857 = vadd.f32 %v2383, %v2856
    %v2858 = vtanh.pop %v2857
    %2859 = vrot.lane.b32.xlu0 %v2858, 64
    %v2860 = vpop.permute.xlu0 %2859
    %2861 = vrot.lane.b32.xlu0 %v2853, 96
    %v2862 = vpop.permute.xlu0 %2861
    %v2863 = vsub.f32 1.0, %v2862
    %v2864 = vmul.f32 %v2863, %v2860
    %v2865 = vmul.f32 %v2862, %v2805
    %v2866 = vadd.f32 %v2864, %v2865
    %v2867 = vpack.c.bf16 %v2866, %v2866
    %2868 = vmatprep.subr.bf16.mxu0 0
    %2869 = vmatpush1.bf16.msra.mxu0 %v2425
    %2870 = vmatprep.subr.bf16.mxu0 0
    %2871 = vmatpush1.bf16.msra.mxu0 %v2426
    %2872 = vmatprep.subr.bf16.mxu0 0
    %2873 = vmatpush1.bf16.msra.mxu0 %v2427
    %2874 = vmatprep.subr.bf16.mxu0 0
    %2875 = vmatpush1.bf16.msra.mxu0 %v2428
    %2876 = vmatprep.subr.bf16.mxu0 0
    %2877 = vmatpush1.bf16.msra.mxu0 %v2429
    %2878 = vmatprep.subr.bf16.mxu0 0
    %2879 = vmatpush1.bf16.msra.mxu0 %v2430
    %2880 = vmatprep.subr.bf16.mxu0 0
    %2881 = vmatpush1.bf16.msra.mxu0 %v2431
    %2882 = vmatprep.subr.bf16.mxu0 0
    %2883 = vmatpush1.bf16.msra.mxu0 %v2432
    %2884 = vmatprep.subr.bf16.mxu0 0
    %2885 = vmatpush1.bf16.msra.mxu0 0
    %2886 = vmatprep.subr.bf16.mxu0 0
    %2887 = vmatpush1.bf16.msra.mxu0 0
    %2888 = vmatprep.subr.bf16.mxu0 0
    %2889 = vmatpush1.bf16.msra.mxu0 0
    %2890 = vmatprep.subr.bf16.mxu0 0
    %2891 = vmatpush1.bf16.msra.mxu0 0
    %2892 = vmatprep.subr.bf16.mxu0 0
    %2893 = vmatpush1.bf16.msra.mxu0 0
    %2894 = vmatprep.subr.bf16.mxu0 0
    %2895 = vmatpush1.bf16.msra.mxu0 0
    %2896 = vmatprep.subr.bf16.mxu0 0
    %2897 = vmatpush1.bf16.msra.mxu0 0
    %2898 = vmatprep.subr.bf16.mxu0 0
    %2899 = vmatpush1.bf16.msra.mxu0 0
    %2900 = vmatprep.mubr.bf16.mxu0 0
    %2901 = vmatmul.mubr.bf16.gmra.mrb[0].mxu0 %v2867
    %v2902 = vpop.f32.mrb[0].mxu0
    %v2903 = vadd.f32 %v2392, %v2902
    %v2904 = vpop.f32.mrb[0].mxu0
    %v2905 = vpop.f32.mrb[0].mxu0
    %v2906 = vpop.f32.mrb[0].mxu0
    %2907 = vdwg.mxu0
    %v2908 = vadd.f32 %v2386, %v2903
    %v2909 = vxor.u32 %v2908, 2147483648
    %v2910 = vmul.f32 %v2909, 1.442695
    %v2911 = vpow.pop %v2910
    %v2912 = vadd.f32 %v2911, 1.0
    %v2913 = vrcp.pop %v2912
    %v2914 = vmul.f32 1.0, %v2913
    %2915 = vrot.lane.b32.xlu0 %v2914, 64
    %v2916 = vpop.permute.xlu0 %2915
    %v2917 = vmul.f32 %v2916, %v2903
    %v2918 = vadd.f32 %v2386, %v2917
    %v2919 = vtanh.pop %v2918
    %2920 = vrot.lane.b32.xlu0 %v2919, 64
    %v2921 = vpop.permute.xlu0 %2920
    %2922 = vrot.lane.b32.xlu0 %v2914, 96
    %v2923 = vpop.permute.xlu0 %2922
    %v2924 = vsub.f32 1.0, %v2923
    %v2925 = vmul.f32 %v2924, %v2921
    %v2926 = vmul.f32 %v2923, %v2866
    %v2927 = vadd.f32 %v2925, %v2926
    %s2928 = scalar_lea.vmem %s4, 8
    %2929 = vst [vmem:[%s2928] sm:$0xff] %v2927
    %v2930 = vpack.c.bf16 %v2561, %v2500
    %v2931 = vpack.c.bf16 %v2683, %v2622
    %v2932 = vpack.c.bf16 %v2805, %v2744
    %v2933 = vpack.c.bf16 %v2927, %v2866
    %v2934 = vld [vmem:[#allocation2 + $0x200] sm:$0xf]
    %v2935 = vld [vmem:[#allocation2 + $0x204] sm:$0xf]
    %v2936 = vld [vmem:[#allocation2 + $0x208] sm:$0xf]
    %v2937 = vld [vmem:[#allocation2 + $0x20c] sm:$0xf]
    %v2938 = vld [vmem:[#allocation2 + $0x210] sm:$0xf]
    %v2939 = vld [vmem:[#allocation2 + $0x214] sm:$0xf]
    %v2940 = vld [vmem:[#allocation2 + $0x218] sm:$0xf]
    %v2941 = vld [vmem:[#allocation2 + $0x21c] sm:$0xf]
    %v2942 = vld [vmem:[#allocation2 + $0x220] sm:$0xf]
    %v2943 = vld [vmem:[#allocation2 + $0x224] sm:$0xf]
    %v2944 = vld [vmem:[#allocation2 + $0x228] sm:$0xf]
    %v2945 = vld [vmem:[#allocation2 + $0x22c] sm:$0xf]
    %v2946 = vld [vmem:[#allocation2 + $0x230] sm:$0xf]
    %v2947 = vld [vmem:[#allocation2 + $0x234] sm:$0xf]
    %v2948 = vld [vmem:[#allocation2 + $0x238] sm:$0xf]
    %v2949 = vld [vmem:[#allocation2 + $0x23c] sm:$0xf]
    %v2950 = vlaneseq
    %v2951 = vshrl.u32 %v2950, 7
    %v2952 = vsub.s32 7, %v2951
    %v2953 = vrot.slane %v31, %v2952
    %v2970 = vunpack.c.l.b16 %v2934
    %v2971 = vunpack.c.l.b16 %v2935
    %v2972 = vunpack.c.l.b16 %v2936
    %v2973 = vunpack.c.l.b16 %v2937
    %v2974 = vunpack.c.l.b16 %v2938
    %v2975 = vunpack.c.l.b16 %v2939
    %v2976 = vunpack.c.l.b16 %v2940
    %v2977 = vunpack.c.l.b16 %v2941
    %v2978 = vunpack.c.l.b16 %v2942
    %v2979 = vunpack.c.l.b16 %v2943
    %v2980 = vunpack.c.l.b16 %v2944
    %v2981 = vunpack.c.l.b16 %v2945
    %v2982 = vunpack.c.l.b16 %v2946
    %v2983 = vunpack.c.l.b16 %v2947
    %v2984 = vunpack.c.l.b16 %v2948
    %v2985 = vunpack.c.l.b16 %v2949
    %v2986 = vpack.c.b16 %v2971, %v2970
    %v2987 = vpack.c.b16 %v2973, %v2972
    %v2988 = vpack.c.b16 %v2975, %v2974
    %v2989 = vpack.c.b16 %v2977, %v2976
    %v2990 = vpack.c.b16 %v2979, %v2978
    %v2991 = vpack.c.b16 %v2981, %v2980
    %v2992 = vpack.c.b16 %v2983, %v2982
    %v2993 = vpack.c.b16 %v2985, %v2984
    %3002 = vmatprep.subr.bf16.mxu0 0
    %3003 = vmatpush1.bf16.msra.mxu0 %v2986
    %3004 = vmatprep.subr.bf16.mxu0 0
    %3005 = vmatpush1.bf16.msra.mxu0 %v2987
    %3006 = vmatprep.subr.bf16.mxu0 0
    %3007 = vmatpush1.bf16.msra.mxu0 %v2988
    %3008 = vmatprep.subr.bf16.mxu0 0
    %3009 = vmatpush1.bf16.msra.mxu0 %v2989
    %3010 = vmatprep.subr.bf16.mxu0 0
    %3011 = vmatpush1.bf16.msra.mxu0 %v2990
    %3012 = vmatprep.subr.bf16.mxu0 0
    %3013 = vmatpush1.bf16.msra.mxu0 %v2991
    %3014 = vmatprep.subr.bf16.mxu0 0
    %3015 = vmatpush1.bf16.msra.mxu0 %v2992
    %3016 = vmatprep.subr.bf16.mxu0 0
    %3017 = vmatpush1.bf16.msra.mxu0 %v2993
    %3018 = vmatprep.subr.bf16.mxu0 0
    %3019 = vmatpush1.bf16.msra.mxu0 0
    %3020 = vmatprep.subr.bf16.mxu0 0
    %3021 = vmatpush1.bf16.msra.mxu0 0
    %3022 = vmatprep.subr.bf16.mxu0 0
    %3023 = vmatpush1.bf16.msra.mxu0 0
    %3024 = vmatprep.subr.bf16.mxu0 0
    %3025 = vmatpush1.bf16.msra.mxu0 0
    %3026 = vmatprep.subr.bf16.mxu0 0
    %3027 = vmatpush1.bf16.msra.mxu0 0
    %3028 = vmatprep.subr.bf16.mxu0 0
    %3029 = vmatpush1.bf16.msra.mxu0 0
    %3030 = vmatprep.subr.bf16.mxu0 0
    %3031 = vmatpush1.bf16.msra.mxu0 0
    %3032 = vmatprep.subr.bf16.mxu0 0
    %3033 = vmatpush1.bf16.msra.mxu0 0
    %3034 = vmatprep.mubr.bf16.mxu0 0
    %3035 = vmatmul.mubr.bf16.gmra.mrb[0].mxu0 %v2930
    %v3036 = vpop.f32.mrb[0].mxu0
    %v3037 = vadd.f32 %v2953, %v3036
    %v3038 = vpop.f32.mrb[0].mxu0
    %v3039 = vpop.f32.mrb[0].mxu0
    %v3040 = vadd.f32 %v2953, %v3039
    %v3041 = vpop.f32.mrb[0].mxu0
    %3042 = vmatprep.mubr.bf16.mxu0 0
    %3043 = vmatmul.mubr.bf16.gmra.mrb[0].mxu0 %v2931
    %v3044 = vpop.f32.mrb[0].mxu0
    %v3045 = vadd.f32 %v2953, %v3044
    %v3046 = vpop.f32.mrb[0].mxu0
    %v3047 = vpop.f32.mrb[0].mxu0
    %v3048 = vadd.f32 %v2953, %v3047
    %v3049 = vpop.f32.mrb[0].mxu0
    %3050 = vmatprep.mubr.bf16.mxu0 0
    %3051 = vmatmul.mubr.bf16.gmra.mrb[0].mxu0 %v2932
    %v3052 = vpop.f32.mrb[0].mxu0
    %v3053 = vadd.f32 %v2953, %v3052
    %v3054 = vpop.f32.mrb[0].mxu0
    %v3055 = vpop.f32.mrb[0].mxu0
    %v3056 = vadd.f32 %v2953, %v3055
    %v3057 = vpop.f32.mrb[0].mxu0
    %3058 = vmatprep.mubr.bf16.mxu0 0
    %3059 = vmatmul.mubr.bf16.gmra.mrb[0].mxu0 %v2933
    %v3060 = vpop.f32.mrb[0].mxu0
    %v3061 = vadd.f32 %v2953, %v3060
    %v3062 = vpop.f32.mrb[0].mxu0
    %v3063 = vpop.f32.mrb[0].mxu0
    %v3064 = vadd.f32 %v2953, %v3063
    %v3065 = vpop.f32.mrb[0].mxu0
    %3066 = vdwg.mxu0
    %3067 = vst [vmem:[%s3] sm:$0xff] %v3037
    %3068 = vst [vmem:[%s3 + $0x8] sm:$0xff] %v3040
    %3069 = vst [vmem:[%s3 + $0x10] sm:$0xff] %v3045
    %3070 = vst [vmem:[%s3 + $0x18] sm:$0xff] %v3048
    %3071 = vst [vmem:[%s3 + $0x20] sm:$0xff] %v3053
    %3072 = vst [vmem:[%s3 + $0x28] sm:$0xff] %v3056
    %3073 = vst [vmem:[%s3 + $0x30] sm:$0xff] %v3061
    %3074 = vst [vmem:[%s3 + $0x38] sm:$0xff] %v3064
    // Predicated region
    $region18: #{encoder_decoder_forward.1} parent=1 // pred_check
      _
    $region19: #{encoder_decoder_forward.1} parent=1 // pred_check_branch
      %3076 = sbr.rel (0) target = $region21
    $region20: #{encoder_decoder_forward.1} parent=1 // pred_region
      _
    $region21: #{encoder_decoder_forward.1} parent=1 // pred_fallthru
      _
    // Predicated region
    $region22: #{encoder_decoder_forward.1} parent=1 // pred_check
      _
    $region23: #{encoder_decoder_forward.1} parent=1 // pred_check_branch
      %3078 = sbr.rel (0) target = $region25
    $region24: #{encoder_decoder_forward.1} parent=1 // pred_region
      _
    $region25: #{encoder_decoder_forward.1} parent=1 // pred_fallthru
      _
    // Predicated region
    $region26: #{encoder_decoder_forward.1} parent=1 // pred_check
      _
    $region27: #{encoder_decoder_forward.1} parent=1 // pred_check_branch
      %3080 = sbr.rel (0) target = $region29
    $region28: #{encoder_decoder_forward.1} parent=1 // pred_region
      _
    $region29: #{encoder_decoder_forward.1} parent=1 // pred_fallthru
      _
    // Predicated region
    $region30: #{encoder_decoder_forward.1} parent=1 // pred_check
      _
    $region31: #{encoder_decoder_forward.1} parent=1 // pred_check_branch
      %3082 = sbr.rel (0) target = $region33
    $region32: #{encoder_decoder_forward.1} parent=1 // pred_region
      _
    $region33: #{encoder_decoder_forward.1} parent=1 // pred_fallthru
      _
    %3083 = vsyncpa [#allocation3], 1

</llo_original>
